<compile_context>
chip_gen: v5e
topology: v5e:2x2
jax: 0.10.0
libtpu: 0.0.40
codegen_flags: <defaults>
</compile_context>

<pallas_src>
import jax
import jax.numpy as jnp
from jax import lax
from jax.experimental import pallas as pl
from jax.experimental.pallas import tpu as pltpu


def _round_up(x, m):
    return (x + m - 1) // m * m


def _fold_bn(gamma, beta, rmean, rvar, eps=1e-5):
    scale = gamma / jnp.sqrt(rvar + eps)
    bias = beta - rmean * scale
    return scale, bias


# ----------------------------------------------------------------------------
# Kernel 1: fused 1x1 branch heads  --  (x @ W) + bias with per-channel
#           gated ReLU (branch1's slice skips bias+ReLU; they follow its pool)
# ----------------------------------------------------------------------------
def _pointwise_kernel(x_ref, w_ref, bias_ref, gate_ref, o_ref):
    # x_ref: (TM, C)  w_ref: (C, Ctot)  bias/gate: (1, Ctot)  o_ref: (TM, Ctot)
    acc = jnp.dot(x_ref[...], w_ref[...], preferred_element_type=jnp.float32)
    y = acc + bias_ref[...]
    o_ref[...] = jnp.where(gate_ref[...] > 0.0, jnp.maximum(y, 0.0), y)


def fused_pointwise(x_nhwc, w_cc, bias, gate, compute_dtype, tm=256):
    """All four branch-head 1x1 convs on x as a single lane-dense matmul."""
    N, H, W, C = x_nhwc.shape
    Ctot = w_cc.shape[1]
    M = N * H * W
    Mp = _round_up(M, tm)                     # no "tm = M" fallback anymore
    x2d = x_nhwc.reshape(M, C).astype(compute_dtype)
    if Mp != M:
        x2d = jnp.pad(x2d, ((0, Mp - M), (0, 0)))
    out = pl.pallas_call(
        _pointwise_kernel,
        out_shape=jax.ShapeDtypeStruct((Mp, Ctot), jnp.float32),
        grid=(Mp // tm,),
        in_specs=[
            pl.BlockSpec((tm, C), lambda i: (i, 0)),
            pl.BlockSpec((C, Ctot), lambda i: (0, 0)),
            pl.BlockSpec((1, Ctot), lambda i: (0, 0)),
            pl.BlockSpec((1, Ctot), lambda i: (0, 0)),
        ],
        out_specs=pl.BlockSpec((tm, Ctot), lambda i: (i, 0)),
        compiler_params=pltpu.CompilerParams(
            dimension_semantics=("parallel",)),
    )(x2d, w_cc.astype(compute_dtype),
      bias.reshape(1, Ctot).astype(jnp.float32),
      gate.reshape(1, Ctot).astype(jnp.float32))
    return out[:M].reshape(N, H, W, Ctot)


# ----------------------------------------------------------------------------
# Kernel 2: k x k "same" conv + folded-BN bias + ReLU, without k*k im2col.
#   Input arrives horizontally unfolded (k taps merged into the channel/lane
#   axis) and row-flattened; the k vertical taps are accumulated in-kernel
#   from W-aligned dynamic slices of the resident image buffer.
# ----------------------------------------------------------------------------
def _make_conv_kernel(k, th, width):
    def kernel(x_ref, w_ref, bias_ref, o_ref):
        # x_ref:   (Hp*W, k*Cin)  flattened padded rows of one image
        # w_ref:   (k, k*Cin, Cout) BN-scale-folded weights (one slab / v-tap)
        # bias_ref:(1, Cout)      folded BN bias
        # o_ref:   (th*W, Cout)   output rows of this row-block
        h0 = pl.program_id(1) * th
        cout = o_ref.shape[-1]
        acc = jnp.zeros((th * width, cout), jnp.float32)
        for ki in range(k):                           # vertical taps, unrolled
            start = pl.multiple_of((h0 + ki) * width, width)
            slab = x_ref[pl.ds(start, th * width), :]        # (th*W, k*Cin)
            acc = acc + jnp.dot(slab, w_ref[ki],
                                preferred_element_type=jnp.float32)
        y = jnp.maximum(acc + bias_ref[...], 0.0)
        o_ref[...] = y.astype(o_ref.dtype)
    return kernel


def conv_bn_relu(x_nhwc, w_oikk, bn, k, compute_dtype,
                 out_dtype=jnp.float32, rows_target=512):
    """Conv2d(k, stride=1, 'same', bias=False) + BatchNorm2d(eval) + ReLU."""
    N, H, W, C = x_nhwc.shape
    Cout = w_oikk.shape[0]
    p = (k - 1) // 2
    Hp = H + 2 * p

    scale, bias = _fold_bn(*bn)
    # (Cout, Cin, k, k) -> (k_vert, k_horiz*Cin, Cout), BN scale folded in.
    w = jnp.transpose(w_oikk, (2, 3, 1, 0)).reshape(k, k * C, Cout)
    w = (w * scale[None, None, :]).astype(compute_dtype)

    # Pad spatially, then unfold only the k horizontal taps onto the channel
    # (lane) axis: k x blow-up instead of the old k*k im2col (9x / 25x).
    xp = jnp.pad(x_nhwc.astype(compute_dtype),
                 ((0, 0), (p, p), (p, p), (0, 0)))
    xh = jnp.concatenate([xp[:, :, j:j + W, :] for j in range(k)], axis=-1)
    xh = xh.reshape(N, Hp * W, k * C)

    # Output row tile: largest divisor of H with th*W rows <= rows_target
    # (W = 16 keeps slice starts sublane-aligned for both f32 and bf16).
    th = 1
    for d in range(1, H + 1):
        if H % d == 0 and d * W <= rows_target:
            th = d
    grid = (N, H // th)

    out = pl.pallas_call(
        _make_conv_kernel(k, th, W),
        out_shape=jax.ShapeDtypeStruct((N, H * W, Cout), out_dtype),
        grid=grid,
        in_specs=[
            # Full flattened padded image per batch element; block index only
            # depends on n, so it is DMA'd once per image and reused across
            # the row-block axis.
            pl.BlockSpec((None, Hp * W, k * C), lambda n, hb: (n, 0, 0)),
            pl.BlockSpec((k, k * C, Cout), lambda n, hb: (0, 0, 0)),
            pl.BlockSpec((1, Cout), lambda n, hb: (0, 0)),
        ],
        out_specs=pl.BlockSpec((None, th * W, Cout), lambda n, hb: (n, hb, 0)),
        compiler_params=pltpu.CompilerParams(
            dimension_semantics=("parallel", "arbitrary")),
    )(xh, w, bias.reshape(1, Cout).astype(jnp.float32))
    return out.reshape(N, H, W, Cout)


# ----------------------------------------------------------------------------
# Parameter construction (deterministic, matches the module __init__ shapes)
# ----------------------------------------------------------------------------
def init_params(key, in_ch, out_ch):
    def bn(c):
        return (jnp.ones((c,), jnp.float32), jnp.zeros((c,), jnp.float32),
                jnp.zeros((c,), jnp.float32), jnp.ones((c,), jnp.float32))

    ks = jax.random.split(key, 7)
    conv = lambda kk, o, i, s: 0.1 * jax.random.normal(kk, (o, i, s, s),
                                                       jnp.float32)
    return {
        "b1_w": conv(ks[0], out_ch, in_ch, 1), "b1_bn": bn(out_ch),
        "b2_w": conv(ks[1], out_ch, in_ch, 1), "b2_bn": bn(out_ch),
        "b3a_w": conv(ks[2], in_ch, in_ch, 1), "b3a_bn": bn(in_ch),
        "b3b_w": conv(ks[3], out_ch, in_ch, 3), "b3b_bn": bn(out_ch),
        "b3c_w": conv(ks[4], out_ch, out_ch, 3), "b3c_bn": bn(out_ch),
        "b4a_w": conv(ks[5], in_ch, in_ch, 1), "b4a_bn": bn(in_ch),
        "b4b_w": conv(ks[6], out_ch, in_ch, 5), "b4b_bn": bn(out_ch),
    }


# ----------------------------------------------------------------------------
# Inception_A forward (NCHW in / NCHW out)
# ----------------------------------------------------------------------------
def inception_a_forward(x_nchw, params, compute_dtype=jnp.bfloat16):
    x = jnp.transpose(x_nchw, (0, 2, 3, 1))          # -> NHWC
    in_ch = x.shape[-1]
    out_ch = params["b1_w"].shape[0]

    def w1x1(w):                                      # (Co, Ci, 1, 1)->(Ci, Co)
        return jnp.transpose(w[:, :, 0, 0], (1, 0))

    s1, b1 = _fold_bn(*params["b1_bn"])
    s2, b2 = _fold_bn(*params["b2_bn"])
    s3, b3 = _fold_bn(*params["b3a_bn"])
    s4, b4 = _fold_bn(*params["b4a_bn"])

    # branch1 = ReLU(BN(conv1x1(avgpool(x)))).  The 3x3 average pool commutes
    # exactly with the bias-free 1x1 conv and the BN *scale*, so that conv
    # joins the fused head matmul; only its BN bias + ReLU must wait until
    # after the pool (bias=0 / relu-gate=0 for that channel slice in-kernel).
    w_heads = jnp.concatenate([
        w1x1(params["b1_w"]) * s1[None, :],
        w1x1(params["b2_w"]) * s2[None, :],
        w1x1(params["b3a_w"]) * s3[None, :],
        w1x1(params["b4a_w"]) * s4[None, :],
    ], axis=1)                                        # (Cin, 2*out + 2*in)
    bias_heads = jnp.concatenate([jnp.zeros_like(b1), b2, b3, b4])
    gate_heads = jnp.concatenate([jnp.zeros_like(s1), jnp.ones_like(s2),
                                  jnp.ones_like(s3), jnp.ones_like(s4)])

    heads = fused_pointwise(x, w_heads, bias_heads, gate_heads, compute_dtype)
    c0, c1, c2 = out_ch, 2 * out_ch, 2 * out_ch + in_ch
    y1_raw = heads[..., :c0]        # scaled conv1x1(x), pre-pool / pre-bias
    out2 = heads[..., c0:c1]        # branch2, done
    y3a = heads[..., c1:c2]         # branch3 stem
    y4a = heads[..., c2:]           # branch4 stem

    # branch1: AvgPool2d(3,1,1) (count_include_pad=True) + BN bias + ReLU.
    # TODO(synk): the 3x3 average pool stays in XLA (cheap VPU reduce_window);
    #             there is no matmul left to fuse it with.
    ap = lax.reduce_window(y1_raw, 0.0, lax.add, (1, 3, 3, 1), (1, 1, 1, 1),
                           [(0, 0), (1, 1), (1, 1), (0, 0)]) / 9.0
    out1 = jnp.maximum(ap + b1[None, None, None, :], 0.0)

    # branch3: 3x3 -> 3x3 (intermediate kept in the MXU compute dtype)
    y = conv_bn_relu(y3a, params["b3b_w"], params["b3b_bn"], 3,
                     compute_dtype, out_dtype=compute_dtype)
    out3 = conv_bn_relu(y, params["b3c_w"], params["b3c_bn"], 3,
                        compute_dtype, out_dtype=jnp.float32)

    # branch4: 5x5
    out4 = conv_bn_relu(y4a, params["b4b_w"], params["b4b_bn"], 5,
                        compute_dtype, out_dtype=jnp.float32)

    out = jnp.concatenate([out1, out2, out3, out4], axis=-1)
    return jnp.transpose(out, (0, 3, 1, 2))           # -> NCHW


# ----------------------------------------------------------------------------
# Pure-JAX reference (correctness check of the Pallas path)
# ----------------------------------------------------------------------------
def _ref_conv_bn_relu(x, w, bn, pad):
    y = lax.conv_general_dilated(
        x, jnp.transpose(w, (2, 3, 1, 0)), window_strides=(1, 1),
        padding=[(pad, pad), (pad, pad)],
        dimension_numbers=("NHWC", "HWIO", "NHWC"))
    scale, bias = _fold_bn(*bn)
    return jnp.maximum(y * scale + bias, 0.0)


def _ref_forward(x_nchw, p):
    x = jnp.transpose(x_nchw, (0, 2, 3, 1))
    ap = lax.reduce_window(x, 0.0, lax.add, (1, 3, 3, 1), (1, 1, 1, 1),
                           [(0, 0), (1, 1), (1, 1), (0, 0)]) / 9.0
    o1 = _ref_conv_bn_relu(ap, p["b1_w"], p["b1_bn"], 0)
    o2 = _ref_conv_bn_relu(x, p["b2_w"], p["b2_bn"], 0)
    y = _ref_conv_bn_relu(x, p["b3a_w"], p["b3a_bn"], 0)
    y = _ref_conv_bn_relu(y, p["b3b_w"], p["b3b_bn"], 1)
    o3 = _ref_conv_bn_relu(y, p["b3c_w"], p["b3c_bn"], 1)
    z = _ref_conv_bn_relu(x, p["b4a_w"], p["b4a_bn"], 0)
    o4 = _ref_conv_bn_relu(z, p["b4b_w"], p["b4b_bn"], 2)
    out = jnp.concatenate([o1, o2, o3, o4], axis=-1)
    return jnp.transpose(out, (0, 3, 1, 2))


if __name__ == "__main__":
    key = jax.random.PRNGKey(0)
    k_x, k_p = jax.random.split(key)

    N, C_in, C_out, H, W = 2, 4, 8, 16, 16
    x = jax.random.normal(k_x, (N, C_in, H, W), jnp.float32)
    params = init_params(k_p, C_in, C_out)

    fwd = jax.jit(inception_a_forward, static_argnames=("compute_dtype",))
    ref = jax.block_until_ready(_ref_forward(x, params))

    # f32 MXU operands: tight check against the XLA reference.
    out_f32 = jax.block_until_ready(fwd(x, params, compute_dtype=jnp.float32))
    assert out_f32.shape == (N, 4 * C_out, H, W), out_f32.shape
    err32 = float(jnp.max(jnp.abs(out_f32 - ref)))
    assert err32 < 1e-3, err32

    # bf16 MXU operands (f32 accumulation + f32 epilogue): production config
    # on v5e/v6e/v7x; looser tolerance for bf16 operand rounding.
    out_bf16 = jax.block_until_ready(fwd(x, params, compute_dtype=jnp.bfloat16))
    errbf = float(jnp.max(jnp.abs(out_bf16 - ref)))
    assert errbf < 5e-2, errbf

    print("KERNEL_OK")
</pallas_src>

<mosaic_0001>
module attributes {stable_mosaic.version = 11 : i64} {
  func.func @_pointwise_kernel(%arg0: i32, %arg1: memref<256x4xf32, #tpu.memory_space<vmem>>, %arg2: memref<4x24xf32, #tpu.memory_space<vmem>>, %arg3: memref<1x24xf32, #tpu.memory_space<vmem>>, %arg4: memref<1x24xf32, #tpu.memory_space<vmem>>, %arg5: memref<256x24xf32, #tpu.memory_space<vmem>>) attributes {dimension_semantics = [#tpu.dimension_semantics<parallel>], iteration_bounds = array<i64: 2>, scalar_prefetch = 0 : i64, scratch_operands = 0 : i64, tpu.core_type = #tpu.core_type<tc>, window_params = [{transform_indices = @transform_0, window_bounds = array<i64: 256, 4>}, {pipeline_mode = #tpu.pipeline_mode<synchronous>, transform_indices = @transform_1, window_bounds = array<i64: 4, 24>}, {pipeline_mode = #tpu.pipeline_mode<synchronous>, transform_indices = @transform_2, window_bounds = array<i64: 1, 24>}, {pipeline_mode = #tpu.pipeline_mode<synchronous>, transform_indices = @transform_3, window_bounds = array<i64: 1, 24>}, {transform_indices = @transform_4, window_bounds = array<i64: 256, 24>}]} {
    %c0 = arith.constant 0 : index
    %c0_0 = arith.constant 0 : index
    %0 = vector.load %arg1[%c0, %c0_0] : memref<256x4xf32, #tpu.memory_space<vmem>>, vector<256x4xf32>
    %c0_1 = arith.constant 0 : index
    %c0_2 = arith.constant 0 : index
    %1 = vector.load %arg2[%c0_1, %c0_2] : memref<4x24xf32, #tpu.memory_space<vmem>>, vector<4x24xf32>
    %cst = arith.constant dense<0.000000e+00> : vector<256x24xf32>
    %2 = tpu.matmul %0, %1, %cst {dimension_numbers = #tpu.dot_dimension_numbers<[1], [0], [0], [1], [0, 0, 1, 1], [], []>} : vector<256x4xf32>, vector<4x24xf32>, vector<256x24xf32> -> vector<256x24xf32>
    %c0_3 = arith.constant 0 : index
    %c0_4 = arith.constant 0 : index
    %3 = vector.load %arg3[%c0_3, %c0_4] : memref<1x24xf32, #tpu.memory_space<vmem>>, vector<1x24xf32>
    %4 = vector.broadcast %3 : vector<1x24xf32> to vector<256x24xf32>
    %5 = arith.addf %2, %4 : vector<256x24xf32>
    %c0_5 = arith.constant 0 : index
    %c0_6 = arith.constant 0 : index
    %6 = vector.load %arg4[%c0_5, %c0_6] : memref<1x24xf32, #tpu.memory_space<vmem>>, vector<1x24xf32>
    %cst_7 = arith.constant 0.000000e+00 : f32
    %7 = vector.broadcast %cst_7 : f32 to vector<1x24xf32>
    %8 = arith.cmpf ogt, %6, %7 : vector<1x24xf32>
    %cst_8 = arith.constant 0.000000e+00 : f32
    %9 = vector.broadcast %cst_8 : f32 to vector<256x24xf32>
    %10 = arith.maximumf %5, %9 : vector<256x24xf32>
    %11 = vector.shape_cast %8 : vector<1x24xi1> to vector<1x24xi1>
    %12 = vector.broadcast %11 : vector<1x24xi1> to vector<256x24xi1>
    %13 = arith.select %12, %10, %5 : vector<256x24xi1>, vector<256x24xf32>
    %c0_9 = arith.constant 0 : index
    %c0_10 = arith.constant 0 : index
    %14 = vector.load %arg5[%c0_9, %c0_10] : memref<256x24xf32, #tpu.memory_space<vmem>>, vector<256x24xf32>
    tpu.vector_store %arg5[%c0_9, %c0_10], %13 {strides = array<i32>} : memref<256x24xf32, #tpu.memory_space<vmem>>, vector<256x24xf32>,
    return
  }
  func.func @transform_0(%arg0: i32) -> (i32, i32) {
    %c0_i32 = arith.constant 0 : i32
    %c0_i32_0 = arith.constant 0 : i32
    return %arg0, %c0_i32 : i32, i32
  }
  func.func @transform_1(%arg0: i32) -> (i32, i32) {
    %c0_i32 = arith.constant 0 : i32
    %c0_i32_0 = arith.constant 0 : i32
    %c0_i32_1 = arith.constant 0 : i32
    return %c0_i32, %c0_i32_0 : i32, i32
  }
  func.func @transform_2(%arg0: i32) -> (i32, i32) {
    %c0_i32 = arith.constant 0 : i32
    %c0_i32_0 = arith.constant 0 : i32
    %c0_i32_1 = arith.constant 0 : i32
    return %c0_i32, %c0_i32_0 : i32, i32
  }
  func.func @transform_3(%arg0: i32) -> (i32, i32) {
    %c0_i32 = arith.constant 0 : i32
    %c0_i32_0 = arith.constant 0 : i32
    %c0_i32_1 = arith.constant 0 : i32
    return %c0_i32, %c0_i32_0 : i32, i32
  }
  func.func @transform_4(%arg0: i32) -> (i32, i32) {
    %c0_i32 = arith.constant 0 : i32
    %c0_i32_0 = arith.constant 0 : i32
    return %arg0, %c0_i32 : i32, i32
  }
}

module attributes {stable_mosaic.version = 11 : i64} {
  func.func @kernel(%arg0: i32, %arg1: i32, %arg2: memref<1x288x12xf32, #tpu.memory_space<vmem>>, %arg3: memref<3x12x8xf32, #tpu.memory_space<vmem>>, %arg4: memref<1x8xf32, #tpu.memory_space<vmem>>, %arg5: memref<1x256x8xf32, #tpu.memory_space<vmem>>) attributes {dimension_semantics = [#tpu.dimension_semantics<parallel>, #tpu.dimension_semantics<arbitrary>], iteration_bounds = array<i64: 2, 1>, scalar_prefetch = 0 : i64, scratch_operands = 0 : i64, tpu.core_type = #tpu.core_type<tc>, window_params = [{transform_indices = @transform_0, window_bounds = array<i64: 1, 288, 12>}, {pipeline_mode = #tpu.pipeline_mode<synchronous>, transform_indices = @transform_1, window_bounds = array<i64: 3, 12, 8>}, {pipeline_mode = #tpu.pipeline_mode<synchronous>, transform_indices = @transform_2, window_bounds = array<i64: 1, 8>}, {transform_indices = @transform_3, window_bounds = array<i64: 1, 256, 8>}]} {
    %c16_i32 = arith.constant 16 : i32
    %0 = arith.muli %arg1, %c16_i32 : i32
    %cst = arith.constant 0.000000e+00 : f32
    %1 = vector.broadcast %cst : f32 to vector<256x8xf32>
    %c0_i32 = arith.constant 0 : i32
    %2 = arith.addi %0, %c0_i32 : i32
    %c16_i32_0 = arith.constant 16 : i32
    %3 = arith.muli %2, %c16_i32_0 : i32
    %4 = tpu.assume_multiple %3, 16 : i32
    %c0 = arith.constant 0 : index
    %5 = arith.index_cast %4 : i32 to index
    %c0_1 = arith.constant 0 : index
    %6 = vector.load %arg2[%c0, %5, %c0_1] : memref<1x288x12xf32, #tpu.memory_space<vmem>>, vector<1x256x12xf32>
    %7 = vector.shape_cast %6 : vector<1x256x12xf32> to vector<256x12xf32>
    %c0_2 = arith.constant 0 : index
    %c0_3 = arith.constant 0 : index
    %c0_4 = arith.constant 0 : index
    %8 = vector.load %arg3[%c0_2, %c0_3, %c0_4] : memref<3x12x8xf32, #tpu.memory_space<vmem>>, vector<1x12x8xf32>
    %9 = vector.shape_cast %8 : vector<1x12x8xf32> to vector<12x8xf32>
    %cst_5 = arith.constant dense<0.000000e+00> : vector<256x8xf32>
    %10 = tpu.matmul %7, %9, %cst_5 {dimension_numbers = #tpu.dot_dimension_numbers<[1], [0], [0], [1], [0, 0, 1, 1], [], []>} : vector<256x12xf32>, vector<12x8xf32>, vector<256x8xf32> -> vector<256x8xf32>
    %11 = arith.addf %1, %10 : vector<256x8xf32>
    %c1_i32 = arith.constant 1 : i32
    %12 = arith.addi %0, %c1_i32 : i32
    %c16_i32_6 = arith.constant 16 : i32
    %13 = arith.muli %12, %c16_i32_6 : i32
    %14 = tpu.assume_multiple %13, 16 : i32
    %c0_7 = arith.constant 0 : index
    %15 = arith.index_cast %14 : i32 to index
    %c0_8 = arith.constant 0 : index
    %16 = vector.load %arg2[%c0_7, %15, %c0_8] : memref<1x288x12xf32, #tpu.memory_space<vmem>>, vector<1x256x12xf32>
    %17 = vector.shape_cast %16 : vector<1x256x12xf32> to vector<256x12xf32>
    %c1 = arith.constant 1 : index
    %c0_9 = arith.constant 0 : index
    %c0_10 = arith.constant 0 : index
    %18 = vector.load %arg3[%c1, %c0_9, %c0_10] : memref<3x12x8xf32, #tpu.memory_space<vmem>>, vector<1x12x8xf32>
    %19 = vector.shape_cast %18 : vector<1x12x8xf32> to vector<12x8xf32>
    %cst_11 = arith.constant dense<0.000000e+00> : vector<256x8xf32>
    %20 = tpu.matmul %17, %19, %cst_11 {dimension_numbers = #tpu.dot_dimension_numbers<[1], [0], [0], [1], [0, 0, 1, 1], [], []>} : vector<256x12xf32>, vector<12x8xf32>, vector<256x8xf32> -> vector<256x8xf32>
    %21 = arith.addf %11, %20 : vector<256x8xf32>
    %c2_i32 = arith.constant 2 : i32
    %22 = arith.addi %0, %c2_i32 : i32
    %c16_i32_12 = arith.constant 16 : i32
    %23 = arith.muli %22, %c16_i32_12 : i32
    %24 = tpu.assume_multiple %23, 16 : i32
    %c0_13 = arith.constant 0 : index
    %25 = arith.index_cast %24 : i32 to index
    %c0_14 = arith.constant 0 : index
    %26 = vector.load %arg2[%c0_13, %25, %c0_14] : memref<1x288x12xf32, #tpu.memory_space<vmem>>, vector<1x256x12xf32>
    %27 = vector.shape_cast %26 : vector<1x256x12xf32> to vector<256x12xf32>
    %c2 = arith.constant 2 : index
    %c0_15 = arith.constant 0 : index
    %c0_16 = arith.constant 0 : index
    %28 = vector.load %arg3[%c2, %c0_15, %c0_16] : memref<3x12x8xf32, #tpu.memory_space<vmem>>, vector<1x12x8xf32>
    %29 = vector.shape_cast %28 : vector<1x12x8xf32> to vector<12x8xf32>
    %cst_17 = arith.constant dense<0.000000e+00> : vector<256x8xf32>
    %30 = tpu.matmul %27, %29, %cst_17 {dimension_numbers = #tpu.dot_dimension_numbers<[1], [0], [0], [1], [0, 0, 1, 1], [], []>} : vector<256x12xf32>, vector<12x8xf32>, vector<256x8xf32> -> vector<256x8xf32>
    %31 = arith.addf %21, %30 : vector<256x8xf32>
    %c0_18 = arith.constant 0 : index
    %c0_19 = arith.constant 0 : index
    %32 = vector.load %arg4[%c0_18, %c0_19] : memref<1x8xf32, #tpu.memory_space<vmem>>, vector<1x8xf32>
    %33 = vector.broadcast %32 : vector<1x8xf32> to vector<256x8xf32>
    %34 = arith.addf %31, %33 : vector<256x8xf32>
    %cst_20 = arith.constant 0.000000e+00 : f32
    %35 = vector.broadcast %cst_20 : f32 to vector<256x8xf32>
    %36 = arith.maximumf %34, %35 : vector<256x8xf32>
    %c0_21 = arith.constant 0 : index
    %c0_22 = arith.constant 0 : index
    %c0_23 = arith.constant 0 : index
    %37 = vector.load %arg5[%c0_21, %c0_22, %c0_23] : memref<1x256x8xf32, #tpu.memory_space<vmem>>, vector<1x256x8xf32>
    %38 = vector.shape_cast %37 : vector<1x256x8xf32> to vector<256x8xf32>
    %39 = vector.shape_cast %36 : vector<256x8xf32> to vector<1x256x8xf32>
    tpu.vector_store %arg5[%c0_21, %c0_22, %c0_23], %39 {strides = array<i32>} : memref<1x256x8xf32, #tpu.memory_space<vmem>>, vector<1x256x8xf32>,
    return
  }
  func.func @transform_0(%arg0: i32, %arg1: i32) -> (i32, i32, i32) {
    %c0_i32 = arith.constant 0 : i32
    %c0_i32_0 = arith.constant 0 : i32
    %c0_i32_1 = arith.constant 0 : i32
    return %arg0, %c0_i32, %c0_i32_0 : i32, i32, i32
  }
  func.func @transform_1(%arg0: i32, %arg1: i32) -> (i32, i32, i32) {
    %c0_i32 = arith.constant 0 : i32
    %c0_i32_0 = arith.constant 0 : i32
    %c0_i32_1 = arith.constant 0 : i32
    %c0_i32_2 = arith.constant 0 : i32
    return %c0_i32, %c0_i32_0, %c0_i32_1 : i32, i32, i32
  }
  func.func @transform_2(%arg0: i32, %arg1: i32) -> (i32, i32) {
    %c0_i32 = arith.constant 0 : i32
    %c0_i32_0 = arith.constant 0 : i32
    %c0_i32_1 = arith.constant 0 : i32
    return %c0_i32, %c0_i32_0 : i32, i32
  }
  func.func @transform_3(%arg0: i32, %arg1: i32) -> (i32, i32, i32) {
    %c0_i32 = arith.constant 0 : i32
    %c0_i32_0 = arith.constant 0 : i32
    return %arg0, %arg1, %c0_i32 : i32, i32, i32
  }
}

module attributes {stable_mosaic.version = 11 : i64} {
  func.func @kernel(%arg0: i32, %arg1: i32, %arg2: memref<1x288x24xf32, #tpu.memory_space<vmem>>, %arg3: memref<3x24x8xf32, #tpu.memory_space<vmem>>, %arg4: memref<1x8xf32, #tpu.memory_space<vmem>>, %arg5: memref<1x256x8xf32, #tpu.memory_space<vmem>>) attributes {dimension_semantics = [#tpu.dimension_semantics<parallel>, #tpu.dimension_semantics<arbitrary>], iteration_bounds = array<i64: 2, 1>, scalar_prefetch = 0 : i64, scratch_operands = 0 : i64, tpu.core_type = #tpu.core_type<tc>, window_params = [{transform_indices = @transform_0, window_bounds = array<i64: 1, 288, 24>}, {pipeline_mode = #tpu.pipeline_mode<synchronous>, transform_indices = @transform_1, window_bounds = array<i64: 3, 24, 8>}, {pipeline_mode = #tpu.pipeline_mode<synchronous>, transform_indices = @transform_2, window_bounds = array<i64: 1, 8>}, {transform_indices = @transform_3, window_bounds = array<i64: 1, 256, 8>}]} {
    %c16_i32 = arith.constant 16 : i32
    %0 = arith.muli %arg1, %c16_i32 : i32
    %cst = arith.constant 0.000000e+00 : f32
    %1 = vector.broadcast %cst : f32 to vector<256x8xf32>
    %c0_i32 = arith.constant 0 : i32
    %2 = arith.addi %0, %c0_i32 : i32
    %c16_i32_0 = arith.constant 16 : i32
    %3 = arith.muli %2, %c16_i32_0 : i32
    %4 = tpu.assume_multiple %3, 16 : i32
    %c0 = arith.constant 0 : index
    %5 = arith.index_cast %4 : i32 to index
    %c0_1 = arith.constant 0 : index
    %6 = vector.load %arg2[%c0, %5, %c0_1] : memref<1x288x24xf32, #tpu.memory_space<vmem>>, vector<1x256x24xf32>
    %7 = vector.shape_cast %6 : vector<1x256x24xf32> to vector<256x24xf32>
    %c0_2 = arith.constant 0 : index
    %c0_3 = arith.constant 0 : index
    %c0_4 = arith.constant 0 : index
    %8 = vector.load %arg3[%c0_2, %c0_3, %c0_4] : memref<3x24x8xf32, #tpu.memory_space<vmem>>, vector<1x24x8xf32>
    %9 = vector.shape_cast %8 : vector<1x24x8xf32> to vector<24x8xf32>
    %cst_5 = arith.constant dense<0.000000e+00> : vector<256x8xf32>
    %10 = tpu.matmul %7, %9, %cst_5 {dimension_numbers = #tpu.dot_dimension_numbers<[1], [0], [0], [1], [0, 0, 1, 1], [], []>} : vector<256x24xf32>, vector<24x8xf32>, vector<256x8xf32> -> vector<256x8xf32>
    %11 = arith.addf %1, %10 : vector<256x8xf32>
    %c1_i32 = arith.constant 1 : i32
    %12 = arith.addi %0, %c1_i32 : i32
    %c16_i32_6 = arith.constant 16 : i32
    %13 = arith.muli %12, %c16_i32_6 : i32
    %14 = tpu.assume_multiple %13, 16 : i32
    %c0_7 = arith.constant 0 : index
    %15 = arith.index_cast %14 : i32 to index
    %c0_8 = arith.constant 0 : index
    %16 = vector.load %arg2[%c0_7, %15, %c0_8] : memref<1x288x24xf32, #tpu.memory_space<vmem>>, vector<1x256x24xf32>
    %17 = vector.shape_cast %16 : vector<1x256x24xf32> to vector<256x24xf32>
    %c1 = arith.constant 1 : index
    %c0_9 = arith.constant 0 : index
    %c0_10 = arith.constant 0 : index
    %18 = vector.load %arg3[%c1, %c0_9, %c0_10] : memref<3x24x8xf32, #tpu.memory_space<vmem>>, vector<1x24x8xf32>
    %19 = vector.shape_cast %18 : vector<1x24x8xf32> to vector<24x8xf32>
    %cst_11 = arith.constant dense<0.000000e+00> : vector<256x8xf32>
    %20 = tpu.matmul %17, %19, %cst_11 {dimension_numbers = #tpu.dot_dimension_numbers<[1], [0], [0], [1], [0, 0, 1, 1], [], []>} : vector<256x24xf32>, vector<24x8xf32>, vector<256x8xf32> -> vector<256x8xf32>
    %21 = arith.addf %11, %20 : vector<256x8xf32>
    %c2_i32 = arith.constant 2 : i32
    %22 = arith.addi %0, %c2_i32 : i32
    %c16_i32_12 = arith.constant 16 : i32
    %23 = arith.muli %22, %c16_i32_12 : i32
    %24 = tpu.assume_multiple %23, 16 : i32
    %c0_13 = arith.constant 0 : index
    %25 = arith.index_cast %24 : i32 to index
    %c0_14 = arith.constant 0 : index
    %26 = vector.load %arg2[%c0_13, %25, %c0_14] : memref<1x288x24xf32, #tpu.memory_space<vmem>>, vector<1x256x24xf32>
    %27 = vector.shape_cast %26 : vector<1x256x24xf32> to vector<256x24xf32>
    %c2 = arith.constant 2 : index
    %c0_15 = arith.constant 0 : index
    %c0_16 = arith.constant 0 : index
    %28 = vector.load %arg3[%c2, %c0_15, %c0_16] : memref<3x24x8xf32, #tpu.memory_space<vmem>>, vector<1x24x8xf32>
    %29 = vector.shape_cast %28 : vector<1x24x8xf32> to vector<24x8xf32>
    %cst_17 = arith.constant dense<0.000000e+00> : vector<256x8xf32>
    %30 = tpu.matmul %27, %29, %cst_17 {dimension_numbers = #tpu.dot_dimension_numbers<[1], [0], [0], [1], [0, 0, 1, 1], [], []>} : vector<256x24xf32>, vector<24x8xf32>, vector<256x8xf32> -> vector<256x8xf32>
    %31 = arith.addf %21, %30 : vector<256x8xf32>
    %c0_18 = arith.constant 0 : index
    %c0_19 = arith.constant 0 : index
    %32 = vector.load %arg4[%c0_18, %c0_19] : memref<1x8xf32, #tpu.memory_space<vmem>>, vector<1x8xf32>
    %33 = vector.broadcast %32 : vector<1x8xf32> to vector<256x8xf32>
    %34 = arith.addf %31, %33 : vector<256x8xf32>
    %cst_20 = arith.constant 0.000000e+00 : f32
    %35 = vector.broadcast %cst_20 : f32 to vector<256x8xf32>
    %36 = arith.maximumf %34, %35 : vector<256x8xf32>
    %c0_21 = arith.constant 0 : index
    %c0_22 = arith.constant 0 : index
    %c0_23 = arith.constant 0 : index
    %37 = vector.load %arg5[%c0_21, %c0_22, %c0_23] : memref<1x256x8xf32, #tpu.memory_space<vmem>>, vector<1x256x8xf32>
    %38 = vector.shape_cast %37 : vector<1x256x8xf32> to vector<256x8xf32>
    %39 = vector.shape_cast %36 : vector<256x8xf32> to vector<1x256x8xf32>
    tpu.vector_store %arg5[%c0_21, %c0_22, %c0_23], %39 {strides = array<i32>} : memref<1x256x8xf32, #tpu.memory_space<vmem>>, vector<1x256x8xf32>,
    return
  }
  func.func @transform_0(%arg0: i32, %arg1: i32) -> (i32, i32, i32) {
    %c0_i32 = arith.constant 0 : i32
    %c0_i32_0 = arith.constant 0 : i32
    %c0_i32_1 = arith.constant 0 : i32
    return %arg0, %c0_i32, %c0_i32_0 : i32, i32, i32
  }
  func.func @transform_1(%arg0: i32, %arg1: i32) -> (i32, i32, i32) {
    %c0_i32 = arith.constant 0 : i32
    %c0_i32_0 = arith.constant 0 : i32
    %c0_i32_1 = arith.constant 0 : i32
    %c0_i32_2 = arith.constant 0 : i32
    return %c0_i32, %c0_i32_0, %c0_i32_1 : i32, i32, i32
  }
  func.func @transform_2(%arg0: i32, %arg1: i32) -> (i32, i32) {
    %c0_i32 = arith.constant 0 : i32
    %c0_i32_0 = arith.constant 0 : i32
    %c0_i32_1 = arith.constant 0 : i32
    return %c0_i32, %c0_i32_0 : i32, i32
  }
  func.func @transform_3(%arg0: i32, %arg1: i32) -> (i32, i32, i32) {
    %c0_i32 = arith.constant 0 : i32
    %c0_i32_0 = arith.constant 0 : i32
    return %arg0, %arg1, %c0_i32 : i32, i32, i32
  }
}

module attributes {stable_mosaic.version = 11 : i64} {
  func.func @kernel(%arg0: i32, %arg1: i32, %arg2: memref<1x320x20xf32, #tpu.memory_space<vmem>>, %arg3: memref<5x20x8xf32, #tpu.memory_space<vmem>>, %arg4: memref<1x8xf32, #tpu.memory_space<vmem>>, %arg5: memref<1x256x8xf32, #tpu.memory_space<vmem>>) attributes {dimension_semantics = [#tpu.dimension_semantics<parallel>, #tpu.dimension_semantics<arbitrary>], iteration_bounds = array<i64: 2, 1>, scalar_prefetch = 0 : i64, scratch_operands = 0 : i64, tpu.core_type = #tpu.core_type<tc>, window_params = [{transform_indices = @transform_0, window_bounds = array<i64: 1, 320, 20>}, {pipeline_mode = #tpu.pipeline_mode<synchronous>, transform_indices = @transform_1, window_bounds = array<i64: 5, 20, 8>}, {pipeline_mode = #tpu.pipeline_mode<synchronous>, transform_indices = @transform_2, window_bounds = array<i64: 1, 8>}, {transform_indices = @transform_3, window_bounds = array<i64: 1, 256, 8>}]} {
    %c16_i32 = arith.constant 16 : i32
    %0 = arith.muli %arg1, %c16_i32 : i32
    %cst = arith.constant 0.000000e+00 : f32
    %1 = vector.broadcast %cst : f32 to vector<256x8xf32>
    %c0_i32 = arith.constant 0 : i32
    %2 = arith.addi %0, %c0_i32 : i32
    %c16_i32_0 = arith.constant 16 : i32
    %3 = arith.muli %2, %c16_i32_0 : i32
    %4 = tpu.assume_multiple %3, 16 : i32
    %c0 = arith.constant 0 : index
    %5 = arith.index_cast %4 : i32 to index
    %c0_1 = arith.constant 0 : index
    %6 = vector.load %arg2[%c0, %5, %c0_1] : memref<1x320x20xf32, #tpu.memory_space<vmem>>, vector<1x256x20xf32>
    %7 = vector.shape_cast %6 : vector<1x256x20xf32> to vector<256x20xf32>
    %c0_2 = arith.constant 0 : index
    %c0_3 = arith.constant 0 : index
    %c0_4 = arith.constant 0 : index
    %8 = vector.load %arg3[%c0_2, %c0_3, %c0_4] : memref<5x20x8xf32, #tpu.memory_space<vmem>>, vector<1x20x8xf32>
    %9 = vector.shape_cast %8 : vector<1x20x8xf32> to vector<20x8xf32>
    %cst_5 = arith.constant dense<0.000000e+00> : vector<256x8xf32>
    %10 = tpu.matmul %7, %9, %cst_5 {dimension_numbers = #tpu.dot_dimension_numbers<[1], [0], [0], [1], [0, 0, 1, 1], [], []>} : vector<256x20xf32>, vector<20x8xf32>, vector<256x8xf32> -> vector<256x8xf32>
    %11 = arith.addf %1, %10 : vector<256x8xf32>
    %c1_i32 = arith.constant 1 : i32
    %12 = arith.addi %0, %c1_i32 : i32
    %c16_i32_6 = arith.constant 16 : i32
    %13 = arith.muli %12, %c16_i32_6 : i32
    %14 = tpu.assume_multiple %13, 16 : i32
    %c0_7 = arith.constant 0 : index
    %15 = arith.index_cast %14 : i32 to index
    %c0_8 = arith.constant 0 : index
    %16 = vector.load %arg2[%c0_7, %15, %c0_8] : memref<1x320x20xf32, #tpu.memory_space<vmem>>, vector<1x256x20xf32>
    %17 = vector.shape_cast %16 : vector<1x256x20xf32> to vector<256x20xf32>
    %c1 = arith.constant 1 : index
    %c0_9 = arith.constant 0 : index
    %c0_10 = arith.constant 0 : index
    %18 = vector.load %arg3[%c1, %c0_9, %c0_10] : memref<5x20x8xf32, #tpu.memory_space<vmem>>, vector<1x20x8xf32>
    %19 = vector.shape_cast %18 : vector<1x20x8xf32> to vector<20x8xf32>
    %cst_11 = arith.constant dense<0.000000e+00> : vector<256x8xf32>
    %20 = tpu.matmul %17, %19, %cst_11 {dimension_numbers = #tpu.dot_dimension_numbers<[1], [0], [0], [1], [0, 0, 1, 1], [], []>} : vector<256x20xf32>, vector<20x8xf32>, vector<256x8xf32> -> vector<256x8xf32>
    %21 = arith.addf %11, %20 : vector<256x8xf32>
    %c2_i32 = arith.constant 2 : i32
    %22 = arith.addi %0, %c2_i32 : i32
    %c16_i32_12 = arith.constant 16 : i32
    %23 = arith.muli %22, %c16_i32_12 : i32
    %24 = tpu.assume_multiple %23, 16 : i32
    %c0_13 = arith.constant 0 : index
    %25 = arith.index_cast %24 : i32 to index
    %c0_14 = arith.constant 0 : index
    %26 = vector.load %arg2[%c0_13, %25, %c0_14] : memref<1x320x20xf32, #tpu.memory_space<vmem>>, vector<1x256x20xf32>
    %27 = vector.shape_cast %26 : vector<1x256x20xf32> to vector<256x20xf32>
    %c2 = arith.constant 2 : index
    %c0_15 = arith.constant 0 : index
    %c0_16 = arith.constant 0 : index
    %28 = vector.load %arg3[%c2, %c0_15, %c0_16] : memref<5x20x8xf32, #tpu.memory_space<vmem>>, vector<1x20x8xf32>
    %29 = vector.shape_cast %28 : vector<1x20x8xf32> to vector<20x8xf32>
    %cst_17 = arith.constant dense<0.000000e+00> : vector<256x8xf32>
    %30 = tpu.matmul %27, %29, %cst_17 {dimension_numbers = #tpu.dot_dimension_numbers<[1], [0], [0], [1], [0, 0, 1, 1], [], []>} : vector<256x20xf32>, vector<20x8xf32>, vector<256x8xf32> -> vector<256x8xf32>
    %31 = arith.addf %21, %30 : vector<256x8xf32>
    %c3_i32 = arith.constant 3 : i32
    %32 = arith.addi %0, %c3_i32 : i32
    %c16_i32_18 = arith.constant 16 : i32
    %33 = arith.muli %32, %c16_i32_18 : i32
    %34 = tpu.assume_multiple %33, 16 : i32
    %c0_19 = arith.constant 0 : index
    %35 = arith.index_cast %34 : i32 to index
    %c0_20 = arith.constant 0 : index
    %36 = vector.load %arg2[%c0_19, %35, %c0_20] : memref<1x320x20xf32, #tpu.memory_space<vmem>>, vector<1x256x20xf32>
    %37 = vector.shape_cast %36 : vector<1x256x20xf32> to vector<256x20xf32>
    %c3 = arith.constant 3 : index
    %c0_21 = arith.constant 0 : index
    %c0_22 = arith.constant 0 : index
    %38 = vector.load %arg3[%c3, %c0_21, %c0_22] : memref<5x20x8xf32, #tpu.memory_space<vmem>>, vector<1x20x8xf32>
    %39 = vector.shape_cast %38 : vector<1x20x8xf32> to vector<20x8xf32>
    %cst_23 = arith.constant dense<0.000000e+00> : vector<256x8xf32>
    %40 = tpu.matmul %37, %39, %cst_23 {dimension_numbers = #tpu.dot_dimension_numbers<[1], [0], [0], [1], [0, 0, 1, 1], [], []>} : vector<256x20xf32>, vector<20x8xf32>, vector<256x8xf32> -> vector<256x8xf32>
    %41 = arith.addf %31, %40 : vector<256x8xf32>
    %c4_i32 = arith.constant 4 : i32
    %42 = arith.addi %0, %c4_i32 : i32
    %c16_i32_24 = arith.constant 16 : i32
    %43 = arith.muli %42, %c16_i32_24 : i32
    %44 = tpu.assume_multiple %43, 16 : i32
    %c0_25 = arith.constant 0 : index
    %45 = arith.index_cast %44 : i32 to index
    %c0_26 = arith.constant 0 : index
    %46 = vector.load %arg2[%c0_25, %45, %c0_26] : memref<1x320x20xf32, #tpu.memory_space<vmem>>, vector<1x256x20xf32>
    %47 = vector.shape_cast %46 : vector<1x256x20xf32> to vector<256x20xf32>
    %c4 = arith.constant 4 : index
    %c0_27 = arith.constant 0 : index
    %c0_28 = arith.constant 0 : index
    %48 = vector.load %arg3[%c4, %c0_27, %c0_28] : memref<5x20x8xf32, #tpu.memory_space<vmem>>, vector<1x20x8xf32>
    %49 = vector.shape_cast %48 : vector<1x20x8xf32> to vector<20x8xf32>
    %cst_29 = arith.constant dense<0.000000e+00> : vector<256x8xf32>
    %50 = tpu.matmul %47, %49, %cst_29 {dimension_numbers = #tpu.dot_dimension_numbers<[1], [0], [0], [1], [0, 0, 1, 1], [], []>} : vector<256x20xf32>, vector<20x8xf32>, vector<256x8xf32> -> vector<256x8xf32>
    %51 = arith.addf %41, %50 : vector<256x8xf32>
    %c0_30 = arith.constant 0 : index
    %c0_31 = arith.constant 0 : index
    %52 = vector.load %arg4[%c0_30, %c0_31] : memref<1x8xf32, #tpu.memory_space<vmem>>, vector<1x8xf32>
    %53 = vector.broadcast %52 : vector<1x8xf32> to vector<256x8xf32>
    %54 = arith.addf %51, %53 : vector<256x8xf32>
    %cst_32 = arith.constant 0.000000e+00 : f32
    %55 = vector.broadcast %cst_32 : f32 to vector<256x8xf32>
    %56 = arith.maximumf %54, %55 : vector<256x8xf32>
    %c0_33 = arith.constant 0 : index
    %c0_34 = arith.constant 0 : index
    %c0_35 = arith.constant 0 : index
    %57 = vector.load %arg5[%c0_33, %c0_34, %c0_35] : memref<1x256x8xf32, #tpu.memory_space<vmem>>, vector<1x256x8xf32>
    %58 = vector.shape_cast %57 : vector<1x256x8xf32> to vector<256x8xf32>
    %59 = vector.shape_cast %56 : vector<256x8xf32> to vector<1x256x8xf32>
    tpu.vector_store %arg5[%c0_33, %c0_34, %c0_35], %59 {strides = array<i32>} : memref<1x256x8xf32, #tpu.memory_space<vmem>>, vector<1x256x8xf32>,
    return
  }
  func.func @transform_0(%arg0: i32, %arg1: i32) -> (i32, i32, i32) {
    %c0_i32 = arith.constant 0 : i32
    %c0_i32_0 = arith.constant 0 : i32
    %c0_i32_1 = arith.constant 0 : i32
    return %arg0, %c0_i32, %c0_i32_0 : i32, i32, i32
  }
  func.func @transform_1(%arg0: i32, %arg1: i32) -> (i32, i32, i32) {
    %c0_i32 = arith.constant 0 : i32
    %c0_i32_0 = arith.constant 0 : i32
    %c0_i32_1 = arith.constant 0 : i32
    %c0_i32_2 = arith.constant 0 : i32
    return %c0_i32, %c0_i32_0, %c0_i32_1 : i32, i32, i32
  }
  func.func @transform_2(%arg0: i32, %arg1: i32) -> (i32, i32) {
    %c0_i32 = arith.constant 0 : i32
    %c0_i32_0 = arith.constant 0 : i32
    %c0_i32_1 = arith.constant 0 : i32
    return %c0_i32, %c0_i32_0 : i32, i32
  }
  func.func @transform_3(%arg0: i32, %arg1: i32) -> (i32, i32, i32) {
    %c0_i32 = arith.constant 0 : i32
    %c0_i32_0 = arith.constant 0 : i32
    return %arg0, %arg1, %c0_i32 : i32, i32, i32
  }
}

</mosaic_0001>

<llo_original>
// kernel: inception_a_forward.4
$region0: #{inception_a_forward.4}
  #allocation0 [shape = 'u32[]', space=smem, size = 0x4, offset = 0x4, fixed_abs, tag = 'smem constant byte address 0x4 - core index']
  #allocation1 [shape = 'u32[72,128]{1,0:T(1,128)}', space=vmem, size = 0x9000, scoped, tag = 'internal scratch']
  %s0 = inlined_call_operand.vmem [shape: f32[512,4], index: 0, kind: input, shape index: {}]
  %s1 = inlined_call_operand.vmem [shape: f32[4,24], index: 1, kind: input, shape index: {}]
  %s2 = inlined_call_operand.vmem [shape: f32[1,24], index: 2, kind: input, shape index: {}]
  %s3 = inlined_call_operand.vmem [shape: f32[1,24], index: 3, kind: input, shape index: {}]
  %s4 = inlined_call_operand.vmem [shape: f32[512,24], index: 4, kind: output, shape index: {}]
  %s5 = sld [smem:[#allocation0]]
  $region49: #{inception_a_forward.4} parent=0
    _
  %s7 = ssub.s32 1, %s5
  %s8 = scalar_select 0, %s7, %s5
  loop: start=0, step=1, limit=4
  $region2: #{inception_a_forward.4} parent=0 // loop_pre_header
    _
  $region3: #{inception_a_forward.4} parent=0 // loop_header
    %s10 = sphi 0, %s14
    %p11 = scmp.ge.s32.totalorder %s10, 4
    %s20 = sphi 0, %s22
    %s23 = sphi 0, %s20
    %s24 = sphi 0, %s23
    %s40 = sphi 0, %s24
    %s44 = sphi 0, %s44
    %s46 = sphi 0, %s44
    %s47 = sphi 0, %s46
    %s61 = sphi 0, %s47
    %s65 = sphi 0, %s65
    %s67 = sphi 0, %s65
    %s68 = sphi 0, %s67
    %s82 = sphi 0, %s68
    %s86 = sphi 0, %s86
    %s88 = sphi 0, %s86
    %s89 = sphi 0, %s88
    %s103 = sphi 0, %s89
    %s109 = sphi 0, %s111
    %s112 = sphi 0, %s109
    %s113 = sphi 0, %s112
    %s129 = sphi 0, %s113
  $region4: #{inception_a_forward.4} parent=0 // loop_header_branch
    %13 = sbr.rel (%p11) target = $region8
  $region5: #{inception_a_forward.4} parent=0 // loop_body
    %s15 = ssub.s32 %s10, 1
    %s16 = ssub.s32 %s10, 2
    %s17 = sadd.s32 %s10, 1
    %s18 = ssub.s32 %s10, %s17
    %p19 = scmp.eq.s32.totalorder %s18, 0
    %s21 = sadd.s32 %s20, 1
    %s22 = scalar_select %p19, %s20, %s21
    %p25 = pneg %p19
    %p26 = scmp.eq.s32.totalorder %s10, 1
    %p27 = por %p25, %p26
    %p28 = scmp.ne.s32.totalorder %s20, %s23
    %p29 = scmp.eq.s32.totalorder %s10, 0
    %p30 = por %p28, %p29
    %p31 = scmp.ne.s32.totalorder %s20, %s23
    %p32 = scmp.eq.s32.totalorder %s15, 1
    %p33 = por %p31, %p32
    %p34 = scmp.ne.s32.totalorder %s23, %s24
    %p35 = scmp.eq.s32.totalorder %s15, 0
    %p36 = por %p34, %p35
    %p37 = scmp.ne.s32.totalorder %s23, %s24
    %p38 = scmp.eq.s32.totalorder %s16, 1
    %p39 = por %p37, %p38
    %p41 = scmp.ne.s32.totalorder %s24, %s40
    %p42 = scmp.eq.s32.totalorder %s16, 0
    %p43 = por %p41, %p42
    %s45 = sadd.s32 %s44, 1
    %p48 = scmp.eq.s32.totalorder %s10, 1
    %p49 = scmp.ne.s32.totalorder %s44, %s46
    %p50 = scmp.eq.s32.totalorder %s10, 0
    %p51 = por %p49, %p50
    %p52 = scmp.ne.s32.totalorder %s44, %s46
    %p53 = scmp.eq.s32.totalorder %s15, 1
    %p54 = por %p52, %p53
    %p55 = scmp.ne.s32.totalorder %s46, %s47
    %p56 = scmp.eq.s32.totalorder %s15, 0
    %p57 = por %p55, %p56
    %p58 = scmp.ne.s32.totalorder %s46, %s47
    %p59 = scmp.eq.s32.totalorder %s16, 1
    %p60 = por %p58, %p59
    %p62 = scmp.ne.s32.totalorder %s47, %s61
    %p63 = scmp.eq.s32.totalorder %s16, 0
    %p64 = por %p62, %p63
    %s66 = sadd.s32 %s65, 1
    %p69 = scmp.eq.s32.totalorder %s10, 1
    %p70 = scmp.ne.s32.totalorder %s65, %s67
    %p71 = scmp.eq.s32.totalorder %s10, 0
    %p72 = por %p70, %p71
    %p73 = scmp.ne.s32.totalorder %s65, %s67
    %p74 = scmp.eq.s32.totalorder %s15, 1
    %p75 = por %p73, %p74
    %p76 = scmp.ne.s32.totalorder %s67, %s68
    %p77 = scmp.eq.s32.totalorder %s15, 0
    %p78 = por %p76, %p77
    %p79 = scmp.ne.s32.totalorder %s67, %s68
    %p80 = scmp.eq.s32.totalorder %s16, 1
    %p81 = por %p79, %p80
    %p83 = scmp.ne.s32.totalorder %s68, %s82
    %p84 = scmp.eq.s32.totalorder %s16, 0
    %p85 = por %p83, %p84
    %s87 = sadd.s32 %s86, 1
    %p90 = scmp.eq.s32.totalorder %s10, 1
    %p91 = scmp.ne.s32.totalorder %s86, %s88
    %p92 = scmp.eq.s32.totalorder %s10, 0
    %p93 = por %p91, %p92
    %p94 = scmp.ne.s32.totalorder %s86, %s88
    %p95 = scmp.eq.s32.totalorder %s15, 1
    %p96 = por %p94, %p95
    %p97 = scmp.ne.s32.totalorder %s88, %s89
    %p98 = scmp.eq.s32.totalorder %s15, 0
    %p99 = por %p97, %p98
    %p100 = scmp.ne.s32.totalorder %s88, %s89
    %p101 = scmp.eq.s32.totalorder %s16, 1
    %p102 = por %p100, %p101
    %p104 = scmp.ne.s32.totalorder %s89, %s103
    %p105 = scmp.eq.s32.totalorder %s16, 0
    %p106 = por %p104, %p105
    %s107 = ssub.s32 %s10, %s17
    %p108 = scmp.eq.s32.totalorder %s107, 0
    %s110 = sadd.s32 %s109, 1
    %s111 = scalar_select %p108, %s109, %s110
    %p114 = pneg %p108
    %p115 = scmp.eq.s32.totalorder %s10, 1
    %p116 = por %p114, %p115
    %p117 = scmp.ne.s32.totalorder %s109, %s112
    %p118 = scmp.eq.s32.totalorder %s10, 0
    %p119 = por %p117, %p118
    %p120 = scmp.ne.s32.totalorder %s109, %s112
    %p121 = scmp.eq.s32.totalorder %s15, 1
    %p122 = por %p120, %p121
    %p123 = scmp.ne.s32.totalorder %s112, %s113
    %p124 = scmp.eq.s32.totalorder %s15, 0
    %p125 = por %p123, %p124
    %p126 = scmp.ne.s32.totalorder %s112, %s113
    %p127 = scmp.eq.s32.totalorder %s16, 1
    %p128 = por %p126, %p127
    %p130 = scmp.ne.s32.totalorder %s113, %s129
    %p131 = scmp.eq.s32.totalorder %s16, 0
    %p132 = por %p130, %p131
    %p133 = scmp.le.s32.totalorder 1, %s10
    %p134 = scmp.lt.s32.totalorder %s10, 3
    %p135 = pnand %p133, %p134
    %p136 = pneg %p135
    // Predicated region
    $region9: #{inception_a_forward.4} parent=5 // pred_check
      _
    $region10: #{inception_a_forward.4} parent=5 // pred_check_branch
      %138 = sbr.rel (%p135) target = $region12
    $region11: #{inception_a_forward.4} parent=5 // pred_region
      %s139 = ssub.s32 %s10, 1
      // Predicated region
      $region13: #{inception_a_forward.4} parent=11 // pred_check
        %p140 = pneg %p57
      $region14: #{inception_a_forward.4} parent=11 // pred_check_branch
        %142 = sbr.rel (%p140) target = $region16
      $region15: #{inception_a_forward.4} parent=11 // pred_region
        _
      $region16: #{inception_a_forward.4} parent=11 // pred_fallthru
        _
      // Predicated region
      $region17: #{inception_a_forward.4} parent=11 // pred_check
        %p143 = pneg %p78
      $region18: #{inception_a_forward.4} parent=11 // pred_check_branch
        %145 = sbr.rel (%p143) target = $region20
      $region19: #{inception_a_forward.4} parent=11 // pred_region
        _
      $region20: #{inception_a_forward.4} parent=11 // pred_fallthru
        _
      // Predicated region
      $region21: #{inception_a_forward.4} parent=11 // pred_check
        %p146 = pneg %p99
      $region22: #{inception_a_forward.4} parent=11 // pred_check_branch
        %148 = sbr.rel (%p146) target = $region24
      $region23: #{inception_a_forward.4} parent=11 // pred_region
        _
      $region24: #{inception_a_forward.4} parent=11 // pred_fallthru
        _
    $region12: #{inception_a_forward.4} parent=5 // pred_fallthru
      _
    %p149 = scmp.lt.s32.totalorder %s10, 2
    // Predicated region
    $region25: #{inception_a_forward.4} parent=5 // pred_check
      %p150 = pneg %p149
    $region26: #{inception_a_forward.4} parent=5 // pred_check_branch
      %152 = sbr.rel (%p150) target = $region28
    $region27: #{inception_a_forward.4} parent=5 // pred_region
      // Predicated region
      $region29: #{inception_a_forward.4} parent=27 // pred_check
        %p153 = pneg %p30
      $region30: #{inception_a_forward.4} parent=27 // pred_check_branch
        %155 = sbr.rel (%p153) target = $region32
      $region31: #{inception_a_forward.4} parent=27 // pred_region
        %s156 = smul.u32 32, %s10
        %p157 = scmp.lt.s32.totalorder %s156, 63
        %s158 = scalar_select %p157, %s156, 63
        %s159 = smul.addr %s158, 8
        %s160 = scalar_lea.vmem %s0, %s159
        %s161 = smul.u32 32, %s10
      $region32: #{inception_a_forward.4} parent=27 // pred_fallthru
        _
    $region28: #{inception_a_forward.4} parent=5 // pred_fallthru
      _
    %p162 = scmp.le.s32.totalorder 1, %s10
    %p163 = scmp.lt.s32.totalorder %s10, 3
    %p164 = pnand %p162, %p163
    %p165 = pneg %p164
    // Predicated region
    $region33: #{inception_a_forward.4} parent=5 // pred_check
      _
    $region34: #{inception_a_forward.4} parent=5 // pred_check_branch
      %167 = sbr.rel (%p164) target = $region36
    $region35: #{inception_a_forward.4} parent=5 // pred_region
      %s168 = ssub.s32 %s10, 1
      %s169 = smul.u32 32, %s15
      %p170 = scmp.lt.s32.totalorder %s169, 63
      %s171 = scalar_select %p170, %s169, 63
      %s172 = smul.addr %s171, 8
      %s173 = scalar_lea.vmem %s0, %s172
      %p174 = pneg %p36
      %p175 = pneg %p33
      %p176 = pneg %p57
      %p177 = pneg %p54
      %p178 = pneg %p78
      %p179 = pneg %p75
      %p180 = pneg %p99
      %p181 = pneg %p96
      %p182 = pneg %p125
      %p183 = pneg %p122
      %s184 = smul.u32 32, %s15
      %p185 = scmp.lt.s32.totalorder %s184, 63
      %s186 = scalar_select %p185, %s184, 63
      %s187 = smul.addr %s186, 8
      %s188 = scalar_lea.vmem %s4, %s187
      %s189 = smul.u32 32, %s15
      %p190 = scmp.lt.s32.totalorder %s189, 63
      %s191 = scalar_select %p190, %s189, 63
      %s192 = smul.addr %s191, 8
      %s193 = scalar_lea.vmem %s0, %s192
      %s194 = smul.u32 32, %s15
      %s195 = smul.u32 32, %s15
      %p196 = scmp.lt.s32.totalorder %s195, 63
      %s197 = scalar_select %p196, %s195, 63
      %s198 = smul.addr %s197, 8
      %s199 = scalar_lea.vmem %s4, %s198
      %s200 = smul.u32 32, %s15
      %v201 = vld [vmem:[%s193] sm:$0xff]
      %v202 = vld [vmem:[%s193 + $0x8] sm:$0xff]
      %v203 = vld [vmem:[%s193 + $0x10] sm:$0xff]
      %v204 = vld [vmem:[%s193 + $0x18] sm:$0xff]
      %v205 = vld [vmem:[%s193 + $0x20] sm:$0xff]
      %v206 = vld [vmem:[%s193 + $0x28] sm:$0xff]
      %v207 = vld [vmem:[%s193 + $0x30] sm:$0xff]
      %v208 = vld [vmem:[%s193 + $0x38] sm:$0xff]
      %v209 = vld [vmem:[%s193 + $0x40] sm:$0xff]
      %v210 = vld [vmem:[%s193 + $0x48] sm:$0xff]
      %v211 = vld [vmem:[%s193 + $0x50] sm:$0xff]
      %v212 = vld [vmem:[%s193 + $0x58] sm:$0xff]
      %v213 = vld [vmem:[%s193 + $0x60] sm:$0xff]
      %v214 = vld [vmem:[%s193 + $0x68] sm:$0xff]
      %v215 = vld [vmem:[%s193 + $0x70] sm:$0xff]
      %v216 = vld [vmem:[%s193 + $0x78] sm:$0xff]
      %v217 = vld [vmem:[%s193 + $0x80] sm:$0xff]
      %v218 = vld [vmem:[%s193 + $0x88] sm:$0xff]
      %v219 = vld [vmem:[%s193 + $0x90] sm:$0xff]
      %v220 = vld [vmem:[%s193 + $0x98] sm:$0xff]
      %v221 = vld [vmem:[%s193 + $0xa0] sm:$0xff]
      %v222 = vld [vmem:[%s193 + $0xa8] sm:$0xff]
      %v223 = vld [vmem:[%s193 + $0xb0] sm:$0xff]
      %v224 = vld [vmem:[%s193 + $0xb8] sm:$0xff]
      %v225 = vld [vmem:[%s193 + $0xc0] sm:$0xff]
      %v226 = vld [vmem:[%s193 + $0xc8] sm:$0xff]
      %v227 = vld [vmem:[%s193 + $0xd0] sm:$0xff]
      %v228 = vld [vmem:[%s193 + $0xd8] sm:$0xff]
      %v229 = vld [vmem:[%s193 + $0xe0] sm:$0xff]
      %v230 = vld [vmem:[%s193 + $0xe8] sm:$0xff]
      %v231 = vld [vmem:[%s193 + $0xf0] sm:$0xff]
      %v232 = vld [vmem:[%s193 + $0xf8] sm:$0xff]
      %v233 = vld [vmem:[%s1] sm:$0xf]
      %v234 = vld [vmem:[%s2] sm:$0x1]
      %v236 = vperm.slane %v234, 0
      %vm238 = vcmask 31744
      %v240 = vsel %vm238, %v201, 0
      %v243 = vsel %vm238, %v202, 0
      %v246 = vsel %vm238, %v203, 0
      %v249 = vsel %vm238, %v204, 0
      %v252 = vsel %vm238, %v205, 0
      %v255 = vsel %vm238, %v206, 0
      %v258 = vsel %vm238, %v207, 0
      %v261 = vsel %vm238, %v208, 0
      %v264 = vsel %vm238, %v209, 0
      %v267 = vsel %vm238, %v210, 0
      %v270 = vsel %vm238, %v211, 0
      %v273 = vsel %vm238, %v212, 0
      %v276 = vsel %vm238, %v213, 0
      %v279 = vsel %vm238, %v214, 0
      %v282 = vsel %vm238, %v215, 0
      %v285 = vsel %vm238, %v216, 0
      %v288 = vsel %vm238, %v217, 0
      %v291 = vsel %vm238, %v218, 0
      %v294 = vsel %vm238, %v219, 0
      %v297 = vsel %vm238, %v220, 0
      %v300 = vsel %vm238, %v221, 0
      %v303 = vsel %vm238, %v222, 0
      %v306 = vsel %vm238, %v223, 0
      %v309 = vsel %vm238, %v224, 0
      %v312 = vsel %vm238, %v225, 0
      %v315 = vsel %vm238, %v226, 0
      %v318 = vsel %vm238, %v227, 0
      %v321 = vsel %vm238, %v228, 0
      %v324 = vsel %vm238, %v229, 0
      %v327 = vsel %vm238, %v230, 0
      %v330 = vsel %vm238, %v231, 0
      %v333 = vsel %vm238, %v232, 0
      %vm335 = vcmask 1043456
      %v337 = vsel %vm335, %v233, 0
      %339 = vmatpush.msra.mxu0 0.0
      %340 = vmatpush.msra.mxu0 0.0
      %341 = vmatpush.msra.mxu0 0.0
      %342 = vmatpush.msra.mxu0 0.0
      %343 = vmatpush.msra.mxu0 0.0
      %344 = vmatpush.msra.mxu0 0.0
      %345 = vmatpush.msra.mxu0 0.0
      %346 = vmatpush.msra.mxu0 0.0
      %347 = vmatpush.msra.mxu0 0.0
      %348 = vmatpush.msra.mxu0 0.0
      %349 = vmatpush.msra.mxu0 0.0
      %350 = vmatpush.msra.mxu0 0.0
      %351 = vmatpush.msra.mxu0 0.0
      %352 = vmatpush.msra.mxu0 0.0
      %353 = vmatpush.msra.mxu0 0.0
      %354 = vmatpush.msra.mxu0 %v337
      %355 = vmatmul.f32.gmra.mxu0 %v240
      %v356 = vpop.f32.mrf.mxu0
      %v357 = vadd.f32 %v236, %v356
      %358 = vmatmul.f32.gmra.mxu0 %v243
      %v359 = vpop.f32.mrf.mxu0
      %v360 = vadd.f32 %v236, %v359
      %361 = vmatmul.f32.gmra.mxu0 %v246
      %v362 = vpop.f32.mrf.mxu0
      %v363 = vadd.f32 %v236, %v362
      %364 = vmatmul.f32.gmra.mxu0 %v249
      %v365 = vpop.f32.mrf.mxu0
      %v366 = vadd.f32 %v236, %v365
      %367 = vmatmul.f32.gmra.mxu0 %v252
      %v368 = vpop.f32.mrf.mxu0
      %v369 = vadd.f32 %v236, %v368
      %370 = vmatmul.f32.gmra.mxu0 %v255
      %v371 = vpop.f32.mrf.mxu0
      %v372 = vadd.f32 %v236, %v371
      %373 = vmatmul.f32.gmra.mxu0 %v258
      %v374 = vpop.f32.mrf.mxu0
      %v375 = vadd.f32 %v236, %v374
      %376 = vmatmul.f32.gmra.mxu0 %v261
      %v377 = vpop.f32.mrf.mxu0
      %v378 = vadd.f32 %v236, %v377
      %379 = vmatmul.f32.gmra.mxu0 %v264
      %v380 = vpop.f32.mrf.mxu0
      %v381 = vadd.f32 %v236, %v380
      %382 = vmatmul.f32.gmra.mxu0 %v267
      %v383 = vpop.f32.mrf.mxu0
      %v384 = vadd.f32 %v236, %v383
      %385 = vmatmul.f32.gmra.mxu0 %v270
      %v386 = vpop.f32.mrf.mxu0
      %v387 = vadd.f32 %v236, %v386
      %388 = vmatmul.f32.gmra.mxu0 %v273
      %v389 = vpop.f32.mrf.mxu0
      %v390 = vadd.f32 %v236, %v389
      %391 = vmatmul.f32.gmra.mxu0 %v276
      %v392 = vpop.f32.mrf.mxu0
      %v393 = vadd.f32 %v236, %v392
      %394 = vmatmul.f32.gmra.mxu0 %v279
      %v395 = vpop.f32.mrf.mxu0
      %v396 = vadd.f32 %v236, %v395
      %397 = vmatmul.f32.gmra.mxu0 %v282
      %v398 = vpop.f32.mrf.mxu0
      %v399 = vadd.f32 %v236, %v398
      %400 = vmatmul.f32.gmra.mxu0 %v285
      %v401 = vpop.f32.mrf.mxu0
      %v402 = vadd.f32 %v236, %v401
      %403 = vmatmul.f32.gmra.mxu0 %v288
      %v404 = vpop.f32.mrf.mxu0
      %v405 = vadd.f32 %v236, %v404
      %406 = vmatmul.f32.gmra.mxu0 %v291
      %v407 = vpop.f32.mrf.mxu0
      %v408 = vadd.f32 %v236, %v407
      %409 = vmatmul.f32.gmra.mxu0 %v294
      %v410 = vpop.f32.mrf.mxu0
      %v411 = vadd.f32 %v236, %v410
      %412 = vmatmul.f32.gmra.mxu0 %v297
      %v413 = vpop.f32.mrf.mxu0
      %v414 = vadd.f32 %v236, %v413
      %415 = vmatmul.f32.gmra.mxu0 %v300
      %v416 = vpop.f32.mrf.mxu0
      %v417 = vadd.f32 %v236, %v416
      %418 = vmatmul.f32.gmra.mxu0 %v303
      %v419 = vpop.f32.mrf.mxu0
      %v420 = vadd.f32 %v236, %v419
      %421 = vmatmul.f32.gmra.mxu0 %v306
      %v422 = vpop.f32.mrf.mxu0
      %v423 = vadd.f32 %v236, %v422
      %424 = vmatmul.f32.gmra.mxu0 %v309
      %v425 = vpop.f32.mrf.mxu0
      %v426 = vadd.f32 %v236, %v425
      %427 = vmatmul.f32.gmra.mxu0 %v312
      %v428 = vpop.f32.mrf.mxu0
      %v429 = vadd.f32 %v236, %v428
      %430 = vmatmul.f32.gmra.mxu0 %v315
      %v431 = vpop.f32.mrf.mxu0
      %v432 = vadd.f32 %v236, %v431
      %433 = vmatmul.f32.gmra.mxu0 %v318
      %v434 = vpop.f32.mrf.mxu0
      %v435 = vadd.f32 %v236, %v434
      %436 = vmatmul.f32.gmra.mxu0 %v321
      %v437 = vpop.f32.mrf.mxu0
      %v438 = vadd.f32 %v236, %v437
      %439 = vmatmul.f32.gmra.mxu0 %v324
      %v440 = vpop.f32.mrf.mxu0
      %v441 = vadd.f32 %v236, %v440
      %442 = vmatmul.f32.gmra.mxu0 %v327
      %v443 = vpop.f32.mrf.mxu0
      %v444 = vadd.f32 %v236, %v443
      %445 = vmatmul.f32.gmra.mxu0 %v330
      %v446 = vpop.f32.mrf.mxu0
      %v447 = vadd.f32 %v236, %v446
      %448 = vmatmul.f32.gmra.mxu0 %v333
      %v449 = vpop.f32.mrf.mxu0
      %v450 = vadd.f32 %v236, %v449
      %451 = vdwg.mxu0
      %v452 = vld [vmem:[%s3] sm:$0x1]
      %vm453 = vcmp.gt.f32.partialorder %v452, 0.0
      %v454 = vmax.f32 %v357, 0.0
      %v455 = vmax.f32 %v360, 0.0
      %v456 = vmax.f32 %v363, 0.0
      %v457 = vmax.f32 %v366, 0.0
      %v458 = vmax.f32 %v369, 0.0
      %v459 = vmax.f32 %v372, 0.0
      %v460 = vmax.f32 %v375, 0.0
      %v461 = vmax.f32 %v378, 0.0
      %v462 = vmax.f32 %v381, 0.0
      %v463 = vmax.f32 %v384, 0.0
      %v464 = vmax.f32 %v387, 0.0
      %v465 = vmax.f32 %v390, 0.0
      %v466 = vmax.f32 %v393, 0.0
      %v467 = vmax.f32 %v396, 0.0
      %v468 = vmax.f32 %v399, 0.0
      %v469 = vmax.f32 %v402, 0.0
      %v470 = vmax.f32 %v405, 0.0
      %v471 = vmax.f32 %v408, 0.0
      %v472 = vmax.f32 %v411, 0.0
      %v473 = vmax.f32 %v414, 0.0
      %v474 = vmax.f32 %v417, 0.0
      %v475 = vmax.f32 %v420, 0.0
      %v476 = vmax.f32 %v423, 0.0
      %v477 = vmax.f32 %v426, 0.0
      %v478 = vmax.f32 %v429, 0.0
      %v479 = vmax.f32 %v432, 0.0
      %v480 = vmax.f32 %v435, 0.0
      %v481 = vmax.f32 %v438, 0.0
      %v482 = vmax.f32 %v441, 0.0
      %v483 = vmax.f32 %v444, 0.0
      %v484 = vmax.f32 %v447, 0.0
      %v485 = vmax.f32 %v450, 0.0
      %v486 = vsel %vm453, 1, 0
      %v487 = vperm.slane %v486, 0
      %vm488 = vcmp.eq.s32.totalorder %v487, 1
      %v489 = vsel %vm488, %v454, %v357
      %v490 = vsel %vm488, %v455, %v360
      %v491 = vsel %vm488, %v456, %v363
      %v492 = vsel %vm488, %v457, %v366
      %v493 = vsel %vm488, %v458, %v369
      %v494 = vsel %vm488, %v459, %v372
      %v495 = vsel %vm488, %v460, %v375
      %v496 = vsel %vm488, %v461, %v378
      %v497 = vsel %vm488, %v462, %v381
      %v498 = vsel %vm488, %v463, %v384
      %v499 = vsel %vm488, %v464, %v387
      %v500 = vsel %vm488, %v465, %v390
      %v501 = vsel %vm488, %v466, %v393
      %v502 = vsel %vm488, %v467, %v396
      %v503 = vsel %vm488, %v468, %v399
      %v504 = vsel %vm488, %v469, %v402
      %v505 = vsel %vm488, %v470, %v405
      %v506 = vsel %vm488, %v471, %v408
      %v507 = vsel %vm488, %v472, %v411
      %v508 = vsel %vm488, %v473, %v414
      %v509 = vsel %vm488, %v474, %v417
      %v510 = vsel %vm488, %v475, %v420
      %v511 = vsel %vm488, %v476, %v423
      %v512 = vsel %vm488, %v477, %v426
      %v513 = vsel %vm488, %v478, %v429
      %v514 = vsel %vm488, %v479, %v432
      %v515 = vsel %vm488, %v480, %v435
      %v516 = vsel %vm488, %v481, %v438
      %v517 = vsel %vm488, %v482, %v441
      %v518 = vsel %vm488, %v483, %v444
      %v519 = vsel %vm488, %v484, %v447
      %v520 = vsel %vm488, %v485, %v450
      %vm521 = vcmask 195584
      %522 = vst.msk [vmem:[%s199] sm:$0xff] %vm521, %v489
      %523 = vst.msk [vmem:[%s199 + $0x8] sm:$0xff] %vm521, %v490
      %524 = vst.msk [vmem:[%s199 + $0x10] sm:$0xff] %vm521, %v491
      %525 = vst.msk [vmem:[%s199 + $0x18] sm:$0xff] %vm521, %v492
      %526 = vst.msk [vmem:[%s199 + $0x20] sm:$0xff] %vm521, %v493
      %527 = vst.msk [vmem:[%s199 + $0x28] sm:$0xff] %vm521, %v494
      %528 = vst.msk [vmem:[%s199 + $0x30] sm:$0xff] %vm521, %v495
      %529 = vst.msk [vmem:[%s199 + $0x38] sm:$0xff] %vm521, %v496
      %530 = vst.msk [vmem:[%s199 + $0x40] sm:$0xff] %vm521, %v497
      %531 = vst.msk [vmem:[%s199 + $0x48] sm:$0xff] %vm521, %v498
      %532 = vst.msk [vmem:[%s199 + $0x50] sm:$0xff] %vm521, %v499
      %533 = vst.msk [vmem:[%s199 + $0x58] sm:$0xff] %vm521, %v500
      %534 = vst.msk [vmem:[%s199 + $0x60] sm:$0xff] %vm521, %v501
      %535 = vst.msk [vmem:[%s199 + $0x68] sm:$0xff] %vm521, %v502
      %536 = vst.msk [vmem:[%s199 + $0x70] sm:$0xff] %vm521, %v503
      %537 = vst.msk [vmem:[%s199 + $0x78] sm:$0xff] %vm521, %v504
      %538 = vst.msk [vmem:[%s199 + $0x80] sm:$0xff] %vm521, %v505
      %539 = vst.msk [vmem:[%s199 + $0x88] sm:$0xff] %vm521, %v506
      %540 = vst.msk [vmem:[%s199 + $0x90] sm:$0xff] %vm521, %v507
      %541 = vst.msk [vmem:[%s199 + $0x98] sm:$0xff] %vm521, %v508
      %542 = vst.msk [vmem:[%s199 + $0xa0] sm:$0xff] %vm521, %v509
      %543 = vst.msk [vmem:[%s199 + $0xa8] sm:$0xff] %vm521, %v510
      %544 = vst.msk [vmem:[%s199 + $0xb0] sm:$0xff] %vm521, %v511
      %545 = vst.msk [vmem:[%s199 + $0xb8] sm:$0xff] %vm521, %v512
      %546 = vst.msk [vmem:[%s199 + $0xc0] sm:$0xff] %vm521, %v513
      %547 = vst.msk [vmem:[%s199 + $0xc8] sm:$0xff] %vm521, %v514
      %548 = vst.msk [vmem:[%s199 + $0xd0] sm:$0xff] %vm521, %v515
      %549 = vst.msk [vmem:[%s199 + $0xd8] sm:$0xff] %vm521, %v516
      %550 = vst.msk [vmem:[%s199 + $0xe0] sm:$0xff] %vm521, %v517
      %551 = vst.msk [vmem:[%s199 + $0xe8] sm:$0xff] %vm521, %v518
      %552 = vst.msk [vmem:[%s199 + $0xf0] sm:$0xff] %vm521, %v519
      %553 = vst.msk [vmem:[%s199 + $0xf8] sm:$0xff] %vm521, %v520
      %s554 = smul.u32 32, %s15
      %p555 = scmp.lt.s32.totalorder %s554, 63
      %s556 = scalar_select %p555, %s554, 63
      %s557 = smul.addr %s556, 8
      %s558 = scalar_lea.vmem %s4, %s557
      // Predicated region
      $region37: #{inception_a_forward.4} parent=35 // pred_check
        %p559 = pneg %p122
      $region38: #{inception_a_forward.4} parent=35 // pred_check_branch
        %561 = sbr.rel (%p559) target = $region40
      $region39: #{inception_a_forward.4} parent=35 // pred_region
        %s562 = smul.u32 32, %s15
      $region40: #{inception_a_forward.4} parent=35 // pred_fallthru
        _
    $region36: #{inception_a_forward.4} parent=5 // pred_fallthru
      _
    %p563 = scmp.le.s32.totalorder 2, %s10
    // Predicated region
    $region41: #{inception_a_forward.4} parent=5 // pred_check
      %p564 = pneg %p563
    $region42: #{inception_a_forward.4} parent=5 // pred_check_branch
      %566 = sbr.rel (%p564) target = $region44
    $region43: #{inception_a_forward.4} parent=5 // pred_region
      %s567 = ssub.s32 %s10, 2
      // Predicated region
      $region45: #{inception_a_forward.4} parent=43 // pred_check
        %p568 = pneg %p128
      $region46: #{inception_a_forward.4} parent=43 // pred_check_branch
        %570 = sbr.rel (%p568) target = $region48
      $region47: #{inception_a_forward.4} parent=43 // pred_region
        %s571 = smul.u32 32, %s16
        %p572 = scmp.lt.s32.totalorder %s571, 63
        %s573 = scalar_select %p572, %s571, 63
        %s574 = smul.addr %s573, 8
        %s575 = scalar_lea.vmem %s4, %s574
      $region48: #{inception_a_forward.4} parent=43 // pred_fallthru
        _
    $region44: #{inception_a_forward.4} parent=5 // pred_fallthru
      _
  $region6: #{inception_a_forward.4} parent=0 // loop_footer
    %s14 = sadd.s32 1, %s10
  $region7: #{inception_a_forward.4} parent=0 // loop_footer_branch
    %9 = sbr.rel target = $region3
  $region8: #{inception_a_forward.4} parent=0 // loop_exit
    _

// kernel: inception_a_forward.5
$region0: #{inception_a_forward.5}
  #allocation0 [shape = 'u32[]', space=smem, size = 0x4, offset = 0x4, fixed_abs, tag = 'smem constant byte address 0x4 - core index']
  #allocation1 [shape = 'u32[72,128]{1,0:T(1,128)}', space=vmem, size = 0x9000, scoped, tag = 'internal scratch']
  %s0 = inlined_call_operand.vmem [shape: f32[2,288,12], index: 0, kind: input, shape index: {}]
  %s1 = inlined_call_operand.vmem [shape: f32[3,12,8], index: 1, kind: input, shape index: {}]
  %s2 = inlined_call_operand.vmem [shape: f32[1,8], index: 2, kind: input, shape index: {}]
  %s3 = inlined_call_operand.vmem [shape: f32[2,256,8], index: 3, kind: output, shape index: {}]
  %s4 = sld [smem:[#allocation0]]
  $region45: #{inception_a_forward.5} parent=0
    _
  %s6 = ssub.s32 1, %s4
  %s7 = scalar_select 0, %s6, %s4
  loop: start=0, step=1, limit=4
  $region2: #{inception_a_forward.5} parent=0 // loop_pre_header
    _
  $region3: #{inception_a_forward.5} parent=0 // loop_header
    %s9 = sphi 0, %s13
    %p10 = scmp.ge.s32.totalorder %s9, 4
    %s16 = sphi 0, %s28
    %s17 = sphi 0, %s24
    %s18 = sphi 0, %s16
    %s19 = sphi 0, %s17
    %s20 = sphi 0, %s18
    %s21 = sphi 0, %s19
    %s31 = sphi 0, %s33
    %s34 = sphi 0, %s31
    %s35 = sphi 0, %s34
    %s51 = sphi 0, %s35
    %s55 = sphi 0, %s55
    %s57 = sphi 0, %s55
    %s58 = sphi 0, %s57
    %s72 = sphi 0, %s58
    %s76 = sphi 0, %s76
    %s78 = sphi 0, %s76
    %s79 = sphi 0, %s78
    %s93 = sphi 0, %s79
    %s101 = sphi 0, %s103
    %s104 = sphi 0, %s101
    %s105 = sphi 0, %s104
    %s121 = sphi 0, %s105
  $region4: #{inception_a_forward.5} parent=0 // loop_header_branch
    %12 = sbr.rel (%p10) target = $region8
  $region5: #{inception_a_forward.5} parent=0 // loop_body
    %s14 = ssub.s32 %s9, 1
    %s15 = ssub.s32 %s9, 2
    %s22 = sadd.s32 1, %s17
    %p23 = scmp.ge.s32.totalorder %s22, 1
    %s24 = scalar_select %p23, 0, %s22
    %s25 = sadd.s32 1, %s16
    %s26 = scalar_select %p23, %s25, %s16
    %p27 = scmp.ge.s32.totalorder %s26, 2
    %s28 = scalar_select %p27, 0, %s26
    %s29 = ssub.s32 %s16, %s28
    %p30 = scmp.eq.s32.totalorder %s29, 0
    %s32 = sadd.s32 %s31, 1
    %s33 = scalar_select %p30, %s31, %s32
    %p36 = pneg %p30
    %p37 = scmp.eq.s32.totalorder %s9, 1
    %p38 = por %p36, %p37
    %p39 = scmp.ne.s32.totalorder %s31, %s34
    %p40 = scmp.eq.s32.totalorder %s9, 0
    %p41 = por %p39, %p40
    %p42 = scmp.ne.s32.totalorder %s31, %s34
    %p43 = scmp.eq.s32.totalorder %s14, 1
    %p44 = por %p42, %p43
    %p45 = scmp.ne.s32.totalorder %s34, %s35
    %p46 = scmp.eq.s32.totalorder %s14, 0
    %p47 = por %p45, %p46
    %p48 = scmp.ne.s32.totalorder %s34, %s35
    %p49 = scmp.eq.s32.totalorder %s15, 1
    %p50 = por %p48, %p49
    %p52 = scmp.ne.s32.totalorder %s35, %s51
    %p53 = scmp.eq.s32.totalorder %s15, 0
    %p54 = por %p52, %p53
    %s56 = sadd.s32 %s55, 1
    %p59 = scmp.eq.s32.totalorder %s9, 1
    %p60 = scmp.ne.s32.totalorder %s55, %s57
    %p61 = scmp.eq.s32.totalorder %s9, 0
    %p62 = por %p60, %p61
    %p63 = scmp.ne.s32.totalorder %s55, %s57
    %p64 = scmp.eq.s32.totalorder %s14, 1
    %p65 = por %p63, %p64
    %p66 = scmp.ne.s32.totalorder %s57, %s58
    %p67 = scmp.eq.s32.totalorder %s14, 0
    %p68 = por %p66, %p67
    %p69 = scmp.ne.s32.totalorder %s57, %s58
    %p70 = scmp.eq.s32.totalorder %s15, 1
    %p71 = por %p69, %p70
    %p73 = scmp.ne.s32.totalorder %s58, %s72
    %p74 = scmp.eq.s32.totalorder %s15, 0
    %p75 = por %p73, %p74
    %s77 = sadd.s32 %s76, 1
    %p80 = scmp.eq.s32.totalorder %s9, 1
    %p81 = scmp.ne.s32.totalorder %s76, %s78
    %p82 = scmp.eq.s32.totalorder %s9, 0
    %p83 = por %p81, %p82
    %p84 = scmp.ne.s32.totalorder %s76, %s78
    %p85 = scmp.eq.s32.totalorder %s14, 1
    %p86 = por %p84, %p85
    %p87 = scmp.ne.s32.totalorder %s78, %s79
    %p88 = scmp.eq.s32.totalorder %s14, 0
    %p89 = por %p87, %p88
    %p90 = scmp.ne.s32.totalorder %s78, %s79
    %p91 = scmp.eq.s32.totalorder %s15, 1
    %p92 = por %p90, %p91
    %p94 = scmp.ne.s32.totalorder %s79, %s93
    %p95 = scmp.eq.s32.totalorder %s15, 0
    %p96 = por %p94, %p95
    %s97 = ssub.s32 %s16, %s28
    %s98 = ssub.s32 %s17, %s24
    %s99 = sor.u32 %s97, %s98
    %p100 = scmp.eq.s32.totalorder %s99, 0
    %s102 = sadd.s32 %s101, 1
    %s103 = scalar_select %p100, %s101, %s102
    %p106 = pneg %p100
    %p107 = scmp.eq.s32.totalorder %s9, 1
    %p108 = por %p106, %p107
    %p109 = scmp.ne.s32.totalorder %s101, %s104
    %p110 = scmp.eq.s32.totalorder %s9, 0
    %p111 = por %p109, %p110
    %p112 = scmp.ne.s32.totalorder %s101, %s104
    %p113 = scmp.eq.s32.totalorder %s14, 1
    %p114 = por %p112, %p113
    %p115 = scmp.ne.s32.totalorder %s104, %s105
    %p116 = scmp.eq.s32.totalorder %s14, 0
    %p117 = por %p115, %p116
    %p118 = scmp.ne.s32.totalorder %s104, %s105
    %p119 = scmp.eq.s32.totalorder %s15, 1
    %p120 = por %p118, %p119
    %p122 = scmp.ne.s32.totalorder %s105, %s121
    %p123 = scmp.eq.s32.totalorder %s15, 0
    %p124 = por %p122, %p123
    %p125 = scmp.le.s32.totalorder 1, %s9
    %p126 = scmp.lt.s32.totalorder %s9, 3
    %p127 = pnand %p125, %p126
    %p128 = pneg %p127
    // Predicated region
    $region9: #{inception_a_forward.5} parent=5 // pred_check
      _
    $region10: #{inception_a_forward.5} parent=5 // pred_check_branch
      %130 = sbr.rel (%p127) target = $region12
    $region11: #{inception_a_forward.5} parent=5 // pred_region
      %s131 = ssub.s32 %s9, 1
      // Predicated region
      $region13: #{inception_a_forward.5} parent=11 // pred_check
        %p132 = pneg %p68
      $region14: #{inception_a_forward.5} parent=11 // pred_check_branch
        %134 = sbr.rel (%p132) target = $region16
      $region15: #{inception_a_forward.5} parent=11 // pred_region
        _
      $region16: #{inception_a_forward.5} parent=11 // pred_fallthru
        _
      // Predicated region
      $region17: #{inception_a_forward.5} parent=11 // pred_check
        %p135 = pneg %p89
      $region18: #{inception_a_forward.5} parent=11 // pred_check_branch
        %137 = sbr.rel (%p135) target = $region20
      $region19: #{inception_a_forward.5} parent=11 // pred_region
        _
      $region20: #{inception_a_forward.5} parent=11 // pred_fallthru
        _
    $region12: #{inception_a_forward.5} parent=5 // pred_fallthru
      _
    %p138 = scmp.lt.s32.totalorder %s9, 2
    // Predicated region
    $region21: #{inception_a_forward.5} parent=5 // pred_check
      %p139 = pneg %p138
    $region22: #{inception_a_forward.5} parent=5 // pred_check_branch
      %141 = sbr.rel (%p139) target = $region24
    $region23: #{inception_a_forward.5} parent=5 // pred_region
      // Predicated region
      $region25: #{inception_a_forward.5} parent=23 // pred_check
        %p142 = pneg %p41
      $region26: #{inception_a_forward.5} parent=23 // pred_check_branch
        %144 = sbr.rel (%p142) target = $region28
      $region27: #{inception_a_forward.5} parent=23 // pred_region
        %p145 = scmp.lt.s32.totalorder %s16, 1
        %s146 = scalar_select %p145, %s16, 1
        %s147 = smul.addr %s146, 36
        %s148 = smul.addr %s147, 8
        %s149 = scalar_lea.vmem %s0, %s148
      $region28: #{inception_a_forward.5} parent=23 // pred_fallthru
        _
    $region24: #{inception_a_forward.5} parent=5 // pred_fallthru
      _
    %p150 = scmp.le.s32.totalorder 1, %s9
    %p151 = scmp.lt.s32.totalorder %s9, 3
    %p152 = pnand %p150, %p151
    %p153 = pneg %p152
    // Predicated region
    $region29: #{inception_a_forward.5} parent=5 // pred_check
      _
    $region30: #{inception_a_forward.5} parent=5 // pred_check_branch
      %155 = sbr.rel (%p152) target = $region32
    $region31: #{inception_a_forward.5} parent=5 // pred_region
      %s156 = ssub.s32 %s9, 1
      %p157 = scmp.lt.s32.totalorder %s18, 1
      %s158 = scalar_select %p157, %s18, 1
      %s159 = smul.addr %s158, 36
      %s160 = smul.addr %s159, 8
      %s161 = scalar_lea.vmem %s0, %s160
      %p162 = pneg %p47
      %p163 = pneg %p44
      %p164 = pneg %p68
      %p165 = pneg %p65
      %p166 = pneg %p89
      %p167 = pneg %p86
      %p168 = pneg %p117
      %p169 = pneg %p114
      %s170 = smul.u32 32, %s19
      %p171 = scmp.lt.s32.totalorder %s18, 1
      %s172 = scalar_select %p171, %s18, 1
      %p173 = scmp.lt.s32.totalorder %s170, 31
      %s174 = scalar_select %p173, %s170, 31
      %s175 = smul.addr %s172, 32
      %s176 = sadd.s32 %s174, %s175
      %s177 = smul.addr %s176, 8
      %s178 = scalar_lea.vmem %s3, %s177
      %p179 = scmp.lt.s32.totalorder %s18, 1
      %s180 = scalar_select %p179, %s18, 1
      %s181 = smul.addr %s180, 36
      %s182 = smul.addr %s181, 8
      %s183 = scalar_lea.vmem %s0, %s182
      %s184 = smul.u32 32, %s19
      %p185 = scmp.lt.s32.totalorder %s18, 1
      %s186 = scalar_select %p185, %s18, 1
      %p187 = scmp.lt.s32.totalorder %s184, 31
      %s188 = scalar_select %p187, %s184, 31
      %s189 = smul.addr %s186, 32
      %s190 = sadd.s32 %s188, %s189
      %s191 = smul.addr %s190, 8
      %s192 = scalar_lea.vmem %s3, %s191
      %s193 = smul.u32 32, %s19
      %s194 = smul.u32 %s19, 16
      %s195 = smul.u32 %s19, 256
      %s196 = scalar_lea.vmem %s183, %s195
      %v197 = vld [vmem:[%s196] sm:$0xff]
      %v198 = vld [vmem:[%s196 + $0x8] sm:$0xff]
      %v199 = vld [vmem:[%s196 + $0x10] sm:$0xff]
      %v200 = vld [vmem:[%s196 + $0x18] sm:$0xff]
      %v201 = vld [vmem:[%s196 + $0x20] sm:$0xff]
      %v202 = vld [vmem:[%s196 + $0x28] sm:$0xff]
      %v203 = vld [vmem:[%s196 + $0x30] sm:$0xff]
      %v204 = vld [vmem:[%s196 + $0x38] sm:$0xff]
      %v205 = vld [vmem:[%s196 + $0x40] sm:$0xff]
      %v206 = vld [vmem:[%s196 + $0x48] sm:$0xff]
      %v207 = vld [vmem:[%s196 + $0x50] sm:$0xff]
      %v208 = vld [vmem:[%s196 + $0x58] sm:$0xff]
      %v209 = vld [vmem:[%s196 + $0x60] sm:$0xff]
      %v210 = vld [vmem:[%s196 + $0x68] sm:$0xff]
      %v211 = vld [vmem:[%s196 + $0x70] sm:$0xff]
      %v212 = vld [vmem:[%s196 + $0x78] sm:$0xff]
      %v213 = vld [vmem:[%s196 + $0x80] sm:$0xff]
      %v214 = vld [vmem:[%s196 + $0x88] sm:$0xff]
      %v215 = vld [vmem:[%s196 + $0x90] sm:$0xff]
      %v216 = vld [vmem:[%s196 + $0x98] sm:$0xff]
      %v217 = vld [vmem:[%s196 + $0xa0] sm:$0xff]
      %v218 = vld [vmem:[%s196 + $0xa8] sm:$0xff]
      %v219 = vld [vmem:[%s196 + $0xb0] sm:$0xff]
      %v220 = vld [vmem:[%s196 + $0xb8] sm:$0xff]
      %v221 = vld [vmem:[%s196 + $0xc0] sm:$0xff]
      %v222 = vld [vmem:[%s196 + $0xc8] sm:$0xff]
      %v223 = vld [vmem:[%s196 + $0xd0] sm:$0xff]
      %v224 = vld [vmem:[%s196 + $0xd8] sm:$0xff]
      %v225 = vld [vmem:[%s196 + $0xe0] sm:$0xff]
      %v226 = vld [vmem:[%s196 + $0xe8] sm:$0xff]
      %v227 = vld [vmem:[%s196 + $0xf0] sm:$0xff]
      %v228 = vld [vmem:[%s196 + $0xf8] sm:$0xff]
      %v229 = vld [vmem:[%s1] sm:$0xff]
      %v230 = vld [vmem:[%s1 + $0x8] sm:$0xf]
      %s231 = sadd.s32 %s194, 1
      %s232 = smul.u32 %s231, 16
      %s233 = scalar_lea.vmem %s183, %s232
      %v234 = vld [vmem:[%s233] sm:$0xff]
      %v235 = vld [vmem:[%s233 + $0x8] sm:$0xff]
      %v236 = vld [vmem:[%s233 + $0x10] sm:$0xff]
      %v237 = vld [vmem:[%s233 + $0x18] sm:$0xff]
      %v238 = vld [vmem:[%s233 + $0x20] sm:$0xff]
      %v239 = vld [vmem:[%s233 + $0x28] sm:$0xff]
      %v240 = vld [vmem:[%s233 + $0x30] sm:$0xff]
      %v241 = vld [vmem:[%s233 + $0x38] sm:$0xff]
      %v242 = vld [vmem:[%s233 + $0x40] sm:$0xff]
      %v243 = vld [vmem:[%s233 + $0x48] sm:$0xff]
      %v244 = vld [vmem:[%s233 + $0x50] sm:$0xff]
      %v245 = vld [vmem:[%s233 + $0x58] sm:$0xff]
      %v246 = vld [vmem:[%s233 + $0x60] sm:$0xff]
      %v247 = vld [vmem:[%s233 + $0x68] sm:$0xff]
      %v248 = vld [vmem:[%s233 + $0x70] sm:$0xff]
      %v249 = vld [vmem:[%s233 + $0x78] sm:$0xff]
      %v250 = vld [vmem:[%s233 + $0x80] sm:$0xff]
      %v251 = vld [vmem:[%s233 + $0x88] sm:$0xff]
      %v252 = vld [vmem:[%s233 + $0x90] sm:$0xff]
      %v253 = vld [vmem:[%s233 + $0x98] sm:$0xff]
      %v254 = vld [vmem:[%s233 + $0xa0] sm:$0xff]
      %v255 = vld [vmem:[%s233 + $0xa8] sm:$0xff]
      %v256 = vld [vmem:[%s233 + $0xb0] sm:$0xff]
      %v257 = vld [vmem:[%s233 + $0xb8] sm:$0xff]
      %v258 = vld [vmem:[%s233 + $0xc0] sm:$0xff]
      %v259 = vld [vmem:[%s233 + $0xc8] sm:$0xff]
      %v260 = vld [vmem:[%s233 + $0xd0] sm:$0xff]
      %v261 = vld [vmem:[%s233 + $0xd8] sm:$0xff]
      %v262 = vld [vmem:[%s233 + $0xe0] sm:$0xff]
      %v263 = vld [vmem:[%s233 + $0xe8] sm:$0xff]
      %v264 = vld [vmem:[%s233 + $0xf0] sm:$0xff]
      %v265 = vld [vmem:[%s233 + $0xf8] sm:$0xff]
      %s266 = scalar_lea.vmem %s1, 16
      %v267 = vld [vmem:[%s266] sm:$0xff]
      %v268 = vld [vmem:[%s266 + $0x8] sm:$0xf]
      %vm269 = vcmask 97280
      %v271 = vsel %vm269, %v234, 0
      %v274 = vsel %vm269, %v235, 0
      %v277 = vsel %vm269, %v236, 0
      %v280 = vsel %vm269, %v237, 0
      %v283 = vsel %vm269, %v238, 0
      %v286 = vsel %vm269, %v239, 0
      %v289 = vsel %vm269, %v240, 0
      %v292 = vsel %vm269, %v241, 0
      %v295 = vsel %vm269, %v242, 0
      %v298 = vsel %vm269, %v243, 0
      %v301 = vsel %vm269, %v244, 0
      %v304 = vsel %vm269, %v245, 0
      %v307 = vsel %vm269, %v246, 0
      %v310 = vsel %vm269, %v247, 0
      %v313 = vsel %vm269, %v248, 0
      %v316 = vsel %vm269, %v249, 0
      %v319 = vsel %vm269, %v250, 0
      %v322 = vsel %vm269, %v251, 0
      %v325 = vsel %vm269, %v252, 0
      %v328 = vsel %vm269, %v253, 0
      %v331 = vsel %vm269, %v254, 0
      %v334 = vsel %vm269, %v255, 0
      %v337 = vsel %vm269, %v256, 0
      %v340 = vsel %vm269, %v257, 0
      %v343 = vsel %vm269, %v258, 0
      %v346 = vsel %vm269, %v259, 0
      %v349 = vsel %vm269, %v260, 0
      %v352 = vsel %vm269, %v261, 0
      %v355 = vsel %vm269, %v262, 0
      %v358 = vsel %vm269, %v263, 0
      %v361 = vsel %vm269, %v264, 0
      %v364 = vsel %vm269, %v265, 0
      %vm366 = vcmask 1043456
      %v368 = vsel %vm366, %v268, 0
      %370 = vmatpush.msra.mxu0 0.0
      %371 = vmatpush.msra.mxu0 0.0
      %372 = vmatpush.msra.mxu0 0.0
      %373 = vmatpush.msra.mxu0 0.0
      %374 = vmatpush.msra.mxu0 0.0
      %375 = vmatpush.msra.mxu0 0.0
      %376 = vmatpush.msra.mxu0 0.0
      %377 = vmatpush.msra.mxu0 0.0
      %378 = vmatpush.msra.mxu0 0.0
      %379 = vmatpush.msra.mxu0 0.0
      %380 = vmatpush.msra.mxu0 0.0
      %381 = vmatpush.msra.mxu0 0.0
      %382 = vmatpush.msra.mxu0 0.0
      %383 = vmatpush.msra.mxu0 0.0
      %384 = vmatpush.msra.mxu0 %v368
      %385 = vmatpush.msra.mxu0 %v267
      %386 = vmatmul.f32.gmra.mxu0 %v271
      %v387 = vpop.f32.mrf.mxu0
      %v388 = vadd.f32 0.0, %v387
      %389 = vmatmul.f32.gmra.mxu0 %v274
      %v390 = vpop.f32.mrf.mxu0
      %v391 = vadd.f32 0.0, %v390
      %392 = vmatmul.f32.gmra.mxu0 %v277
      %v393 = vpop.f32.mrf.mxu0
      %v394 = vadd.f32 0.0, %v393
      %395 = vmatmul.f32.gmra.mxu0 %v280
      %v396 = vpop.f32.mrf.mxu0
      %v397 = vadd.f32 0.0, %v396
      %398 = vmatmul.f32.gmra.mxu0 %v283
      %v399 = vpop.f32.mrf.mxu0
      %v400 = vadd.f32 0.0, %v399
      %401 = vmatmul.f32.gmra.mxu0 %v286
      %v402 = vpop.f32.mrf.mxu0
      %v403 = vadd.f32 0.0, %v402
      %404 = vmatmul.f32.gmra.mxu0 %v289
      %v405 = vpop.f32.mrf.mxu0
      %v406 = vadd.f32 0.0, %v405
      %407 = vmatmul.f32.gmra.mxu0 %v292
      %v408 = vpop.f32.mrf.mxu0
      %v409 = vadd.f32 0.0, %v408
      %410 = vmatmul.f32.gmra.mxu0 %v295
      %v411 = vpop.f32.mrf.mxu0
      %v412 = vadd.f32 0.0, %v411
      %413 = vmatmul.f32.gmra.mxu0 %v298
      %v414 = vpop.f32.mrf.mxu0
      %v415 = vadd.f32 0.0, %v414
      %416 = vmatmul.f32.gmra.mxu0 %v301
      %v417 = vpop.f32.mrf.mxu0
      %v418 = vadd.f32 0.0, %v417
      %419 = vmatmul.f32.gmra.mxu0 %v304
      %v420 = vpop.f32.mrf.mxu0
      %v421 = vadd.f32 0.0, %v420
      %422 = vmatmul.f32.gmra.mxu0 %v307
      %v423 = vpop.f32.mrf.mxu0
      %v424 = vadd.f32 0.0, %v423
      %425 = vmatmul.f32.gmra.mxu0 %v310
      %v426 = vpop.f32.mrf.mxu0
      %v427 = vadd.f32 0.0, %v426
      %428 = vmatmul.f32.gmra.mxu0 %v313
      %v429 = vpop.f32.mrf.mxu0
      %v430 = vadd.f32 0.0, %v429
      %431 = vmatmul.f32.gmra.mxu0 %v316
      %v432 = vpop.f32.mrf.mxu0
      %v433 = vadd.f32 0.0, %v432
      %434 = vmatmul.f32.gmra.mxu0 %v319
      %v435 = vpop.f32.mrf.mxu0
      %v436 = vadd.f32 0.0, %v435
      %437 = vmatmul.f32.gmra.mxu0 %v322
      %v438 = vpop.f32.mrf.mxu0
      %v439 = vadd.f32 0.0, %v438
      %440 = vmatmul.f32.gmra.mxu0 %v325
      %v441 = vpop.f32.mrf.mxu0
      %v442 = vadd.f32 0.0, %v441
      %443 = vmatmul.f32.gmra.mxu0 %v328
      %v444 = vpop.f32.mrf.mxu0
      %v445 = vadd.f32 0.0, %v444
      %446 = vmatmul.f32.gmra.mxu0 %v331
      %v447 = vpop.f32.mrf.mxu0
      %v448 = vadd.f32 0.0, %v447
      %449 = vmatmul.f32.gmra.mxu0 %v334
      %v450 = vpop.f32.mrf.mxu0
      %v451 = vadd.f32 0.0, %v450
      %452 = vmatmul.f32.gmra.mxu0 %v337
      %v453 = vpop.f32.mrf.mxu0
      %v454 = vadd.f32 0.0, %v453
      %455 = vmatmul.f32.gmra.mxu0 %v340
      %v456 = vpop.f32.mrf.mxu0
      %v457 = vadd.f32 0.0, %v456
      %458 = vmatmul.f32.gmra.mxu0 %v343
      %v459 = vpop.f32.mrf.mxu0
      %v460 = vadd.f32 0.0, %v459
      %461 = vmatmul.f32.gmra.mxu0 %v346
      %v462 = vpop.f32.mrf.mxu0
      %v463 = vadd.f32 0.0, %v462
      %464 = vmatmul.f32.gmra.mxu0 %v349
      %v465 = vpop.f32.mrf.mxu0
      %v466 = vadd.f32 0.0, %v465
      %467 = vmatmul.f32.gmra.mxu0 %v352
      %v468 = vpop.f32.mrf.mxu0
      %v469 = vadd.f32 0.0, %v468
      %470 = vmatmul.f32.gmra.mxu0 %v355
      %v471 = vpop.f32.mrf.mxu0
      %v472 = vadd.f32 0.0, %v471
      %473 = vmatmul.f32.gmra.mxu0 %v358
      %v474 = vpop.f32.mrf.mxu0
      %v475 = vadd.f32 0.0, %v474
      %476 = vmatmul.f32.gmra.mxu0 %v361
      %v477 = vpop.f32.mrf.mxu0
      %v478 = vadd.f32 0.0, %v477
      %479 = vmatmul.f32.gmra.mxu0 %v364
      %v480 = vpop.f32.mrf.mxu0
      %v481 = vadd.f32 0.0, %v480
      %482 = vdwg.mxu0
      %v484 = vsel %vm269, %v197, 0
      %v487 = vsel %vm269, %v198, 0
      %v490 = vsel %vm269, %v199, 0
      %v493 = vsel %vm269, %v200, 0
      %v496 = vsel %vm269, %v201, 0
      %v499 = vsel %vm269, %v202, 0
      %v502 = vsel %vm269, %v203, 0
      %v505 = vsel %vm269, %v204, 0
      %v508 = vsel %vm269, %v205, 0
      %v511 = vsel %vm269, %v206, 0
      %v514 = vsel %vm269, %v207, 0
      %v517 = vsel %vm269, %v208, 0
      %v520 = vsel %vm269, %v209, 0
      %v523 = vsel %vm269, %v210, 0
      %v526 = vsel %vm269, %v211, 0
      %v529 = vsel %vm269, %v212, 0
      %v532 = vsel %vm269, %v213, 0
      %v535 = vsel %vm269, %v214, 0
      %v538 = vsel %vm269, %v215, 0
      %v541 = vsel %vm269, %v216, 0
      %v544 = vsel %vm269, %v217, 0
      %v547 = vsel %vm269, %v218, 0
      %v550 = vsel %vm269, %v219, 0
      %v553 = vsel %vm269, %v220, 0
      %v556 = vsel %vm269, %v221, 0
      %v559 = vsel %vm269, %v222, 0
      %v562 = vsel %vm269, %v223, 0
      %v565 = vsel %vm269, %v224, 0
      %v568 = vsel %vm269, %v225, 0
      %v571 = vsel %vm269, %v226, 0
      %v574 = vsel %vm269, %v227, 0
      %v577 = vsel %vm269, %v228, 0
      %v580 = vsel %vm366, %v230, 0
      %582 = vmatpush.msra.mxu0 0.0
      %583 = vmatpush.msra.mxu0 0.0
      %584 = vmatpush.msra.mxu0 0.0
      %585 = vmatpush.msra.mxu0 0.0
      %586 = vmatpush.msra.mxu0 0.0
      %587 = vmatpush.msra.mxu0 0.0
      %588 = vmatpush.msra.mxu0 0.0
      %589 = vmatpush.msra.mxu0 0.0
      %590 = vmatpush.msra.mxu0 0.0
      %591 = vmatpush.msra.mxu0 0.0
      %592 = vmatpush.msra.mxu0 0.0
      %593 = vmatpush.msra.mxu0 0.0
      %594 = vmatpush.msra.mxu0 0.0
      %595 = vmatpush.msra.mxu0 0.0
      %596 = vmatpush.msra.mxu0 %v580
      %597 = vmatpush.msra.mxu0 %v229
      %598 = vmatmul.f32.gmra.mxu0 %v484
      %v599 = vpop.f32.mrf.mxu0
      %v600 = vadd.f32 %v388, %v599
      %601 = vmatmul.f32.gmra.mxu0 %v487
      %v602 = vpop.f32.mrf.mxu0
      %v603 = vadd.f32 %v391, %v602
      %604 = vmatmul.f32.gmra.mxu0 %v490
      %v605 = vpop.f32.mrf.mxu0
      %v606 = vadd.f32 %v394, %v605
      %607 = vmatmul.f32.gmra.mxu0 %v493
      %v608 = vpop.f32.mrf.mxu0
      %v609 = vadd.f32 %v397, %v608
      %610 = vmatmul.f32.gmra.mxu0 %v496
      %v611 = vpop.f32.mrf.mxu0
      %v612 = vadd.f32 %v400, %v611
      %613 = vmatmul.f32.gmra.mxu0 %v499
      %v614 = vpop.f32.mrf.mxu0
      %v615 = vadd.f32 %v403, %v614
      %616 = vmatmul.f32.gmra.mxu0 %v502
      %v617 = vpop.f32.mrf.mxu0
      %v618 = vadd.f32 %v406, %v617
      %619 = vmatmul.f32.gmra.mxu0 %v505
      %v620 = vpop.f32.mrf.mxu0
      %v621 = vadd.f32 %v409, %v620
      %622 = vmatmul.f32.gmra.mxu0 %v508
      %v623 = vpop.f32.mrf.mxu0
      %v624 = vadd.f32 %v412, %v623
      %625 = vmatmul.f32.gmra.mxu0 %v511
      %v626 = vpop.f32.mrf.mxu0
      %v627 = vadd.f32 %v415, %v626
      %628 = vmatmul.f32.gmra.mxu0 %v514
      %v629 = vpop.f32.mrf.mxu0
      %v630 = vadd.f32 %v418, %v629
      %631 = vmatmul.f32.gmra.mxu0 %v517
      %v632 = vpop.f32.mrf.mxu0
      %v633 = vadd.f32 %v421, %v632
      %634 = vmatmul.f32.gmra.mxu0 %v520
      %v635 = vpop.f32.mrf.mxu0
      %v636 = vadd.f32 %v424, %v635
      %637 = vmatmul.f32.gmra.mxu0 %v523
      %v638 = vpop.f32.mrf.mxu0
      %v639 = vadd.f32 %v427, %v638
      %640 = vmatmul.f32.gmra.mxu0 %v526
      %v641 = vpop.f32.mrf.mxu0
      %v642 = vadd.f32 %v430, %v641
      %643 = vmatmul.f32.gmra.mxu0 %v529
      %v644 = vpop.f32.mrf.mxu0
      %v645 = vadd.f32 %v433, %v644
      %646 = vmatmul.f32.gmra.mxu0 %v532
      %v647 = vpop.f32.mrf.mxu0
      %v648 = vadd.f32 %v436, %v647
      %649 = vmatmul.f32.gmra.mxu0 %v535
      %v650 = vpop.f32.mrf.mxu0
      %v651 = vadd.f32 %v439, %v650
      %652 = vmatmul.f32.gmra.mxu0 %v538
      %v653 = vpop.f32.mrf.mxu0
      %v654 = vadd.f32 %v442, %v653
      %655 = vmatmul.f32.gmra.mxu0 %v541
      %v656 = vpop.f32.mrf.mxu0
      %v657 = vadd.f32 %v445, %v656
      %658 = vmatmul.f32.gmra.mxu0 %v544
      %v659 = vpop.f32.mrf.mxu0
      %v660 = vadd.f32 %v448, %v659
      %661 = vmatmul.f32.gmra.mxu0 %v547
      %v662 = vpop.f32.mrf.mxu0
      %v663 = vadd.f32 %v451, %v662
      %664 = vmatmul.f32.gmra.mxu0 %v550
      %v665 = vpop.f32.mrf.mxu0
      %v666 = vadd.f32 %v454, %v665
      %667 = vmatmul.f32.gmra.mxu0 %v553
      %v668 = vpop.f32.mrf.mxu0
      %v669 = vadd.f32 %v457, %v668
      %670 = vmatmul.f32.gmra.mxu0 %v556
      %v671 = vpop.f32.mrf.mxu0
      %v672 = vadd.f32 %v460, %v671
      %673 = vmatmul.f32.gmra.mxu0 %v559
      %v674 = vpop.f32.mrf.mxu0
      %v675 = vadd.f32 %v463, %v674
      %676 = vmatmul.f32.gmra.mxu0 %v562
      %v677 = vpop.f32.mrf.mxu0
      %v678 = vadd.f32 %v466, %v677
      %679 = vmatmul.f32.gmra.mxu0 %v565
      %v680 = vpop.f32.mrf.mxu0
      %v681 = vadd.f32 %v469, %v680
      %682 = vmatmul.f32.gmra.mxu0 %v568
      %v683 = vpop.f32.mrf.mxu0
      %v684 = vadd.f32 %v472, %v683
      %685 = vmatmul.f32.gmra.mxu0 %v571
      %v686 = vpop.f32.mrf.mxu0
      %v687 = vadd.f32 %v475, %v686
      %688 = vmatmul.f32.gmra.mxu0 %v574
      %v689 = vpop.f32.mrf.mxu0
      %v690 = vadd.f32 %v478, %v689
      %691 = vmatmul.f32.gmra.mxu0 %v577
      %v692 = vpop.f32.mrf.mxu0
      %v693 = vadd.f32 %v481, %v692
      %694 = vdwg.mxu0
      %s695 = sadd.s32 %s194, 2
      %s696 = smul.u32 %s695, 16
      %s697 = scalar_lea.vmem %s183, %s696
      %v698 = vld [vmem:[%s697] sm:$0xff]
      %v699 = vld [vmem:[%s697 + $0x8] sm:$0xff]
      %v700 = vld [vmem:[%s697 + $0x10] sm:$0xff]
      %v701 = vld [vmem:[%s697 + $0x18] sm:$0xff]
      %v702 = vld [vmem:[%s697 + $0x20] sm:$0xff]
      %v703 = vld [vmem:[%s697 + $0x28] sm:$0xff]
      %v704 = vld [vmem:[%s697 + $0x30] sm:$0xff]
      %v705 = vld [vmem:[%s697 + $0x38] sm:$0xff]
      %v706 = vld [vmem:[%s697 + $0x40] sm:$0xff]
      %v707 = vld [vmem:[%s697 + $0x48] sm:$0xff]
      %v708 = vld [vmem:[%s697 + $0x50] sm:$0xff]
      %v709 = vld [vmem:[%s697 + $0x58] sm:$0xff]
      %v710 = vld [vmem:[%s697 + $0x60] sm:$0xff]
      %v711 = vld [vmem:[%s697 + $0x68] sm:$0xff]
      %v712 = vld [vmem:[%s697 + $0x70] sm:$0xff]
      %v713 = vld [vmem:[%s697 + $0x78] sm:$0xff]
      %v714 = vld [vmem:[%s697 + $0x80] sm:$0xff]
      %v715 = vld [vmem:[%s697 + $0x88] sm:$0xff]
      %v716 = vld [vmem:[%s697 + $0x90] sm:$0xff]
      %v717 = vld [vmem:[%s697 + $0x98] sm:$0xff]
      %v718 = vld [vmem:[%s697 + $0xa0] sm:$0xff]
      %v719 = vld [vmem:[%s697 + $0xa8] sm:$0xff]
      %v720 = vld [vmem:[%s697 + $0xb0] sm:$0xff]
      %v721 = vld [vmem:[%s697 + $0xb8] sm:$0xff]
      %v722 = vld [vmem:[%s697 + $0xc0] sm:$0xff]
      %v723 = vld [vmem:[%s697 + $0xc8] sm:$0xff]
      %v724 = vld [vmem:[%s697 + $0xd0] sm:$0xff]
      %v725 = vld [vmem:[%s697 + $0xd8] sm:$0xff]
      %v726 = vld [vmem:[%s697 + $0xe0] sm:$0xff]
      %v727 = vld [vmem:[%s697 + $0xe8] sm:$0xff]
      %v728 = vld [vmem:[%s697 + $0xf0] sm:$0xff]
      %v729 = vld [vmem:[%s697 + $0xf8] sm:$0xff]
      %s730 = scalar_lea.vmem %s1, 32
      %v731 = vld [vmem:[%s730] sm:$0xff]
      %v732 = vld [vmem:[%s730 + $0x8] sm:$0xf]
      %v734 = vsel %vm269, %v698, 0
      %v737 = vsel %vm269, %v699, 0
      %v740 = vsel %vm269, %v700, 0
      %v743 = vsel %vm269, %v701, 0
      %v746 = vsel %vm269, %v702, 0
      %v749 = vsel %vm269, %v703, 0
      %v752 = vsel %vm269, %v704, 0
      %v755 = vsel %vm269, %v705, 0
      %v758 = vsel %vm269, %v706, 0
      %v761 = vsel %vm269, %v707, 0
      %v764 = vsel %vm269, %v708, 0
      %v767 = vsel %vm269, %v709, 0
      %v770 = vsel %vm269, %v710, 0
      %v773 = vsel %vm269, %v711, 0
      %v776 = vsel %vm269, %v712, 0
      %v779 = vsel %vm269, %v713, 0
      %v782 = vsel %vm269, %v714, 0
      %v785 = vsel %vm269, %v715, 0
      %v788 = vsel %vm269, %v716, 0
      %v791 = vsel %vm269, %v717, 0
      %v794 = vsel %vm269, %v718, 0
      %v797 = vsel %vm269, %v719, 0
      %v800 = vsel %vm269, %v720, 0
      %v803 = vsel %vm269, %v721, 0
      %v806 = vsel %vm269, %v722, 0
      %v809 = vsel %vm269, %v723, 0
      %v812 = vsel %vm269, %v724, 0
      %v815 = vsel %vm269, %v725, 0
      %v818 = vsel %vm269, %v726, 0
      %v821 = vsel %vm269, %v727, 0
      %v824 = vsel %vm269, %v728, 0
      %v827 = vsel %vm269, %v729, 0
      %v830 = vsel %vm366, %v732, 0
      %832 = vmatpush.msra.mxu0 0.0
      %833 = vmatpush.msra.mxu0 0.0
      %834 = vmatpush.msra.mxu0 0.0
      %835 = vmatpush.msra.mxu0 0.0
      %836 = vmatpush.msra.mxu0 0.0
      %837 = vmatpush.msra.mxu0 0.0
      %838 = vmatpush.msra.mxu0 0.0
      %839 = vmatpush.msra.mxu0 0.0
      %840 = vmatpush.msra.mxu0 0.0
      %841 = vmatpush.msra.mxu0 0.0
      %842 = vmatpush.msra.mxu0 0.0
      %843 = vmatpush.msra.mxu0 0.0
      %844 = vmatpush.msra.mxu0 0.0
      %845 = vmatpush.msra.mxu0 0.0
      %846 = vmatpush.msra.mxu0 %v830
      %847 = vmatpush.msra.mxu0 %v731
      %848 = vmatmul.f32.gmra.mxu0 %v734
      %v849 = vpop.f32.mrf.mxu0
      %v850 = vadd.f32 0.0, %v849
      %851 = vmatmul.f32.gmra.mxu0 %v737
      %v852 = vpop.f32.mrf.mxu0
      %v853 = vadd.f32 0.0, %v852
      %854 = vmatmul.f32.gmra.mxu0 %v740
      %v855 = vpop.f32.mrf.mxu0
      %v856 = vadd.f32 0.0, %v855
      %857 = vmatmul.f32.gmra.mxu0 %v743
      %v858 = vpop.f32.mrf.mxu0
      %v859 = vadd.f32 0.0, %v858
      %860 = vmatmul.f32.gmra.mxu0 %v746
      %v861 = vpop.f32.mrf.mxu0
      %v862 = vadd.f32 0.0, %v861
      %863 = vmatmul.f32.gmra.mxu0 %v749
      %v864 = vpop.f32.mrf.mxu0
      %v865 = vadd.f32 0.0, %v864
      %866 = vmatmul.f32.gmra.mxu0 %v752
      %v867 = vpop.f32.mrf.mxu0
      %v868 = vadd.f32 0.0, %v867
      %869 = vmatmul.f32.gmra.mxu0 %v755
      %v870 = vpop.f32.mrf.mxu0
      %v871 = vadd.f32 0.0, %v870
      %872 = vmatmul.f32.gmra.mxu0 %v758
      %v873 = vpop.f32.mrf.mxu0
      %v874 = vadd.f32 0.0, %v873
      %875 = vmatmul.f32.gmra.mxu0 %v761
      %v876 = vpop.f32.mrf.mxu0
      %v877 = vadd.f32 0.0, %v876
      %878 = vmatmul.f32.gmra.mxu0 %v764
      %v879 = vpop.f32.mrf.mxu0
      %v880 = vadd.f32 0.0, %v879
      %881 = vmatmul.f32.gmra.mxu0 %v767
      %v882 = vpop.f32.mrf.mxu0
      %v883 = vadd.f32 0.0, %v882
      %884 = vmatmul.f32.gmra.mxu0 %v770
      %v885 = vpop.f32.mrf.mxu0
      %v886 = vadd.f32 0.0, %v885
      %887 = vmatmul.f32.gmra.mxu0 %v773
      %v888 = vpop.f32.mrf.mxu0
      %v889 = vadd.f32 0.0, %v888
      %890 = vmatmul.f32.gmra.mxu0 %v776
      %v891 = vpop.f32.mrf.mxu0
      %v892 = vadd.f32 0.0, %v891
      %893 = vmatmul.f32.gmra.mxu0 %v779
      %v894 = vpop.f32.mrf.mxu0
      %v895 = vadd.f32 0.0, %v894
      %896 = vmatmul.f32.gmra.mxu0 %v782
      %v897 = vpop.f32.mrf.mxu0
      %v898 = vadd.f32 0.0, %v897
      %899 = vmatmul.f32.gmra.mxu0 %v785
      %v900 = vpop.f32.mrf.mxu0
      %v901 = vadd.f32 0.0, %v900
      %902 = vmatmul.f32.gmra.mxu0 %v788
      %v903 = vpop.f32.mrf.mxu0
      %v904 = vadd.f32 0.0, %v903
      %905 = vmatmul.f32.gmra.mxu0 %v791
      %v906 = vpop.f32.mrf.mxu0
      %v907 = vadd.f32 0.0, %v906
      %908 = vmatmul.f32.gmra.mxu0 %v794
      %v909 = vpop.f32.mrf.mxu0
      %v910 = vadd.f32 0.0, %v909
      %911 = vmatmul.f32.gmra.mxu0 %v797
      %v912 = vpop.f32.mrf.mxu0
      %v913 = vadd.f32 0.0, %v912
      %914 = vmatmul.f32.gmra.mxu0 %v800
      %v915 = vpop.f32.mrf.mxu0
      %v916 = vadd.f32 0.0, %v915
      %917 = vmatmul.f32.gmra.mxu0 %v803
      %v918 = vpop.f32.mrf.mxu0
      %v919 = vadd.f32 0.0, %v918
      %920 = vmatmul.f32.gmra.mxu0 %v806
      %v921 = vpop.f32.mrf.mxu0
      %v922 = vadd.f32 0.0, %v921
      %923 = vmatmul.f32.gmra.mxu0 %v809
      %v924 = vpop.f32.mrf.mxu0
      %v925 = vadd.f32 0.0, %v924
      %926 = vmatmul.f32.gmra.mxu0 %v812
      %v927 = vpop.f32.mrf.mxu0
      %v928 = vadd.f32 0.0, %v927
      %929 = vmatmul.f32.gmra.mxu0 %v815
      %v930 = vpop.f32.mrf.mxu0
      %v931 = vadd.f32 0.0, %v930
      %932 = vmatmul.f32.gmra.mxu0 %v818
      %v933 = vpop.f32.mrf.mxu0
      %v934 = vadd.f32 0.0, %v933
      %935 = vmatmul.f32.gmra.mxu0 %v821
      %v936 = vpop.f32.mrf.mxu0
      %v937 = vadd.f32 0.0, %v936
      %938 = vmatmul.f32.gmra.mxu0 %v824
      %v939 = vpop.f32.mrf.mxu0
      %v940 = vadd.f32 0.0, %v939
      %941 = vmatmul.f32.gmra.mxu0 %v827
      %v942 = vpop.f32.mrf.mxu0
      %v943 = vadd.f32 0.0, %v942
      %944 = vdwg.mxu0
      %v945 = vadd.f32 %v600, %v850
      %v946 = vadd.f32 %v603, %v853
      %v947 = vadd.f32 %v606, %v856
      %v948 = vadd.f32 %v609, %v859
      %v949 = vadd.f32 %v612, %v862
      %v950 = vadd.f32 %v615, %v865
      %v951 = vadd.f32 %v618, %v868
      %v952 = vadd.f32 %v621, %v871
      %v953 = vadd.f32 %v624, %v874
      %v954 = vadd.f32 %v627, %v877
      %v955 = vadd.f32 %v630, %v880
      %v956 = vadd.f32 %v633, %v883
      %v957 = vadd.f32 %v636, %v886
      %v958 = vadd.f32 %v639, %v889
      %v959 = vadd.f32 %v642, %v892
      %v960 = vadd.f32 %v645, %v895
      %v961 = vadd.f32 %v648, %v898
      %v962 = vadd.f32 %v651, %v901
      %v963 = vadd.f32 %v654, %v904
      %v964 = vadd.f32 %v657, %v907
      %v965 = vadd.f32 %v660, %v910
      %v966 = vadd.f32 %v663, %v913
      %v967 = vadd.f32 %v666, %v916
      %v968 = vadd.f32 %v669, %v919
      %v969 = vadd.f32 %v672, %v922
      %v970 = vadd.f32 %v675, %v925
      %v971 = vadd.f32 %v678, %v928
      %v972 = vadd.f32 %v681, %v931
      %v973 = vadd.f32 %v684, %v934
      %v974 = vadd.f32 %v687, %v937
      %v975 = vadd.f32 %v690, %v940
      %v976 = vadd.f32 %v693, %v943
      %v977 = vld [vmem:[%s2] sm:$0x1]
      %v979 = vperm.slane %v977, 0
      %v981 = vadd.f32 %v945, %v979
      %v982 = vadd.f32 %v946, %v979
      %v983 = vadd.f32 %v947, %v979
      %v984 = vadd.f32 %v948, %v979
      %v985 = vadd.f32 %v949, %v979
      %v986 = vadd.f32 %v950, %v979
      %v987 = vadd.f32 %v951, %v979
      %v988 = vadd.f32 %v952, %v979
      %v989 = vadd.f32 %v953, %v979
      %v990 = vadd.f32 %v954, %v979
      %v991 = vadd.f32 %v955, %v979
      %v992 = vadd.f32 %v956, %v979
      %v993 = vadd.f32 %v957, %v979
      %v994 = vadd.f32 %v958, %v979
      %v995 = vadd.f32 %v959, %v979
      %v996 = vadd.f32 %v960, %v979
      %v997 = vadd.f32 %v961, %v979
      %v998 = vadd.f32 %v962, %v979
      %v999 = vadd.f32 %v963, %v979
      %v1000 = vadd.f32 %v964, %v979
      %v1001 = vadd.f32 %v965, %v979
      %v1002 = vadd.f32 %v966, %v979
      %v1003 = vadd.f32 %v967, %v979
      %v1004 = vadd.f32 %v968, %v979
      %v1005 = vadd.f32 %v969, %v979
      %v1006 = vadd.f32 %v970, %v979
      %v1007 = vadd.f32 %v971, %v979
      %v1008 = vadd.f32 %v972, %v979
      %v1009 = vadd.f32 %v973, %v979
      %v1010 = vadd.f32 %v974, %v979
      %v1011 = vadd.f32 %v975, %v979
      %v1012 = vadd.f32 %v976, %v979
      %v1013 = vmax.f32 %v981, 0.0
      %v1014 = vmax.f32 %v982, 0.0
      %v1015 = vmax.f32 %v983, 0.0
      %v1016 = vmax.f32 %v984, 0.0
      %v1017 = vmax.f32 %v985, 0.0
      %v1018 = vmax.f32 %v986, 0.0
      %v1019 = vmax.f32 %v987, 0.0
      %v1020 = vmax.f32 %v988, 0.0
      %v1021 = vmax.f32 %v989, 0.0
      %v1022 = vmax.f32 %v990, 0.0
      %v1023 = vmax.f32 %v991, 0.0
      %v1024 = vmax.f32 %v992, 0.0
      %v1025 = vmax.f32 %v993, 0.0
      %v1026 = vmax.f32 %v994, 0.0
      %v1027 = vmax.f32 %v995, 0.0
      %v1028 = vmax.f32 %v996, 0.0
      %v1029 = vmax.f32 %v997, 0.0
      %v1030 = vmax.f32 %v998, 0.0
      %v1031 = vmax.f32 %v999, 0.0
      %v1032 = vmax.f32 %v1000, 0.0
      %v1033 = vmax.f32 %v1001, 0.0
      %v1034 = vmax.f32 %v1002, 0.0
      %v1035 = vmax.f32 %v1003, 0.0
      %v1036 = vmax.f32 %v1004, 0.0
      %v1037 = vmax.f32 %v1005, 0.0
      %v1038 = vmax.f32 %v1006, 0.0
      %v1039 = vmax.f32 %v1007, 0.0
      %v1040 = vmax.f32 %v1008, 0.0
      %v1041 = vmax.f32 %v1009, 0.0
      %v1042 = vmax.f32 %v1010, 0.0
      %v1043 = vmax.f32 %v1011, 0.0
      %v1044 = vmax.f32 %v1012, 0.0
      %vm1045 = vcmask 64512
      %1046 = vst.msk [vmem:[%s192] sm:$0xff] %vm1045, %v1013
      %1047 = vst.msk [vmem:[%s192 + $0x8] sm:$0xff] %vm1045, %v1014
      %1048 = vst.msk [vmem:[%s192 + $0x10] sm:$0xff] %vm1045, %v1015
      %1049 = vst.msk [vmem:[%s192 + $0x18] sm:$0xff] %vm1045, %v1016
      %1050 = vst.msk [vmem:[%s192 + $0x20] sm:$0xff] %vm1045, %v1017
      %1051 = vst.msk [vmem:[%s192 + $0x28] sm:$0xff] %vm1045, %v1018
      %1052 = vst.msk [vmem:[%s192 + $0x30] sm:$0xff] %vm1045, %v1019
      %1053 = vst.msk [vmem:[%s192 + $0x38] sm:$0xff] %vm1045, %v1020
      %1054 = vst.msk [vmem:[%s192 + $0x40] sm:$0xff] %vm1045, %v1021
      %1055 = vst.msk [vmem:[%s192 + $0x48] sm:$0xff] %vm1045, %v1022
      %1056 = vst.msk [vmem:[%s192 + $0x50] sm:$0xff] %vm1045, %v1023
      %1057 = vst.msk [vmem:[%s192 + $0x58] sm:$0xff] %vm1045, %v1024
      %1058 = vst.msk [vmem:[%s192 + $0x60] sm:$0xff] %vm1045, %v1025
      %1059 = vst.msk [vmem:[%s192 + $0x68] sm:$0xff] %vm1045, %v1026
      %1060 = vst.msk [vmem:[%s192 + $0x70] sm:$0xff] %vm1045, %v1027
      %1061 = vst.msk [vmem:[%s192 + $0x78] sm:$0xff] %vm1045, %v1028
      %1062 = vst.msk [vmem:[%s192 + $0x80] sm:$0xff] %vm1045, %v1029
      %1063 = vst.msk [vmem:[%s192 + $0x88] sm:$0xff] %vm1045, %v1030
      %1064 = vst.msk [vmem:[%s192 + $0x90] sm:$0xff] %vm1045, %v1031
      %1065 = vst.msk [vmem:[%s192 + $0x98] sm:$0xff] %vm1045, %v1032
      %1066 = vst.msk [vmem:[%s192 + $0xa0] sm:$0xff] %vm1045, %v1033
      %1067 = vst.msk [vmem:[%s192 + $0xa8] sm:$0xff] %vm1045, %v1034
      %1068 = vst.msk [vmem:[%s192 + $0xb0] sm:$0xff] %vm1045, %v1035
      %1069 = vst.msk [vmem:[%s192 + $0xb8] sm:$0xff] %vm1045, %v1036
      %1070 = vst.msk [vmem:[%s192 + $0xc0] sm:$0xff] %vm1045, %v1037
      %1071 = vst.msk [vmem:[%s192 + $0xc8] sm:$0xff] %vm1045, %v1038
      %1072 = vst.msk [vmem:[%s192 + $0xd0] sm:$0xff] %vm1045, %v1039
      %1073 = vst.msk [vmem:[%s192 + $0xd8] sm:$0xff] %vm1045, %v1040
      %1074 = vst.msk [vmem:[%s192 + $0xe0] sm:$0xff] %vm1045, %v1041
      %1075 = vst.msk [vmem:[%s192 + $0xe8] sm:$0xff] %vm1045, %v1042
      %1076 = vst.msk [vmem:[%s192 + $0xf0] sm:$0xff] %vm1045, %v1043
      %1077 = vst.msk [vmem:[%s192 + $0xf8] sm:$0xff] %vm1045, %v1044
      %s1078 = smul.u32 32, %s19
      %p1079 = scmp.lt.s32.totalorder %s18, 1
      %s1080 = scalar_select %p1079, %s18, 1
      %p1081 = scmp.lt.s32.totalorder %s1078, 31
      %s1082 = scalar_select %p1081, %s1078, 31
      %s1083 = smul.addr %s1080, 32
      %s1084 = sadd.s32 %s1082, %s1083
      %s1085 = smul.addr %s1084, 8
      %s1086 = scalar_lea.vmem %s3, %s1085
      // Predicated region
      $region33: #{inception_a_forward.5} parent=31 // pred_check
        %p1087 = pneg %p114
      $region34: #{inception_a_forward.5} parent=31 // pred_check_branch
        %1089 = sbr.rel (%p1087) target = $region36
      $region35: #{inception_a_forward.5} parent=31 // pred_region
        %s1090 = smul.u32 32, %s19
      $region36: #{inception_a_forward.5} parent=31 // pred_fallthru
        _
    $region32: #{inception_a_forward.5} parent=5 // pred_fallthru
      _
    %p1091 = scmp.le.s32.totalorder 2, %s9
    // Predicated region
    $region37: #{inception_a_forward.5} parent=5 // pred_check
      %p1092 = pneg %p1091
    $region38: #{inception_a_forward.5} parent=5 // pred_check_branch
      %1094 = sbr.rel (%p1092) target = $region40
    $region39: #{inception_a_forward.5} parent=5 // pred_region
      %s1095 = ssub.s32 %s9, 2
      // Predicated region
      $region41: #{inception_a_forward.5} parent=39 // pred_check
        %p1096 = pneg %p120
      $region42: #{inception_a_forward.5} parent=39 // pred_check_branch
        %1098 = sbr.rel (%p1096) target = $region44
      $region43: #{inception_a_forward.5} parent=39 // pred_region
        %s1099 = smul.u32 32, %s21
        %p1100 = scmp.lt.s32.totalorder %s20, 1
        %s1101 = scalar_select %p1100, %s20, 1
        %p1102 = scmp.lt.s32.totalorder %s1099, 31
        %s1103 = scalar_select %p1102, %s1099, 31
        %s1104 = smul.addr %s1101, 32
        %s1105 = sadd.s32 %s1103, %s1104
        %s1106 = smul.addr %s1105, 8
        %s1107 = scalar_lea.vmem %s3, %s1106
      $region44: #{inception_a_forward.5} parent=39 // pred_fallthru
        _
    $region40: #{inception_a_forward.5} parent=5 // pred_fallthru
      _
  $region6: #{inception_a_forward.5} parent=0 // loop_footer
    %s13 = sadd.s32 1, %s9
  $region7: #{inception_a_forward.5} parent=0 // loop_footer_branch
    %8 = sbr.rel target = $region3
  $region8: #{inception_a_forward.5} parent=0 // loop_exit
    _

// kernel: inception_a_forward.6
$region0: #{inception_a_forward.6}
  #allocation0 [shape = 'u32[]', space=smem, size = 0x4, offset = 0x4, fixed_abs, tag = 'smem constant byte address 0x4 - core index']
  #allocation1 [shape = 'u32[72,128]{1,0:T(1,128)}', space=vmem, size = 0x9000, scoped, tag = 'internal scratch']
  %s0 = inlined_call_operand.vmem [shape: f32[2,288,24], index: 0, kind: input, shape index: {}]
  %s1 = inlined_call_operand.vmem [shape: f32[3,24,8], index: 1, kind: input, shape index: {}]
  %s2 = inlined_call_operand.vmem [shape: f32[1,8], index: 2, kind: input, shape index: {}]
  %s3 = inlined_call_operand.vmem [shape: f32[2,256,8], index: 3, kind: output, shape index: {}]
  %s4 = sld [smem:[#allocation0]]
  $region45: #{inception_a_forward.6} parent=0
    _
  %s6 = ssub.s32 1, %s4
  %s7 = scalar_select 0, %s6, %s4
  loop: start=0, step=1, limit=4
  $region2: #{inception_a_forward.6} parent=0 // loop_pre_header
    _
  $region3: #{inception_a_forward.6} parent=0 // loop_header
    %s9 = sphi 0, %s13
    %p10 = scmp.ge.s32.totalorder %s9, 4
    %s16 = sphi 0, %s28
    %s17 = sphi 0, %s24
    %s18 = sphi 0, %s16
    %s19 = sphi 0, %s17
    %s20 = sphi 0, %s18
    %s21 = sphi 0, %s19
    %s31 = sphi 0, %s33
    %s34 = sphi 0, %s31
    %s35 = sphi 0, %s34
    %s51 = sphi 0, %s35
    %s55 = sphi 0, %s55
    %s57 = sphi 0, %s55
    %s58 = sphi 0, %s57
    %s72 = sphi 0, %s58
    %s76 = sphi 0, %s76
    %s78 = sphi 0, %s76
    %s79 = sphi 0, %s78
    %s93 = sphi 0, %s79
    %s101 = sphi 0, %s103
    %s104 = sphi 0, %s101
    %s105 = sphi 0, %s104
    %s121 = sphi 0, %s105
  $region4: #{inception_a_forward.6} parent=0 // loop_header_branch
    %12 = sbr.rel (%p10) target = $region8
  $region5: #{inception_a_forward.6} parent=0 // loop_body
    %s14 = ssub.s32 %s9, 1
    %s15 = ssub.s32 %s9, 2
    %s22 = sadd.s32 1, %s17
    %p23 = scmp.ge.s32.totalorder %s22, 1
    %s24 = scalar_select %p23, 0, %s22
    %s25 = sadd.s32 1, %s16
    %s26 = scalar_select %p23, %s25, %s16
    %p27 = scmp.ge.s32.totalorder %s26, 2
    %s28 = scalar_select %p27, 0, %s26
    %s29 = ssub.s32 %s16, %s28
    %p30 = scmp.eq.s32.totalorder %s29, 0
    %s32 = sadd.s32 %s31, 1
    %s33 = scalar_select %p30, %s31, %s32
    %p36 = pneg %p30
    %p37 = scmp.eq.s32.totalorder %s9, 1
    %p38 = por %p36, %p37
    %p39 = scmp.ne.s32.totalorder %s31, %s34
    %p40 = scmp.eq.s32.totalorder %s9, 0
    %p41 = por %p39, %p40
    %p42 = scmp.ne.s32.totalorder %s31, %s34
    %p43 = scmp.eq.s32.totalorder %s14, 1
    %p44 = por %p42, %p43
    %p45 = scmp.ne.s32.totalorder %s34, %s35
    %p46 = scmp.eq.s32.totalorder %s14, 0
    %p47 = por %p45, %p46
    %p48 = scmp.ne.s32.totalorder %s34, %s35
    %p49 = scmp.eq.s32.totalorder %s15, 1
    %p50 = por %p48, %p49
    %p52 = scmp.ne.s32.totalorder %s35, %s51
    %p53 = scmp.eq.s32.totalorder %s15, 0
    %p54 = por %p52, %p53
    %s56 = sadd.s32 %s55, 1
    %p59 = scmp.eq.s32.totalorder %s9, 1
    %p60 = scmp.ne.s32.totalorder %s55, %s57
    %p61 = scmp.eq.s32.totalorder %s9, 0
    %p62 = por %p60, %p61
    %p63 = scmp.ne.s32.totalorder %s55, %s57
    %p64 = scmp.eq.s32.totalorder %s14, 1
    %p65 = por %p63, %p64
    %p66 = scmp.ne.s32.totalorder %s57, %s58
    %p67 = scmp.eq.s32.totalorder %s14, 0
    %p68 = por %p66, %p67
    %p69 = scmp.ne.s32.totalorder %s57, %s58
    %p70 = scmp.eq.s32.totalorder %s15, 1
    %p71 = por %p69, %p70
    %p73 = scmp.ne.s32.totalorder %s58, %s72
    %p74 = scmp.eq.s32.totalorder %s15, 0
    %p75 = por %p73, %p74
    %s77 = sadd.s32 %s76, 1
    %p80 = scmp.eq.s32.totalorder %s9, 1
    %p81 = scmp.ne.s32.totalorder %s76, %s78
    %p82 = scmp.eq.s32.totalorder %s9, 0
    %p83 = por %p81, %p82
    %p84 = scmp.ne.s32.totalorder %s76, %s78
    %p85 = scmp.eq.s32.totalorder %s14, 1
    %p86 = por %p84, %p85
    %p87 = scmp.ne.s32.totalorder %s78, %s79
    %p88 = scmp.eq.s32.totalorder %s14, 0
    %p89 = por %p87, %p88
    %p90 = scmp.ne.s32.totalorder %s78, %s79
    %p91 = scmp.eq.s32.totalorder %s15, 1
    %p92 = por %p90, %p91
    %p94 = scmp.ne.s32.totalorder %s79, %s93
    %p95 = scmp.eq.s32.totalorder %s15, 0
    %p96 = por %p94, %p95
    %s97 = ssub.s32 %s16, %s28
    %s98 = ssub.s32 %s17, %s24
    %s99 = sor.u32 %s97, %s98
    %p100 = scmp.eq.s32.totalorder %s99, 0
    %s102 = sadd.s32 %s101, 1
    %s103 = scalar_select %p100, %s101, %s102
    %p106 = pneg %p100
    %p107 = scmp.eq.s32.totalorder %s9, 1
    %p108 = por %p106, %p107
    %p109 = scmp.ne.s32.totalorder %s101, %s104
    %p110 = scmp.eq.s32.totalorder %s9, 0
    %p111 = por %p109, %p110
    %p112 = scmp.ne.s32.totalorder %s101, %s104
    %p113 = scmp.eq.s32.totalorder %s14, 1
    %p114 = por %p112, %p113
    %p115 = scmp.ne.s32.totalorder %s104, %s105
    %p116 = scmp.eq.s32.totalorder %s14, 0
    %p117 = por %p115, %p116
    %p118 = scmp.ne.s32.totalorder %s104, %s105
    %p119 = scmp.eq.s32.totalorder %s15, 1
    %p120 = por %p118, %p119
    %p122 = scmp.ne.s32.totalorder %s105, %s121
    %p123 = scmp.eq.s32.totalorder %s15, 0
    %p124 = por %p122, %p123
    %p125 = scmp.le.s32.totalorder 1, %s9
    %p126 = scmp.lt.s32.totalorder %s9, 3
    %p127 = pnand %p125, %p126
    %p128 = pneg %p127
    // Predicated region
    $region9: #{inception_a_forward.6} parent=5 // pred_check
      _
    $region10: #{inception_a_forward.6} parent=5 // pred_check_branch
      %130 = sbr.rel (%p127) target = $region12
    $region11: #{inception_a_forward.6} parent=5 // pred_region
      %s131 = ssub.s32 %s9, 1
      // Predicated region
      $region13: #{inception_a_forward.6} parent=11 // pred_check
        %p132 = pneg %p68
      $region14: #{inception_a_forward.6} parent=11 // pred_check_branch
        %134 = sbr.rel (%p132) target = $region16
      $region15: #{inception_a_forward.6} parent=11 // pred_region
        _
      $region16: #{inception_a_forward.6} parent=11 // pred_fallthru
        _
      // Predicated region
      $region17: #{inception_a_forward.6} parent=11 // pred_check
        %p135 = pneg %p89
      $region18: #{inception_a_forward.6} parent=11 // pred_check_branch
        %137 = sbr.rel (%p135) target = $region20
      $region19: #{inception_a_forward.6} parent=11 // pred_region
        _
      $region20: #{inception_a_forward.6} parent=11 // pred_fallthru
        _
    $region12: #{inception_a_forward.6} parent=5 // pred_fallthru
      _
    %p138 = scmp.lt.s32.totalorder %s9, 2
    // Predicated region
    $region21: #{inception_a_forward.6} parent=5 // pred_check
      %p139 = pneg %p138
    $region22: #{inception_a_forward.6} parent=5 // pred_check_branch
      %141 = sbr.rel (%p139) target = $region24
    $region23: #{inception_a_forward.6} parent=5 // pred_region
      // Predicated region
      $region25: #{inception_a_forward.6} parent=23 // pred_check
        %p142 = pneg %p41
      $region26: #{inception_a_forward.6} parent=23 // pred_check_branch
        %144 = sbr.rel (%p142) target = $region28
      $region27: #{inception_a_forward.6} parent=23 // pred_region
        %p145 = scmp.lt.s32.totalorder %s16, 1
        %s146 = scalar_select %p145, %s16, 1
        %s147 = smul.addr %s146, 36
        %s148 = smul.addr %s147, 8
        %s149 = scalar_lea.vmem %s0, %s148
      $region28: #{inception_a_forward.6} parent=23 // pred_fallthru
        _
    $region24: #{inception_a_forward.6} parent=5 // pred_fallthru
      _
    %p150 = scmp.le.s32.totalorder 1, %s9
    %p151 = scmp.lt.s32.totalorder %s9, 3
    %p152 = pnand %p150, %p151
    %p153 = pneg %p152
    // Predicated region
    $region29: #{inception_a_forward.6} parent=5 // pred_check
      _
    $region30: #{inception_a_forward.6} parent=5 // pred_check_branch
      %155 = sbr.rel (%p152) target = $region32
    $region31: #{inception_a_forward.6} parent=5 // pred_region
      %s156 = ssub.s32 %s9, 1
      %p157 = scmp.lt.s32.totalorder %s18, 1
      %s158 = scalar_select %p157, %s18, 1
      %s159 = smul.addr %s158, 36
      %s160 = smul.addr %s159, 8
      %s161 = scalar_lea.vmem %s0, %s160
      %p162 = pneg %p47
      %p163 = pneg %p44
      %p164 = pneg %p68
      %p165 = pneg %p65
      %p166 = pneg %p89
      %p167 = pneg %p86
      %p168 = pneg %p117
      %p169 = pneg %p114
      %s170 = smul.u32 32, %s19
      %p171 = scmp.lt.s32.totalorder %s18, 1
      %s172 = scalar_select %p171, %s18, 1
      %p173 = scmp.lt.s32.totalorder %s170, 31
      %s174 = scalar_select %p173, %s170, 31
      %s175 = smul.addr %s172, 32
      %s176 = sadd.s32 %s174, %s175
      %s177 = smul.addr %s176, 8
      %s178 = scalar_lea.vmem %s3, %s177
      %p179 = scmp.lt.s32.totalorder %s18, 1
      %s180 = scalar_select %p179, %s18, 1
      %s181 = smul.addr %s180, 36
      %s182 = smul.addr %s181, 8
      %s183 = scalar_lea.vmem %s0, %s182
      %s184 = smul.u32 32, %s19
      %p185 = scmp.lt.s32.totalorder %s18, 1
      %s186 = scalar_select %p185, %s18, 1
      %p187 = scmp.lt.s32.totalorder %s184, 31
      %s188 = scalar_select %p187, %s184, 31
      %s189 = smul.addr %s186, 32
      %s190 = sadd.s32 %s188, %s189
      %s191 = smul.addr %s190, 8
      %s192 = scalar_lea.vmem %s3, %s191
      %s193 = smul.u32 32, %s19
      %s194 = smul.u32 %s19, 16
      %s195 = smul.u32 %s19, 256
      %s196 = scalar_lea.vmem %s183, %s195
      %v197 = vld [vmem:[%s196] sm:$0xff]
      %v198 = vld [vmem:[%s196 + $0x8] sm:$0xff]
      %v199 = vld [vmem:[%s196 + $0x10] sm:$0xff]
      %v200 = vld [vmem:[%s196 + $0x18] sm:$0xff]
      %v201 = vld [vmem:[%s196 + $0x20] sm:$0xff]
      %v202 = vld [vmem:[%s196 + $0x28] sm:$0xff]
      %v203 = vld [vmem:[%s196 + $0x30] sm:$0xff]
      %v204 = vld [vmem:[%s196 + $0x38] sm:$0xff]
      %v205 = vld [vmem:[%s196 + $0x40] sm:$0xff]
      %v206 = vld [vmem:[%s196 + $0x48] sm:$0xff]
      %v207 = vld [vmem:[%s196 + $0x50] sm:$0xff]
      %v208 = vld [vmem:[%s196 + $0x58] sm:$0xff]
      %v209 = vld [vmem:[%s196 + $0x60] sm:$0xff]
      %v210 = vld [vmem:[%s196 + $0x68] sm:$0xff]
      %v211 = vld [vmem:[%s196 + $0x70] sm:$0xff]
      %v212 = vld [vmem:[%s196 + $0x78] sm:$0xff]
      %v213 = vld [vmem:[%s196 + $0x80] sm:$0xff]
      %v214 = vld [vmem:[%s196 + $0x88] sm:$0xff]
      %v215 = vld [vmem:[%s196 + $0x90] sm:$0xff]
      %v216 = vld [vmem:[%s196 + $0x98] sm:$0xff]
      %v217 = vld [vmem:[%s196 + $0xa0] sm:$0xff]
      %v218 = vld [vmem:[%s196 + $0xa8] sm:$0xff]
      %v219 = vld [vmem:[%s196 + $0xb0] sm:$0xff]
      %v220 = vld [vmem:[%s196 + $0xb8] sm:$0xff]
      %v221 = vld [vmem:[%s196 + $0xc0] sm:$0xff]
      %v222 = vld [vmem:[%s196 + $0xc8] sm:$0xff]
      %v223 = vld [vmem:[%s196 + $0xd0] sm:$0xff]
      %v224 = vld [vmem:[%s196 + $0xd8] sm:$0xff]
      %v225 = vld [vmem:[%s196 + $0xe0] sm:$0xff]
      %v226 = vld [vmem:[%s196 + $0xe8] sm:$0xff]
      %v227 = vld [vmem:[%s196 + $0xf0] sm:$0xff]
      %v228 = vld [vmem:[%s196 + $0xf8] sm:$0xff]
      %v229 = vld [vmem:[%s1] sm:$0xff]
      %v230 = vld [vmem:[%s1 + $0x8] sm:$0xff]
      %v231 = vld [vmem:[%s1 + $0x10] sm:$0xff]
      %s232 = sadd.s32 %s194, 1
      %s233 = smul.u32 %s232, 16
      %s234 = scalar_lea.vmem %s183, %s233
      %v235 = vld [vmem:[%s234] sm:$0xff]
      %v236 = vld [vmem:[%s234 + $0x8] sm:$0xff]
      %v237 = vld [vmem:[%s234 + $0x10] sm:$0xff]
      %v238 = vld [vmem:[%s234 + $0x18] sm:$0xff]
      %v239 = vld [vmem:[%s234 + $0x20] sm:$0xff]
      %v240 = vld [vmem:[%s234 + $0x28] sm:$0xff]
      %v241 = vld [vmem:[%s234 + $0x30] sm:$0xff]
      %v242 = vld [vmem:[%s234 + $0x38] sm:$0xff]
      %v243 = vld [vmem:[%s234 + $0x40] sm:$0xff]
      %v244 = vld [vmem:[%s234 + $0x48] sm:$0xff]
      %v245 = vld [vmem:[%s234 + $0x50] sm:$0xff]
      %v246 = vld [vmem:[%s234 + $0x58] sm:$0xff]
      %v247 = vld [vmem:[%s234 + $0x60] sm:$0xff]
      %v248 = vld [vmem:[%s234 + $0x68] sm:$0xff]
      %v249 = vld [vmem:[%s234 + $0x70] sm:$0xff]
      %v250 = vld [vmem:[%s234 + $0x78] sm:$0xff]
      %v251 = vld [vmem:[%s234 + $0x80] sm:$0xff]
      %v252 = vld [vmem:[%s234 + $0x88] sm:$0xff]
      %v253 = vld [vmem:[%s234 + $0x90] sm:$0xff]
      %v254 = vld [vmem:[%s234 + $0x98] sm:$0xff]
      %v255 = vld [vmem:[%s234 + $0xa0] sm:$0xff]
      %v256 = vld [vmem:[%s234 + $0xa8] sm:$0xff]
      %v257 = vld [vmem:[%s234 + $0xb0] sm:$0xff]
      %v258 = vld [vmem:[%s234 + $0xb8] sm:$0xff]
      %v259 = vld [vmem:[%s234 + $0xc0] sm:$0xff]
      %v260 = vld [vmem:[%s234 + $0xc8] sm:$0xff]
      %v261 = vld [vmem:[%s234 + $0xd0] sm:$0xff]
      %v262 = vld [vmem:[%s234 + $0xd8] sm:$0xff]
      %v263 = vld [vmem:[%s234 + $0xe0] sm:$0xff]
      %v264 = vld [vmem:[%s234 + $0xe8] sm:$0xff]
      %v265 = vld [vmem:[%s234 + $0xf0] sm:$0xff]
      %v266 = vld [vmem:[%s234 + $0xf8] sm:$0xff]
      %s267 = scalar_lea.vmem %s1, 24
      %v268 = vld [vmem:[%s267] sm:$0xff]
      %v269 = vld [vmem:[%s267 + $0x8] sm:$0xff]
      %v270 = vld [vmem:[%s267 + $0x10] sm:$0xff]
      %vm271 = vcmask 195584
      %v273 = vsel %vm271, %v235, 0
      %v276 = vsel %vm271, %v236, 0
      %v279 = vsel %vm271, %v237, 0
      %v282 = vsel %vm271, %v238, 0
      %v285 = vsel %vm271, %v239, 0
      %v288 = vsel %vm271, %v240, 0
      %v291 = vsel %vm271, %v241, 0
      %v294 = vsel %vm271, %v242, 0
      %v297 = vsel %vm271, %v243, 0
      %v300 = vsel %vm271, %v244, 0
      %v303 = vsel %vm271, %v245, 0
      %v306 = vsel %vm271, %v246, 0
      %v309 = vsel %vm271, %v247, 0
      %v312 = vsel %vm271, %v248, 0
      %v315 = vsel %vm271, %v249, 0
      %v318 = vsel %vm271, %v250, 0
      %v321 = vsel %vm271, %v251, 0
      %v324 = vsel %vm271, %v252, 0
      %v327 = vsel %vm271, %v253, 0
      %v330 = vsel %vm271, %v254, 0
      %v333 = vsel %vm271, %v255, 0
      %v336 = vsel %vm271, %v256, 0
      %v339 = vsel %vm271, %v257, 0
      %v342 = vsel %vm271, %v258, 0
      %v345 = vsel %vm271, %v259, 0
      %v348 = vsel %vm271, %v260, 0
      %v351 = vsel %vm271, %v261, 0
      %v354 = vsel %vm271, %v262, 0
      %v357 = vsel %vm271, %v263, 0
      %v360 = vsel %vm271, %v264, 0
      %v363 = vsel %vm271, %v265, 0
      %v366 = vsel %vm271, %v266, 0
      %368 = vmatpush.msra.mxu0 0.0
      %369 = vmatpush.msra.mxu0 0.0
      %370 = vmatpush.msra.mxu0 0.0
      %371 = vmatpush.msra.mxu0 0.0
      %372 = vmatpush.msra.mxu0 0.0
      %373 = vmatpush.msra.mxu0 0.0
      %374 = vmatpush.msra.mxu0 0.0
      %375 = vmatpush.msra.mxu0 0.0
      %376 = vmatpush.msra.mxu0 0.0
      %377 = vmatpush.msra.mxu0 0.0
      %378 = vmatpush.msra.mxu0 0.0
      %379 = vmatpush.msra.mxu0 0.0
      %380 = vmatpush.msra.mxu0 0.0
      %381 = vmatpush.msra.mxu0 %v270
      %382 = vmatpush.msra.mxu0 %v269
      %383 = vmatpush.msra.mxu0 %v268
      %384 = vmatmul.f32.gmra.mxu0 %v273
      %v385 = vpop.f32.mrf.mxu0
      %v386 = vadd.f32 0.0, %v385
      %387 = vmatmul.f32.gmra.mxu0 %v276
      %v388 = vpop.f32.mrf.mxu0
      %v389 = vadd.f32 0.0, %v388
      %390 = vmatmul.f32.gmra.mxu0 %v279
      %v391 = vpop.f32.mrf.mxu0
      %v392 = vadd.f32 0.0, %v391
      %393 = vmatmul.f32.gmra.mxu0 %v282
      %v394 = vpop.f32.mrf.mxu0
      %v395 = vadd.f32 0.0, %v394
      %396 = vmatmul.f32.gmra.mxu0 %v285
      %v397 = vpop.f32.mrf.mxu0
      %v398 = vadd.f32 0.0, %v397
      %399 = vmatmul.f32.gmra.mxu0 %v288
      %v400 = vpop.f32.mrf.mxu0
      %v401 = vadd.f32 0.0, %v400
      %402 = vmatmul.f32.gmra.mxu0 %v291
      %v403 = vpop.f32.mrf.mxu0
      %v404 = vadd.f32 0.0, %v403
      %405 = vmatmul.f32.gmra.mxu0 %v294
      %v406 = vpop.f32.mrf.mxu0
      %v407 = vadd.f32 0.0, %v406
      %408 = vmatmul.f32.gmra.mxu0 %v297
      %v409 = vpop.f32.mrf.mxu0
      %v410 = vadd.f32 0.0, %v409
      %411 = vmatmul.f32.gmra.mxu0 %v300
      %v412 = vpop.f32.mrf.mxu0
      %v413 = vadd.f32 0.0, %v412
      %414 = vmatmul.f32.gmra.mxu0 %v303
      %v415 = vpop.f32.mrf.mxu0
      %v416 = vadd.f32 0.0, %v415
      %417 = vmatmul.f32.gmra.mxu0 %v306
      %v418 = vpop.f32.mrf.mxu0
      %v419 = vadd.f32 0.0, %v418
      %420 = vmatmul.f32.gmra.mxu0 %v309
      %v421 = vpop.f32.mrf.mxu0
      %v422 = vadd.f32 0.0, %v421
      %423 = vmatmul.f32.gmra.mxu0 %v312
      %v424 = vpop.f32.mrf.mxu0
      %v425 = vadd.f32 0.0, %v424
      %426 = vmatmul.f32.gmra.mxu0 %v315
      %v427 = vpop.f32.mrf.mxu0
      %v428 = vadd.f32 0.0, %v427
      %429 = vmatmul.f32.gmra.mxu0 %v318
      %v430 = vpop.f32.mrf.mxu0
      %v431 = vadd.f32 0.0, %v430
      %432 = vmatmul.f32.gmra.mxu0 %v321
      %v433 = vpop.f32.mrf.mxu0
      %v434 = vadd.f32 0.0, %v433
      %435 = vmatmul.f32.gmra.mxu0 %v324
      %v436 = vpop.f32.mrf.mxu0
      %v437 = vadd.f32 0.0, %v436
      %438 = vmatmul.f32.gmra.mxu0 %v327
      %v439 = vpop.f32.mrf.mxu0
      %v440 = vadd.f32 0.0, %v439
      %441 = vmatmul.f32.gmra.mxu0 %v330
      %v442 = vpop.f32.mrf.mxu0
      %v443 = vadd.f32 0.0, %v442
      %444 = vmatmul.f32.gmra.mxu0 %v333
      %v445 = vpop.f32.mrf.mxu0
      %v446 = vadd.f32 0.0, %v445
      %447 = vmatmul.f32.gmra.mxu0 %v336
      %v448 = vpop.f32.mrf.mxu0
      %v449 = vadd.f32 0.0, %v448
      %450 = vmatmul.f32.gmra.mxu0 %v339
      %v451 = vpop.f32.mrf.mxu0
      %v452 = vadd.f32 0.0, %v451
      %453 = vmatmul.f32.gmra.mxu0 %v342
      %v454 = vpop.f32.mrf.mxu0
      %v455 = vadd.f32 0.0, %v454
      %456 = vmatmul.f32.gmra.mxu0 %v345
      %v457 = vpop.f32.mrf.mxu0
      %v458 = vadd.f32 0.0, %v457
      %459 = vmatmul.f32.gmra.mxu0 %v348
      %v460 = vpop.f32.mrf.mxu0
      %v461 = vadd.f32 0.0, %v460
      %462 = vmatmul.f32.gmra.mxu0 %v351
      %v463 = vpop.f32.mrf.mxu0
      %v464 = vadd.f32 0.0, %v463
      %465 = vmatmul.f32.gmra.mxu0 %v354
      %v466 = vpop.f32.mrf.mxu0
      %v467 = vadd.f32 0.0, %v466
      %468 = vmatmul.f32.gmra.mxu0 %v357
      %v469 = vpop.f32.mrf.mxu0
      %v470 = vadd.f32 0.0, %v469
      %471 = vmatmul.f32.gmra.mxu0 %v360
      %v472 = vpop.f32.mrf.mxu0
      %v473 = vadd.f32 0.0, %v472
      %474 = vmatmul.f32.gmra.mxu0 %v363
      %v475 = vpop.f32.mrf.mxu0
      %v476 = vadd.f32 0.0, %v475
      %477 = vmatmul.f32.gmra.mxu0 %v366
      %v478 = vpop.f32.mrf.mxu0
      %v479 = vadd.f32 0.0, %v478
      %480 = vdwg.mxu0
      %v482 = vsel %vm271, %v197, 0
      %v485 = vsel %vm271, %v198, 0
      %v488 = vsel %vm271, %v199, 0
      %v491 = vsel %vm271, %v200, 0
      %v494 = vsel %vm271, %v201, 0
      %v497 = vsel %vm271, %v202, 0
      %v500 = vsel %vm271, %v203, 0
      %v503 = vsel %vm271, %v204, 0
      %v506 = vsel %vm271, %v205, 0
      %v509 = vsel %vm271, %v206, 0
      %v512 = vsel %vm271, %v207, 0
      %v515 = vsel %vm271, %v208, 0
      %v518 = vsel %vm271, %v209, 0
      %v521 = vsel %vm271, %v210, 0
      %v524 = vsel %vm271, %v211, 0
      %v527 = vsel %vm271, %v212, 0
      %v530 = vsel %vm271, %v213, 0
      %v533 = vsel %vm271, %v214, 0
      %v536 = vsel %vm271, %v215, 0
      %v539 = vsel %vm271, %v216, 0
      %v542 = vsel %vm271, %v217, 0
      %v545 = vsel %vm271, %v218, 0
      %v548 = vsel %vm271, %v219, 0
      %v551 = vsel %vm271, %v220, 0
      %v554 = vsel %vm271, %v221, 0
      %v557 = vsel %vm271, %v222, 0
      %v560 = vsel %vm271, %v223, 0
      %v563 = vsel %vm271, %v224, 0
      %v566 = vsel %vm271, %v225, 0
      %v569 = vsel %vm271, %v226, 0
      %v572 = vsel %vm271, %v227, 0
      %v575 = vsel %vm271, %v228, 0
      %577 = vmatpush.msra.mxu0 0.0
      %578 = vmatpush.msra.mxu0 0.0
      %579 = vmatpush.msra.mxu0 0.0
      %580 = vmatpush.msra.mxu0 0.0
      %581 = vmatpush.msra.mxu0 0.0
      %582 = vmatpush.msra.mxu0 0.0
      %583 = vmatpush.msra.mxu0 0.0
      %584 = vmatpush.msra.mxu0 0.0
      %585 = vmatpush.msra.mxu0 0.0
      %586 = vmatpush.msra.mxu0 0.0
      %587 = vmatpush.msra.mxu0 0.0
      %588 = vmatpush.msra.mxu0 0.0
      %589 = vmatpush.msra.mxu0 0.0
      %590 = vmatpush.msra.mxu0 %v231
      %591 = vmatpush.msra.mxu0 %v230
      %592 = vmatpush.msra.mxu0 %v229
      %593 = vmatmul.f32.gmra.mxu0 %v482
      %v594 = vpop.f32.mrf.mxu0
      %v595 = vadd.f32 %v386, %v594
      %596 = vmatmul.f32.gmra.mxu0 %v485
      %v597 = vpop.f32.mrf.mxu0
      %v598 = vadd.f32 %v389, %v597
      %599 = vmatmul.f32.gmra.mxu0 %v488
      %v600 = vpop.f32.mrf.mxu0
      %v601 = vadd.f32 %v392, %v600
      %602 = vmatmul.f32.gmra.mxu0 %v491
      %v603 = vpop.f32.mrf.mxu0
      %v604 = vadd.f32 %v395, %v603
      %605 = vmatmul.f32.gmra.mxu0 %v494
      %v606 = vpop.f32.mrf.mxu0
      %v607 = vadd.f32 %v398, %v606
      %608 = vmatmul.f32.gmra.mxu0 %v497
      %v609 = vpop.f32.mrf.mxu0
      %v610 = vadd.f32 %v401, %v609
      %611 = vmatmul.f32.gmra.mxu0 %v500
      %v612 = vpop.f32.mrf.mxu0
      %v613 = vadd.f32 %v404, %v612
      %614 = vmatmul.f32.gmra.mxu0 %v503
      %v615 = vpop.f32.mrf.mxu0
      %v616 = vadd.f32 %v407, %v615
      %617 = vmatmul.f32.gmra.mxu0 %v506
      %v618 = vpop.f32.mrf.mxu0
      %v619 = vadd.f32 %v410, %v618
      %620 = vmatmul.f32.gmra.mxu0 %v509
      %v621 = vpop.f32.mrf.mxu0
      %v622 = vadd.f32 %v413, %v621
      %623 = vmatmul.f32.gmra.mxu0 %v512
      %v624 = vpop.f32.mrf.mxu0
      %v625 = vadd.f32 %v416, %v624
      %626 = vmatmul.f32.gmra.mxu0 %v515
      %v627 = vpop.f32.mrf.mxu0
      %v628 = vadd.f32 %v419, %v627
      %629 = vmatmul.f32.gmra.mxu0 %v518
      %v630 = vpop.f32.mrf.mxu0
      %v631 = vadd.f32 %v422, %v630
      %632 = vmatmul.f32.gmra.mxu0 %v521
      %v633 = vpop.f32.mrf.mxu0
      %v634 = vadd.f32 %v425, %v633
      %635 = vmatmul.f32.gmra.mxu0 %v524
      %v636 = vpop.f32.mrf.mxu0
      %v637 = vadd.f32 %v428, %v636
      %638 = vmatmul.f32.gmra.mxu0 %v527
      %v639 = vpop.f32.mrf.mxu0
      %v640 = vadd.f32 %v431, %v639
      %641 = vmatmul.f32.gmra.mxu0 %v530
      %v642 = vpop.f32.mrf.mxu0
      %v643 = vadd.f32 %v434, %v642
      %644 = vmatmul.f32.gmra.mxu0 %v533
      %v645 = vpop.f32.mrf.mxu0
      %v646 = vadd.f32 %v437, %v645
      %647 = vmatmul.f32.gmra.mxu0 %v536
      %v648 = vpop.f32.mrf.mxu0
      %v649 = vadd.f32 %v440, %v648
      %650 = vmatmul.f32.gmra.mxu0 %v539
      %v651 = vpop.f32.mrf.mxu0
      %v652 = vadd.f32 %v443, %v651
      %653 = vmatmul.f32.gmra.mxu0 %v542
      %v654 = vpop.f32.mrf.mxu0
      %v655 = vadd.f32 %v446, %v654
      %656 = vmatmul.f32.gmra.mxu0 %v545
      %v657 = vpop.f32.mrf.mxu0
      %v658 = vadd.f32 %v449, %v657
      %659 = vmatmul.f32.gmra.mxu0 %v548
      %v660 = vpop.f32.mrf.mxu0
      %v661 = vadd.f32 %v452, %v660
      %662 = vmatmul.f32.gmra.mxu0 %v551
      %v663 = vpop.f32.mrf.mxu0
      %v664 = vadd.f32 %v455, %v663
      %665 = vmatmul.f32.gmra.mxu0 %v554
      %v666 = vpop.f32.mrf.mxu0
      %v667 = vadd.f32 %v458, %v666
      %668 = vmatmul.f32.gmra.mxu0 %v557
      %v669 = vpop.f32.mrf.mxu0
      %v670 = vadd.f32 %v461, %v669
      %671 = vmatmul.f32.gmra.mxu0 %v560
      %v672 = vpop.f32.mrf.mxu0
      %v673 = vadd.f32 %v464, %v672
      %674 = vmatmul.f32.gmra.mxu0 %v563
      %v675 = vpop.f32.mrf.mxu0
      %v676 = vadd.f32 %v467, %v675
      %677 = vmatmul.f32.gmra.mxu0 %v566
      %v678 = vpop.f32.mrf.mxu0
      %v679 = vadd.f32 %v470, %v678
      %680 = vmatmul.f32.gmra.mxu0 %v569
      %v681 = vpop.f32.mrf.mxu0
      %v682 = vadd.f32 %v473, %v681
      %683 = vmatmul.f32.gmra.mxu0 %v572
      %v684 = vpop.f32.mrf.mxu0
      %v685 = vadd.f32 %v476, %v684
      %686 = vmatmul.f32.gmra.mxu0 %v575
      %v687 = vpop.f32.mrf.mxu0
      %v688 = vadd.f32 %v479, %v687
      %689 = vdwg.mxu0
      %s690 = sadd.s32 %s194, 2
      %s691 = smul.u32 %s690, 16
      %s692 = scalar_lea.vmem %s183, %s691
      %v693 = vld [vmem:[%s692] sm:$0xff]
      %v694 = vld [vmem:[%s692 + $0x8] sm:$0xff]
      %v695 = vld [vmem:[%s692 + $0x10] sm:$0xff]
      %v696 = vld [vmem:[%s692 + $0x18] sm:$0xff]
      %v697 = vld [vmem:[%s692 + $0x20] sm:$0xff]
      %v698 = vld [vmem:[%s692 + $0x28] sm:$0xff]
      %v699 = vld [vmem:[%s692 + $0x30] sm:$0xff]
      %v700 = vld [vmem:[%s692 + $0x38] sm:$0xff]
      %v701 = vld [vmem:[%s692 + $0x40] sm:$0xff]
      %v702 = vld [vmem:[%s692 + $0x48] sm:$0xff]
      %v703 = vld [vmem:[%s692 + $0x50] sm:$0xff]
      %v704 = vld [vmem:[%s692 + $0x58] sm:$0xff]
      %v705 = vld [vmem:[%s692 + $0x60] sm:$0xff]
      %v706 = vld [vmem:[%s692 + $0x68] sm:$0xff]
      %v707 = vld [vmem:[%s692 + $0x70] sm:$0xff]
      %v708 = vld [vmem:[%s692 + $0x78] sm:$0xff]
      %v709 = vld [vmem:[%s692 + $0x80] sm:$0xff]
      %v710 = vld [vmem:[%s692 + $0x88] sm:$0xff]
      %v711 = vld [vmem:[%s692 + $0x90] sm:$0xff]
      %v712 = vld [vmem:[%s692 + $0x98] sm:$0xff]
      %v713 = vld [vmem:[%s692 + $0xa0] sm:$0xff]
      %v714 = vld [vmem:[%s692 + $0xa8] sm:$0xff]
      %v715 = vld [vmem:[%s692 + $0xb0] sm:$0xff]
      %v716 = vld [vmem:[%s692 + $0xb8] sm:$0xff]
      %v717 = vld [vmem:[%s692 + $0xc0] sm:$0xff]
      %v718 = vld [vmem:[%s692 + $0xc8] sm:$0xff]
      %v719 = vld [vmem:[%s692 + $0xd0] sm:$0xff]
      %v720 = vld [vmem:[%s692 + $0xd8] sm:$0xff]
      %v721 = vld [vmem:[%s692 + $0xe0] sm:$0xff]
      %v722 = vld [vmem:[%s692 + $0xe8] sm:$0xff]
      %v723 = vld [vmem:[%s692 + $0xf0] sm:$0xff]
      %v724 = vld [vmem:[%s692 + $0xf8] sm:$0xff]
      %s725 = scalar_lea.vmem %s1, 48
      %v726 = vld [vmem:[%s725] sm:$0xff]
      %v727 = vld [vmem:[%s725 + $0x8] sm:$0xff]
      %v728 = vld [vmem:[%s725 + $0x10] sm:$0xff]
      %v730 = vsel %vm271, %v693, 0
      %v733 = vsel %vm271, %v694, 0
      %v736 = vsel %vm271, %v695, 0
      %v739 = vsel %vm271, %v696, 0
      %v742 = vsel %vm271, %v697, 0
      %v745 = vsel %vm271, %v698, 0
      %v748 = vsel %vm271, %v699, 0
      %v751 = vsel %vm271, %v700, 0
      %v754 = vsel %vm271, %v701, 0
      %v757 = vsel %vm271, %v702, 0
      %v760 = vsel %vm271, %v703, 0
      %v763 = vsel %vm271, %v704, 0
      %v766 = vsel %vm271, %v705, 0
      %v769 = vsel %vm271, %v706, 0
      %v772 = vsel %vm271, %v707, 0
      %v775 = vsel %vm271, %v708, 0
      %v778 = vsel %vm271, %v709, 0
      %v781 = vsel %vm271, %v710, 0
      %v784 = vsel %vm271, %v711, 0
      %v787 = vsel %vm271, %v712, 0
      %v790 = vsel %vm271, %v713, 0
      %v793 = vsel %vm271, %v714, 0
      %v796 = vsel %vm271, %v715, 0
      %v799 = vsel %vm271, %v716, 0
      %v802 = vsel %vm271, %v717, 0
      %v805 = vsel %vm271, %v718, 0
      %v808 = vsel %vm271, %v719, 0
      %v811 = vsel %vm271, %v720, 0
      %v814 = vsel %vm271, %v721, 0
      %v817 = vsel %vm271, %v722, 0
      %v820 = vsel %vm271, %v723, 0
      %v823 = vsel %vm271, %v724, 0
      %825 = vmatpush.msra.mxu0 0.0
      %826 = vmatpush.msra.mxu0 0.0
      %827 = vmatpush.msra.mxu0 0.0
      %828 = vmatpush.msra.mxu0 0.0
      %829 = vmatpush.msra.mxu0 0.0
      %830 = vmatpush.msra.mxu0 0.0
      %831 = vmatpush.msra.mxu0 0.0
      %832 = vmatpush.msra.mxu0 0.0
      %833 = vmatpush.msra.mxu0 0.0
      %834 = vmatpush.msra.mxu0 0.0
      %835 = vmatpush.msra.mxu0 0.0
      %836 = vmatpush.msra.mxu0 0.0
      %837 = vmatpush.msra.mxu0 0.0
      %838 = vmatpush.msra.mxu0 %v728
      %839 = vmatpush.msra.mxu0 %v727
      %840 = vmatpush.msra.mxu0 %v726
      %841 = vmatmul.f32.gmra.mxu0 %v730
      %v842 = vpop.f32.mrf.mxu0
      %v843 = vadd.f32 0.0, %v842
      %844 = vmatmul.f32.gmra.mxu0 %v733
      %v845 = vpop.f32.mrf.mxu0
      %v846 = vadd.f32 0.0, %v845
      %847 = vmatmul.f32.gmra.mxu0 %v736
      %v848 = vpop.f32.mrf.mxu0
      %v849 = vadd.f32 0.0, %v848
      %850 = vmatmul.f32.gmra.mxu0 %v739
      %v851 = vpop.f32.mrf.mxu0
      %v852 = vadd.f32 0.0, %v851
      %853 = vmatmul.f32.gmra.mxu0 %v742
      %v854 = vpop.f32.mrf.mxu0
      %v855 = vadd.f32 0.0, %v854
      %856 = vmatmul.f32.gmra.mxu0 %v745
      %v857 = vpop.f32.mrf.mxu0
      %v858 = vadd.f32 0.0, %v857
      %859 = vmatmul.f32.gmra.mxu0 %v748
      %v860 = vpop.f32.mrf.mxu0
      %v861 = vadd.f32 0.0, %v860
      %862 = vmatmul.f32.gmra.mxu0 %v751
      %v863 = vpop.f32.mrf.mxu0
      %v864 = vadd.f32 0.0, %v863
      %865 = vmatmul.f32.gmra.mxu0 %v754
      %v866 = vpop.f32.mrf.mxu0
      %v867 = vadd.f32 0.0, %v866
      %868 = vmatmul.f32.gmra.mxu0 %v757
      %v869 = vpop.f32.mrf.mxu0
      %v870 = vadd.f32 0.0, %v869
      %871 = vmatmul.f32.gmra.mxu0 %v760
      %v872 = vpop.f32.mrf.mxu0
      %v873 = vadd.f32 0.0, %v872
      %874 = vmatmul.f32.gmra.mxu0 %v763
      %v875 = vpop.f32.mrf.mxu0
      %v876 = vadd.f32 0.0, %v875
      %877 = vmatmul.f32.gmra.mxu0 %v766
      %v878 = vpop.f32.mrf.mxu0
      %v879 = vadd.f32 0.0, %v878
      %880 = vmatmul.f32.gmra.mxu0 %v769
      %v881 = vpop.f32.mrf.mxu0
      %v882 = vadd.f32 0.0, %v881
      %883 = vmatmul.f32.gmra.mxu0 %v772
      %v884 = vpop.f32.mrf.mxu0
      %v885 = vadd.f32 0.0, %v884
      %886 = vmatmul.f32.gmra.mxu0 %v775
      %v887 = vpop.f32.mrf.mxu0
      %v888 = vadd.f32 0.0, %v887
      %889 = vmatmul.f32.gmra.mxu0 %v778
      %v890 = vpop.f32.mrf.mxu0
      %v891 = vadd.f32 0.0, %v890
      %892 = vmatmul.f32.gmra.mxu0 %v781
      %v893 = vpop.f32.mrf.mxu0
      %v894 = vadd.f32 0.0, %v893
      %895 = vmatmul.f32.gmra.mxu0 %v784
      %v896 = vpop.f32.mrf.mxu0
      %v897 = vadd.f32 0.0, %v896
      %898 = vmatmul.f32.gmra.mxu0 %v787
      %v899 = vpop.f32.mrf.mxu0
      %v900 = vadd.f32 0.0, %v899
      %901 = vmatmul.f32.gmra.mxu0 %v790
      %v902 = vpop.f32.mrf.mxu0
      %v903 = vadd.f32 0.0, %v902
      %904 = vmatmul.f32.gmra.mxu0 %v793
      %v905 = vpop.f32.mrf.mxu0
      %v906 = vadd.f32 0.0, %v905
      %907 = vmatmul.f32.gmra.mxu0 %v796
      %v908 = vpop.f32.mrf.mxu0
      %v909 = vadd.f32 0.0, %v908
      %910 = vmatmul.f32.gmra.mxu0 %v799
      %v911 = vpop.f32.mrf.mxu0
      %v912 = vadd.f32 0.0, %v911
      %913 = vmatmul.f32.gmra.mxu0 %v802
      %v914 = vpop.f32.mrf.mxu0
      %v915 = vadd.f32 0.0, %v914
      %916 = vmatmul.f32.gmra.mxu0 %v805
      %v917 = vpop.f32.mrf.mxu0
      %v918 = vadd.f32 0.0, %v917
      %919 = vmatmul.f32.gmra.mxu0 %v808
      %v920 = vpop.f32.mrf.mxu0
      %v921 = vadd.f32 0.0, %v920
      %922 = vmatmul.f32.gmra.mxu0 %v811
      %v923 = vpop.f32.mrf.mxu0
      %v924 = vadd.f32 0.0, %v923
      %925 = vmatmul.f32.gmra.mxu0 %v814
      %v926 = vpop.f32.mrf.mxu0
      %v927 = vadd.f32 0.0, %v926
      %928 = vmatmul.f32.gmra.mxu0 %v817
      %v929 = vpop.f32.mrf.mxu0
      %v930 = vadd.f32 0.0, %v929
      %931 = vmatmul.f32.gmra.mxu0 %v820
      %v932 = vpop.f32.mrf.mxu0
      %v933 = vadd.f32 0.0, %v932
      %934 = vmatmul.f32.gmra.mxu0 %v823
      %v935 = vpop.f32.mrf.mxu0
      %v936 = vadd.f32 0.0, %v935
      %937 = vdwg.mxu0
      %v938 = vadd.f32 %v595, %v843
      %v939 = vadd.f32 %v598, %v846
      %v940 = vadd.f32 %v601, %v849
      %v941 = vadd.f32 %v604, %v852
      %v942 = vadd.f32 %v607, %v855
      %v943 = vadd.f32 %v610, %v858
      %v944 = vadd.f32 %v613, %v861
      %v945 = vadd.f32 %v616, %v864
      %v946 = vadd.f32 %v619, %v867
      %v947 = vadd.f32 %v622, %v870
      %v948 = vadd.f32 %v625, %v873
      %v949 = vadd.f32 %v628, %v876
      %v950 = vadd.f32 %v631, %v879
      %v951 = vadd.f32 %v634, %v882
      %v952 = vadd.f32 %v637, %v885
      %v953 = vadd.f32 %v640, %v888
      %v954 = vadd.f32 %v643, %v891
      %v955 = vadd.f32 %v646, %v894
      %v956 = vadd.f32 %v649, %v897
      %v957 = vadd.f32 %v652, %v900
      %v958 = vadd.f32 %v655, %v903
      %v959 = vadd.f32 %v658, %v906
      %v960 = vadd.f32 %v661, %v909
      %v961 = vadd.f32 %v664, %v912
      %v962 = vadd.f32 %v667, %v915
      %v963 = vadd.f32 %v670, %v918
      %v964 = vadd.f32 %v673, %v921
      %v965 = vadd.f32 %v676, %v924
      %v966 = vadd.f32 %v679, %v927
      %v967 = vadd.f32 %v682, %v930
      %v968 = vadd.f32 %v685, %v933
      %v969 = vadd.f32 %v688, %v936
      %v970 = vld [vmem:[%s2] sm:$0x1]
      %v972 = vperm.slane %v970, 0
      %v974 = vadd.f32 %v938, %v972
      %v975 = vadd.f32 %v939, %v972
      %v976 = vadd.f32 %v940, %v972
      %v977 = vadd.f32 %v941, %v972
      %v978 = vadd.f32 %v942, %v972
      %v979 = vadd.f32 %v943, %v972
      %v980 = vadd.f32 %v944, %v972
      %v981 = vadd.f32 %v945, %v972
      %v982 = vadd.f32 %v946, %v972
      %v983 = vadd.f32 %v947, %v972
      %v984 = vadd.f32 %v948, %v972
      %v985 = vadd.f32 %v949, %v972
      %v986 = vadd.f32 %v950, %v972
      %v987 = vadd.f32 %v951, %v972
      %v988 = vadd.f32 %v952, %v972
      %v989 = vadd.f32 %v953, %v972
      %v990 = vadd.f32 %v954, %v972
      %v991 = vadd.f32 %v955, %v972
      %v992 = vadd.f32 %v956, %v972
      %v993 = vadd.f32 %v957, %v972
      %v994 = vadd.f32 %v958, %v972
      %v995 = vadd.f32 %v959, %v972
      %v996 = vadd.f32 %v960, %v972
      %v997 = vadd.f32 %v961, %v972
      %v998 = vadd.f32 %v962, %v972
      %v999 = vadd.f32 %v963, %v972
      %v1000 = vadd.f32 %v964, %v972
      %v1001 = vadd.f32 %v965, %v972
      %v1002 = vadd.f32 %v966, %v972
      %v1003 = vadd.f32 %v967, %v972
      %v1004 = vadd.f32 %v968, %v972
      %v1005 = vadd.f32 %v969, %v972
      %v1006 = vmax.f32 %v974, 0.0
      %v1007 = vmax.f32 %v975, 0.0
      %v1008 = vmax.f32 %v976, 0.0
      %v1009 = vmax.f32 %v977, 0.0
      %v1010 = vmax.f32 %v978, 0.0
      %v1011 = vmax.f32 %v979, 0.0
      %v1012 = vmax.f32 %v980, 0.0
      %v1013 = vmax.f32 %v981, 0.0
      %v1014 = vmax.f32 %v982, 0.0
      %v1015 = vmax.f32 %v983, 0.0
      %v1016 = vmax.f32 %v984, 0.0
      %v1017 = vmax.f32 %v985, 0.0
      %v1018 = vmax.f32 %v986, 0.0
      %v1019 = vmax.f32 %v987, 0.0
      %v1020 = vmax.f32 %v988, 0.0
      %v1021 = vmax.f32 %v989, 0.0
      %v1022 = vmax.f32 %v990, 0.0
      %v1023 = vmax.f32 %v991, 0.0
      %v1024 = vmax.f32 %v992, 0.0
      %v1025 = vmax.f32 %v993, 0.0
      %v1026 = vmax.f32 %v994, 0.0
      %v1027 = vmax.f32 %v995, 0.0
      %v1028 = vmax.f32 %v996, 0.0
      %v1029 = vmax.f32 %v997, 0.0
      %v1030 = vmax.f32 %v998, 0.0
      %v1031 = vmax.f32 %v999, 0.0
      %v1032 = vmax.f32 %v1000, 0.0
      %v1033 = vmax.f32 %v1001, 0.0
      %v1034 = vmax.f32 %v1002, 0.0
      %v1035 = vmax.f32 %v1003, 0.0
      %v1036 = vmax.f32 %v1004, 0.0
      %v1037 = vmax.f32 %v1005, 0.0
      %vm1038 = vcmask 64512
      %1039 = vst.msk [vmem:[%s192] sm:$0xff] %vm1038, %v1006
      %1040 = vst.msk [vmem:[%s192 + $0x8] sm:$0xff] %vm1038, %v1007
      %1041 = vst.msk [vmem:[%s192 + $0x10] sm:$0xff] %vm1038, %v1008
      %1042 = vst.msk [vmem:[%s192 + $0x18] sm:$0xff] %vm1038, %v1009
      %1043 = vst.msk [vmem:[%s192 + $0x20] sm:$0xff] %vm1038, %v1010
      %1044 = vst.msk [vmem:[%s192 + $0x28] sm:$0xff] %vm1038, %v1011
      %1045 = vst.msk [vmem:[%s192 + $0x30] sm:$0xff] %vm1038, %v1012
      %1046 = vst.msk [vmem:[%s192 + $0x38] sm:$0xff] %vm1038, %v1013
      %1047 = vst.msk [vmem:[%s192 + $0x40] sm:$0xff] %vm1038, %v1014
      %1048 = vst.msk [vmem:[%s192 + $0x48] sm:$0xff] %vm1038, %v1015
      %1049 = vst.msk [vmem:[%s192 + $0x50] sm:$0xff] %vm1038, %v1016
      %1050 = vst.msk [vmem:[%s192 + $0x58] sm:$0xff] %vm1038, %v1017
      %1051 = vst.msk [vmem:[%s192 + $0x60] sm:$0xff] %vm1038, %v1018
      %1052 = vst.msk [vmem:[%s192 + $0x68] sm:$0xff] %vm1038, %v1019
      %1053 = vst.msk [vmem:[%s192 + $0x70] sm:$0xff] %vm1038, %v1020
      %1054 = vst.msk [vmem:[%s192 + $0x78] sm:$0xff] %vm1038, %v1021
      %1055 = vst.msk [vmem:[%s192 + $0x80] sm:$0xff] %vm1038, %v1022
      %1056 = vst.msk [vmem:[%s192 + $0x88] sm:$0xff] %vm1038, %v1023
      %1057 = vst.msk [vmem:[%s192 + $0x90] sm:$0xff] %vm1038, %v1024
      %1058 = vst.msk [vmem:[%s192 + $0x98] sm:$0xff] %vm1038, %v1025
      %1059 = vst.msk [vmem:[%s192 + $0xa0] sm:$0xff] %vm1038, %v1026
      %1060 = vst.msk [vmem:[%s192 + $0xa8] sm:$0xff] %vm1038, %v1027
      %1061 = vst.msk [vmem:[%s192 + $0xb0] sm:$0xff] %vm1038, %v1028
      %1062 = vst.msk [vmem:[%s192 + $0xb8] sm:$0xff] %vm1038, %v1029
      %1063 = vst.msk [vmem:[%s192 + $0xc0] sm:$0xff] %vm1038, %v1030
      %1064 = vst.msk [vmem:[%s192 + $0xc8] sm:$0xff] %vm1038, %v1031
      %1065 = vst.msk [vmem:[%s192 + $0xd0] sm:$0xff] %vm1038, %v1032
      %1066 = vst.msk [vmem:[%s192 + $0xd8] sm:$0xff] %vm1038, %v1033
      %1067 = vst.msk [vmem:[%s192 + $0xe0] sm:$0xff] %vm1038, %v1034
      %1068 = vst.msk [vmem:[%s192 + $0xe8] sm:$0xff] %vm1038, %v1035
      %1069 = vst.msk [vmem:[%s192 + $0xf0] sm:$0xff] %vm1038, %v1036
      %1070 = vst.msk [vmem:[%s192 + $0xf8] sm:$0xff] %vm1038, %v1037
      %s1071 = smul.u32 32, %s19
      %p1072 = scmp.lt.s32.totalorder %s18, 1
      %s1073 = scalar_select %p1072, %s18, 1
      %p1074 = scmp.lt.s32.totalorder %s1071, 31
      %s1075 = scalar_select %p1074, %s1071, 31
      %s1076 = smul.addr %s1073, 32
      %s1077 = sadd.s32 %s1075, %s1076
      %s1078 = smul.addr %s1077, 8
      %s1079 = scalar_lea.vmem %s3, %s1078
      // Predicated region
      $region33: #{inception_a_forward.6} parent=31 // pred_check
        %p1080 = pneg %p114
      $region34: #{inception_a_forward.6} parent=31 // pred_check_branch
        %1082 = sbr.rel (%p1080) target = $region36
      $region35: #{inception_a_forward.6} parent=31 // pred_region
        %s1083 = smul.u32 32, %s19
      $region36: #{inception_a_forward.6} parent=31 // pred_fallthru
        _
    $region32: #{inception_a_forward.6} parent=5 // pred_fallthru
      _
    %p1084 = scmp.le.s32.totalorder 2, %s9
    // Predicated region
    $region37: #{inception_a_forward.6} parent=5 // pred_check
      %p1085 = pneg %p1084
    $region38: #{inception_a_forward.6} parent=5 // pred_check_branch
      %1087 = sbr.rel (%p1085) target = $region40
    $region39: #{inception_a_forward.6} parent=5 // pred_region
      %s1088 = ssub.s32 %s9, 2
      // Predicated region
      $region41: #{inception_a_forward.6} parent=39 // pred_check
        %p1089 = pneg %p120
      $region42: #{inception_a_forward.6} parent=39 // pred_check_branch
        %1091 = sbr.rel (%p1089) target = $region44
      $region43: #{inception_a_forward.6} parent=39 // pred_region
        %s1092 = smul.u32 32, %s21
        %p1093 = scmp.lt.s32.totalorder %s20, 1
        %s1094 = scalar_select %p1093, %s20, 1
        %p1095 = scmp.lt.s32.totalorder %s1092, 31
        %s1096 = scalar_select %p1095, %s1092, 31
        %s1097 = smul.addr %s1094, 32
        %s1098 = sadd.s32 %s1096, %s1097
        %s1099 = smul.addr %s1098, 8
        %s1100 = scalar_lea.vmem %s3, %s1099
      $region44: #{inception_a_forward.6} parent=39 // pred_fallthru
        _
    $region40: #{inception_a_forward.6} parent=5 // pred_fallthru
      _
  $region6: #{inception_a_forward.6} parent=0 // loop_footer
    %s13 = sadd.s32 1, %s9
  $region7: #{inception_a_forward.6} parent=0 // loop_footer_branch
    %8 = sbr.rel target = $region3
  $region8: #{inception_a_forward.6} parent=0 // loop_exit
    _

// kernel: inception_a_forward.7
$region0: #{inception_a_forward.7}
  #allocation0 [shape = 'u32[]', space=smem, size = 0x4, offset = 0x4, fixed_abs, tag = 'smem constant byte address 0x4 - core index']
  #allocation1 [shape = 'u32[72,128]{1,0:T(1,128)}', space=vmem, size = 0x9000, scoped, tag = 'internal scratch']
  %s0 = inlined_call_operand.vmem [shape: f32[2,320,20], index: 0, kind: input, shape index: {}]
  %s1 = inlined_call_operand.vmem [shape: f32[5,20,8], index: 1, kind: input, shape index: {}]
  %s2 = inlined_call_operand.vmem [shape: f32[1,8], index: 2, kind: input, shape index: {}]
  %s3 = inlined_call_operand.vmem [shape: f32[2,256,8], index: 3, kind: output, shape index: {}]
  %s4 = sld [smem:[#allocation0]]
  $region45: #{inception_a_forward.7} parent=0
    _
  %s6 = ssub.s32 1, %s4
  %s7 = scalar_select 0, %s6, %s4
  loop: start=0, step=1, limit=4
  $region2: #{inception_a_forward.7} parent=0 // loop_pre_header
    _
  $region3: #{inception_a_forward.7} parent=0 // loop_header
    %s9 = sphi 0, %s13
    %p10 = scmp.ge.s32.totalorder %s9, 4
    %s16 = sphi 0, %s28
    %s17 = sphi 0, %s24
    %s18 = sphi 0, %s16
    %s19 = sphi 0, %s17
    %s20 = sphi 0, %s18
    %s21 = sphi 0, %s19
    %s31 = sphi 0, %s33
    %s34 = sphi 0, %s31
    %s35 = sphi 0, %s34
    %s51 = sphi 0, %s35
    %s55 = sphi 0, %s55
    %s57 = sphi 0, %s55
    %s58 = sphi 0, %s57
    %s72 = sphi 0, %s58
    %s76 = sphi 0, %s76
    %s78 = sphi 0, %s76
    %s79 = sphi 0, %s78
    %s93 = sphi 0, %s79
    %s101 = sphi 0, %s103
    %s104 = sphi 0, %s101
    %s105 = sphi 0, %s104
    %s121 = sphi 0, %s105
  $region4: #{inception_a_forward.7} parent=0 // loop_header_branch
    %12 = sbr.rel (%p10) target = $region8
  $region5: #{inception_a_forward.7} parent=0 // loop_body
    %s14 = ssub.s32 %s9, 1
    %s15 = ssub.s32 %s9, 2
    %s22 = sadd.s32 1, %s17
    %p23 = scmp.ge.s32.totalorder %s22, 1
    %s24 = scalar_select %p23, 0, %s22
    %s25 = sadd.s32 1, %s16
    %s26 = scalar_select %p23, %s25, %s16
    %p27 = scmp.ge.s32.totalorder %s26, 2
    %s28 = scalar_select %p27, 0, %s26
    %s29 = ssub.s32 %s16, %s28
    %p30 = scmp.eq.s32.totalorder %s29, 0
    %s32 = sadd.s32 %s31, 1
    %s33 = scalar_select %p30, %s31, %s32
    %p36 = pneg %p30
    %p37 = scmp.eq.s32.totalorder %s9, 1
    %p38 = por %p36, %p37
    %p39 = scmp.ne.s32.totalorder %s31, %s34
    %p40 = scmp.eq.s32.totalorder %s9, 0
    %p41 = por %p39, %p40
    %p42 = scmp.ne.s32.totalorder %s31, %s34
    %p43 = scmp.eq.s32.totalorder %s14, 1
    %p44 = por %p42, %p43
    %p45 = scmp.ne.s32.totalorder %s34, %s35
    %p46 = scmp.eq.s32.totalorder %s14, 0
    %p47 = por %p45, %p46
    %p48 = scmp.ne.s32.totalorder %s34, %s35
    %p49 = scmp.eq.s32.totalorder %s15, 1
    %p50 = por %p48, %p49
    %p52 = scmp.ne.s32.totalorder %s35, %s51
    %p53 = scmp.eq.s32.totalorder %s15, 0
    %p54 = por %p52, %p53
    %s56 = sadd.s32 %s55, 1
    %p59 = scmp.eq.s32.totalorder %s9, 1
    %p60 = scmp.ne.s32.totalorder %s55, %s57
    %p61 = scmp.eq.s32.totalorder %s9, 0
    %p62 = por %p60, %p61
    %p63 = scmp.ne.s32.totalorder %s55, %s57
    %p64 = scmp.eq.s32.totalorder %s14, 1
    %p65 = por %p63, %p64
    %p66 = scmp.ne.s32.totalorder %s57, %s58
    %p67 = scmp.eq.s32.totalorder %s14, 0
    %p68 = por %p66, %p67
    %p69 = scmp.ne.s32.totalorder %s57, %s58
    %p70 = scmp.eq.s32.totalorder %s15, 1
    %p71 = por %p69, %p70
    %p73 = scmp.ne.s32.totalorder %s58, %s72
    %p74 = scmp.eq.s32.totalorder %s15, 0
    %p75 = por %p73, %p74
    %s77 = sadd.s32 %s76, 1
    %p80 = scmp.eq.s32.totalorder %s9, 1
    %p81 = scmp.ne.s32.totalorder %s76, %s78
    %p82 = scmp.eq.s32.totalorder %s9, 0
    %p83 = por %p81, %p82
    %p84 = scmp.ne.s32.totalorder %s76, %s78
    %p85 = scmp.eq.s32.totalorder %s14, 1
    %p86 = por %p84, %p85
    %p87 = scmp.ne.s32.totalorder %s78, %s79
    %p88 = scmp.eq.s32.totalorder %s14, 0
    %p89 = por %p87, %p88
    %p90 = scmp.ne.s32.totalorder %s78, %s79
    %p91 = scmp.eq.s32.totalorder %s15, 1
    %p92 = por %p90, %p91
    %p94 = scmp.ne.s32.totalorder %s79, %s93
    %p95 = scmp.eq.s32.totalorder %s15, 0
    %p96 = por %p94, %p95
    %s97 = ssub.s32 %s16, %s28
    %s98 = ssub.s32 %s17, %s24
    %s99 = sor.u32 %s97, %s98
    %p100 = scmp.eq.s32.totalorder %s99, 0
    %s102 = sadd.s32 %s101, 1
    %s103 = scalar_select %p100, %s101, %s102
    %p106 = pneg %p100
    %p107 = scmp.eq.s32.totalorder %s9, 1
    %p108 = por %p106, %p107
    %p109 = scmp.ne.s32.totalorder %s101, %s104
    %p110 = scmp.eq.s32.totalorder %s9, 0
    %p111 = por %p109, %p110
    %p112 = scmp.ne.s32.totalorder %s101, %s104
    %p113 = scmp.eq.s32.totalorder %s14, 1
    %p114 = por %p112, %p113
    %p115 = scmp.ne.s32.totalorder %s104, %s105
    %p116 = scmp.eq.s32.totalorder %s14, 0
    %p117 = por %p115, %p116
    %p118 = scmp.ne.s32.totalorder %s104, %s105
    %p119 = scmp.eq.s32.totalorder %s15, 1
    %p120 = por %p118, %p119
    %p122 = scmp.ne.s32.totalorder %s105, %s121
    %p123 = scmp.eq.s32.totalorder %s15, 0
    %p124 = por %p122, %p123
    %p125 = scmp.le.s32.totalorder 1, %s9
    %p126 = scmp.lt.s32.totalorder %s9, 3
    %p127 = pnand %p125, %p126
    %p128 = pneg %p127
    // Predicated region
    $region9: #{inception_a_forward.7} parent=5 // pred_check
      _
    $region10: #{inception_a_forward.7} parent=5 // pred_check_branch
      %130 = sbr.rel (%p127) target = $region12
    $region11: #{inception_a_forward.7} parent=5 // pred_region
      %s131 = ssub.s32 %s9, 1
      // Predicated region
      $region13: #{inception_a_forward.7} parent=11 // pred_check
        %p132 = pneg %p68
      $region14: #{inception_a_forward.7} parent=11 // pred_check_branch
        %134 = sbr.rel (%p132) target = $region16
      $region15: #{inception_a_forward.7} parent=11 // pred_region
        _
      $region16: #{inception_a_forward.7} parent=11 // pred_fallthru
        _
      // Predicated region
      $region17: #{inception_a_forward.7} parent=11 // pred_check
        %p135 = pneg %p89
      $region18: #{inception_a_forward.7} parent=11 // pred_check_branch
        %137 = sbr.rel (%p135) target = $region20
      $region19: #{inception_a_forward.7} parent=11 // pred_region
        _
      $region20: #{inception_a_forward.7} parent=11 // pred_fallthru
        _
    $region12: #{inception_a_forward.7} parent=5 // pred_fallthru
      _
    %p138 = scmp.lt.s32.totalorder %s9, 2
    // Predicated region
    $region21: #{inception_a_forward.7} parent=5 // pred_check
      %p139 = pneg %p138
    $region22: #{inception_a_forward.7} parent=5 // pred_check_branch
      %141 = sbr.rel (%p139) target = $region24
    $region23: #{inception_a_forward.7} parent=5 // pred_region
      // Predicated region
      $region25: #{inception_a_forward.7} parent=23 // pred_check
        %p142 = pneg %p41
      $region26: #{inception_a_forward.7} parent=23 // pred_check_branch
        %144 = sbr.rel (%p142) target = $region28
      $region27: #{inception_a_forward.7} parent=23 // pred_region
        %p145 = scmp.lt.s32.totalorder %s16, 1
        %s146 = scalar_select %p145, %s16, 1
        %s147 = smul.addr %s146, 40
        %s148 = smul.addr %s147, 8
        %s149 = scalar_lea.vmem %s0, %s148
      $region28: #{inception_a_forward.7} parent=23 // pred_fallthru
        _
    $region24: #{inception_a_forward.7} parent=5 // pred_fallthru
      _
    %p150 = scmp.le.s32.totalorder 1, %s9
    %p151 = scmp.lt.s32.totalorder %s9, 3
    %p152 = pnand %p150, %p151
    %p153 = pneg %p152
    // Predicated region
    $region29: #{inception_a_forward.7} parent=5 // pred_check
      _
    $region30: #{inception_a_forward.7} parent=5 // pred_check_branch
      %155 = sbr.rel (%p152) target = $region32
    $region31: #{inception_a_forward.7} parent=5 // pred_region
      %s156 = ssub.s32 %s9, 1
      %p157 = scmp.lt.s32.totalorder %s18, 1
      %s158 = scalar_select %p157, %s18, 1
      %s159 = smul.addr %s158, 40
      %s160 = smul.addr %s159, 8
      %s161 = scalar_lea.vmem %s0, %s160
      %p162 = pneg %p47
      %p163 = pneg %p44
      %p164 = pneg %p68
      %p165 = pneg %p65
      %p166 = pneg %p89
      %p167 = pneg %p86
      %p168 = pneg %p117
      %p169 = pneg %p114
      %s170 = smul.u32 32, %s19
      %p171 = scmp.lt.s32.totalorder %s18, 1
      %s172 = scalar_select %p171, %s18, 1
      %p173 = scmp.lt.s32.totalorder %s170, 31
      %s174 = scalar_select %p173, %s170, 31
      %s175 = smul.addr %s172, 32
      %s176 = sadd.s32 %s174, %s175
      %s177 = smul.addr %s176, 8
      %s178 = scalar_lea.vmem %s3, %s177
      %p179 = scmp.lt.s32.totalorder %s18, 1
      %s180 = scalar_select %p179, %s18, 1
      %s181 = smul.addr %s180, 40
      %s182 = smul.addr %s181, 8
      %s183 = scalar_lea.vmem %s0, %s182
      %s184 = smul.u32 32, %s19
      %p185 = scmp.lt.s32.totalorder %s18, 1
      %s186 = scalar_select %p185, %s18, 1
      %p187 = scmp.lt.s32.totalorder %s184, 31
      %s188 = scalar_select %p187, %s184, 31
      %s189 = smul.addr %s186, 32
      %s190 = sadd.s32 %s188, %s189
      %s191 = smul.addr %s190, 8
      %s192 = scalar_lea.vmem %s3, %s191
      %s193 = smul.u32 32, %s19
      %s194 = smul.u32 %s19, 16
      %s195 = smul.u32 %s19, 256
      %s196 = scalar_lea.vmem %s183, %s195
      %v197 = vld [vmem:[%s196] sm:$0xff]
      %v198 = vld [vmem:[%s196 + $0x8] sm:$0xff]
      %v199 = vld [vmem:[%s196 + $0x10] sm:$0xff]
      %v200 = vld [vmem:[%s196 + $0x18] sm:$0xff]
      %v201 = vld [vmem:[%s196 + $0x20] sm:$0xff]
      %v202 = vld [vmem:[%s196 + $0x28] sm:$0xff]
      %v203 = vld [vmem:[%s196 + $0x30] sm:$0xff]
      %v204 = vld [vmem:[%s196 + $0x38] sm:$0xff]
      %v205 = vld [vmem:[%s196 + $0x40] sm:$0xff]
      %v206 = vld [vmem:[%s196 + $0x48] sm:$0xff]
      %v207 = vld [vmem:[%s196 + $0x50] sm:$0xff]
      %v208 = vld [vmem:[%s196 + $0x58] sm:$0xff]
      %v209 = vld [vmem:[%s196 + $0x60] sm:$0xff]
      %v210 = vld [vmem:[%s196 + $0x68] sm:$0xff]
      %v211 = vld [vmem:[%s196 + $0x70] sm:$0xff]
      %v212 = vld [vmem:[%s196 + $0x78] sm:$0xff]
      %v213 = vld [vmem:[%s196 + $0x80] sm:$0xff]
      %v214 = vld [vmem:[%s196 + $0x88] sm:$0xff]
      %v215 = vld [vmem:[%s196 + $0x90] sm:$0xff]
      %v216 = vld [vmem:[%s196 + $0x98] sm:$0xff]
      %v217 = vld [vmem:[%s196 + $0xa0] sm:$0xff]
      %v218 = vld [vmem:[%s196 + $0xa8] sm:$0xff]
      %v219 = vld [vmem:[%s196 + $0xb0] sm:$0xff]
      %v220 = vld [vmem:[%s196 + $0xb8] sm:$0xff]
      %v221 = vld [vmem:[%s196 + $0xc0] sm:$0xff]
      %v222 = vld [vmem:[%s196 + $0xc8] sm:$0xff]
      %v223 = vld [vmem:[%s196 + $0xd0] sm:$0xff]
      %v224 = vld [vmem:[%s196 + $0xd8] sm:$0xff]
      %v225 = vld [vmem:[%s196 + $0xe0] sm:$0xff]
      %v226 = vld [vmem:[%s196 + $0xe8] sm:$0xff]
      %v227 = vld [vmem:[%s196 + $0xf0] sm:$0xff]
      %v228 = vld [vmem:[%s196 + $0xf8] sm:$0xff]
      %v229 = vld [vmem:[%s1] sm:$0xff]
      %v230 = vld [vmem:[%s1 + $0x8] sm:$0xff]
      %v231 = vld [vmem:[%s1 + $0x10] sm:$0xf]
      %s232 = sadd.s32 %s194, 1
      %s233 = smul.u32 %s232, 16
      %s234 = scalar_lea.vmem %s183, %s233
      %v235 = vld [vmem:[%s234] sm:$0xff]
      %v236 = vld [vmem:[%s234 + $0x8] sm:$0xff]
      %v237 = vld [vmem:[%s234 + $0x10] sm:$0xff]
      %v238 = vld [vmem:[%s234 + $0x18] sm:$0xff]
      %v239 = vld [vmem:[%s234 + $0x20] sm:$0xff]
      %v240 = vld [vmem:[%s234 + $0x28] sm:$0xff]
      %v241 = vld [vmem:[%s234 + $0x30] sm:$0xff]
      %v242 = vld [vmem:[%s234 + $0x38] sm:$0xff]
      %v243 = vld [vmem:[%s234 + $0x40] sm:$0xff]
      %v244 = vld [vmem:[%s234 + $0x48] sm:$0xff]
      %v245 = vld [vmem:[%s234 + $0x50] sm:$0xff]
      %v246 = vld [vmem:[%s234 + $0x58] sm:$0xff]
      %v247 = vld [vmem:[%s234 + $0x60] sm:$0xff]
      %v248 = vld [vmem:[%s234 + $0x68] sm:$0xff]
      %v249 = vld [vmem:[%s234 + $0x70] sm:$0xff]
      %v250 = vld [vmem:[%s234 + $0x78] sm:$0xff]
      %v251 = vld [vmem:[%s234 + $0x80] sm:$0xff]
      %v252 = vld [vmem:[%s234 + $0x88] sm:$0xff]
      %v253 = vld [vmem:[%s234 + $0x90] sm:$0xff]
      %v254 = vld [vmem:[%s234 + $0x98] sm:$0xff]
      %v255 = vld [vmem:[%s234 + $0xa0] sm:$0xff]
      %v256 = vld [vmem:[%s234 + $0xa8] sm:$0xff]
      %v257 = vld [vmem:[%s234 + $0xb0] sm:$0xff]
      %v258 = vld [vmem:[%s234 + $0xb8] sm:$0xff]
      %v259 = vld [vmem:[%s234 + $0xc0] sm:$0xff]
      %v260 = vld [vmem:[%s234 + $0xc8] sm:$0xff]
      %v261 = vld [vmem:[%s234 + $0xd0] sm:$0xff]
      %v262 = vld [vmem:[%s234 + $0xd8] sm:$0xff]
      %v263 = vld [vmem:[%s234 + $0xe0] sm:$0xff]
      %v264 = vld [vmem:[%s234 + $0xe8] sm:$0xff]
      %v265 = vld [vmem:[%s234 + $0xf0] sm:$0xff]
      %v266 = vld [vmem:[%s234 + $0xf8] sm:$0xff]
      %s267 = scalar_lea.vmem %s1, 24
      %v268 = vld [vmem:[%s267] sm:$0xff]
      %v269 = vld [vmem:[%s267 + $0x8] sm:$0xff]
      %v270 = vld [vmem:[%s267 + $0x10] sm:$0xf]
      %vm271 = vcmask 162816
      %v273 = vsel %vm271, %v235, 0
      %v276 = vsel %vm271, %v236, 0
      %v279 = vsel %vm271, %v237, 0
      %v282 = vsel %vm271, %v238, 0
      %v285 = vsel %vm271, %v239, 0
      %v288 = vsel %vm271, %v240, 0
      %v291 = vsel %vm271, %v241, 0
      %v294 = vsel %vm271, %v242, 0
      %v297 = vsel %vm271, %v243, 0
      %v300 = vsel %vm271, %v244, 0
      %v303 = vsel %vm271, %v245, 0
      %v306 = vsel %vm271, %v246, 0
      %v309 = vsel %vm271, %v247, 0
      %v312 = vsel %vm271, %v248, 0
      %v315 = vsel %vm271, %v249, 0
      %v318 = vsel %vm271, %v250, 0
      %v321 = vsel %vm271, %v251, 0
      %v324 = vsel %vm271, %v252, 0
      %v327 = vsel %vm271, %v253, 0
      %v330 = vsel %vm271, %v254, 0
      %v333 = vsel %vm271, %v255, 0
      %v336 = vsel %vm271, %v256, 0
      %v339 = vsel %vm271, %v257, 0
      %v342 = vsel %vm271, %v258, 0
      %v345 = vsel %vm271, %v259, 0
      %v348 = vsel %vm271, %v260, 0
      %v351 = vsel %vm271, %v261, 0
      %v354 = vsel %vm271, %v262, 0
      %v357 = vsel %vm271, %v263, 0
      %v360 = vsel %vm271, %v264, 0
      %v363 = vsel %vm271, %v265, 0
      %v366 = vsel %vm271, %v266, 0
      %vm368 = vcmask 1043456
      %v370 = vsel %vm368, %v270, 0
      %372 = vmatpush.msra.mxu0 0.0
      %373 = vmatpush.msra.mxu0 0.0
      %374 = vmatpush.msra.mxu0 0.0
      %375 = vmatpush.msra.mxu0 0.0
      %376 = vmatpush.msra.mxu0 0.0
      %377 = vmatpush.msra.mxu0 0.0
      %378 = vmatpush.msra.mxu0 0.0
      %379 = vmatpush.msra.mxu0 0.0
      %380 = vmatpush.msra.mxu0 0.0
      %381 = vmatpush.msra.mxu0 0.0
      %382 = vmatpush.msra.mxu0 0.0
      %383 = vmatpush.msra.mxu0 0.0
      %384 = vmatpush.msra.mxu0 0.0
      %385 = vmatpush.msra.mxu0 %v370
      %386 = vmatpush.msra.mxu0 %v269
      %387 = vmatpush.msra.mxu0 %v268
      %388 = vmatmul.f32.gmra.mxu0 %v273
      %v389 = vpop.f32.mrf.mxu0
      %v390 = vadd.f32 0.0, %v389
      %391 = vmatmul.f32.gmra.mxu0 %v276
      %v392 = vpop.f32.mrf.mxu0
      %v393 = vadd.f32 0.0, %v392
      %394 = vmatmul.f32.gmra.mxu0 %v279
      %v395 = vpop.f32.mrf.mxu0
      %v396 = vadd.f32 0.0, %v395
      %397 = vmatmul.f32.gmra.mxu0 %v282
      %v398 = vpop.f32.mrf.mxu0
      %v399 = vadd.f32 0.0, %v398
      %400 = vmatmul.f32.gmra.mxu0 %v285
      %v401 = vpop.f32.mrf.mxu0
      %v402 = vadd.f32 0.0, %v401
      %403 = vmatmul.f32.gmra.mxu0 %v288
      %v404 = vpop.f32.mrf.mxu0
      %v405 = vadd.f32 0.0, %v404
      %406 = vmatmul.f32.gmra.mxu0 %v291
      %v407 = vpop.f32.mrf.mxu0
      %v408 = vadd.f32 0.0, %v407
      %409 = vmatmul.f32.gmra.mxu0 %v294
      %v410 = vpop.f32.mrf.mxu0
      %v411 = vadd.f32 0.0, %v410
      %412 = vmatmul.f32.gmra.mxu0 %v297
      %v413 = vpop.f32.mrf.mxu0
      %v414 = vadd.f32 0.0, %v413
      %415 = vmatmul.f32.gmra.mxu0 %v300
      %v416 = vpop.f32.mrf.mxu0
      %v417 = vadd.f32 0.0, %v416
      %418 = vmatmul.f32.gmra.mxu0 %v303
      %v419 = vpop.f32.mrf.mxu0
      %v420 = vadd.f32 0.0, %v419
      %421 = vmatmul.f32.gmra.mxu0 %v306
      %v422 = vpop.f32.mrf.mxu0
      %v423 = vadd.f32 0.0, %v422
      %424 = vmatmul.f32.gmra.mxu0 %v309
      %v425 = vpop.f32.mrf.mxu0
      %v426 = vadd.f32 0.0, %v425
      %427 = vmatmul.f32.gmra.mxu0 %v312
      %v428 = vpop.f32.mrf.mxu0
      %v429 = vadd.f32 0.0, %v428
      %430 = vmatmul.f32.gmra.mxu0 %v315
      %v431 = vpop.f32.mrf.mxu0
      %v432 = vadd.f32 0.0, %v431
      %433 = vmatmul.f32.gmra.mxu0 %v318
      %v434 = vpop.f32.mrf.mxu0
      %v435 = vadd.f32 0.0, %v434
      %436 = vmatmul.f32.gmra.mxu0 %v321
      %v437 = vpop.f32.mrf.mxu0
      %v438 = vadd.f32 0.0, %v437
      %439 = vmatmul.f32.gmra.mxu0 %v324
      %v440 = vpop.f32.mrf.mxu0
      %v441 = vadd.f32 0.0, %v440
      %442 = vmatmul.f32.gmra.mxu0 %v327
      %v443 = vpop.f32.mrf.mxu0
      %v444 = vadd.f32 0.0, %v443
      %445 = vmatmul.f32.gmra.mxu0 %v330
      %v446 = vpop.f32.mrf.mxu0
      %v447 = vadd.f32 0.0, %v446
      %448 = vmatmul.f32.gmra.mxu0 %v333
      %v449 = vpop.f32.mrf.mxu0
      %v450 = vadd.f32 0.0, %v449
      %451 = vmatmul.f32.gmra.mxu0 %v336
      %v452 = vpop.f32.mrf.mxu0
      %v453 = vadd.f32 0.0, %v452
      %454 = vmatmul.f32.gmra.mxu0 %v339
      %v455 = vpop.f32.mrf.mxu0
      %v456 = vadd.f32 0.0, %v455
      %457 = vmatmul.f32.gmra.mxu0 %v342
      %v458 = vpop.f32.mrf.mxu0
      %v459 = vadd.f32 0.0, %v458
      %460 = vmatmul.f32.gmra.mxu0 %v345
      %v461 = vpop.f32.mrf.mxu0
      %v462 = vadd.f32 0.0, %v461
      %463 = vmatmul.f32.gmra.mxu0 %v348
      %v464 = vpop.f32.mrf.mxu0
      %v465 = vadd.f32 0.0, %v464
      %466 = vmatmul.f32.gmra.mxu0 %v351
      %v467 = vpop.f32.mrf.mxu0
      %v468 = vadd.f32 0.0, %v467
      %469 = vmatmul.f32.gmra.mxu0 %v354
      %v470 = vpop.f32.mrf.mxu0
      %v471 = vadd.f32 0.0, %v470
      %472 = vmatmul.f32.gmra.mxu0 %v357
      %v473 = vpop.f32.mrf.mxu0
      %v474 = vadd.f32 0.0, %v473
      %475 = vmatmul.f32.gmra.mxu0 %v360
      %v476 = vpop.f32.mrf.mxu0
      %v477 = vadd.f32 0.0, %v476
      %478 = vmatmul.f32.gmra.mxu0 %v363
      %v479 = vpop.f32.mrf.mxu0
      %v480 = vadd.f32 0.0, %v479
      %481 = vmatmul.f32.gmra.mxu0 %v366
      %v482 = vpop.f32.mrf.mxu0
      %v483 = vadd.f32 0.0, %v482
      %484 = vdwg.mxu0
      %v486 = vsel %vm271, %v197, 0
      %v489 = vsel %vm271, %v198, 0
      %v492 = vsel %vm271, %v199, 0
      %v495 = vsel %vm271, %v200, 0
      %v498 = vsel %vm271, %v201, 0
      %v501 = vsel %vm271, %v202, 0
      %v504 = vsel %vm271, %v203, 0
      %v507 = vsel %vm271, %v204, 0
      %v510 = vsel %vm271, %v205, 0
      %v513 = vsel %vm271, %v206, 0
      %v516 = vsel %vm271, %v207, 0
      %v519 = vsel %vm271, %v208, 0
      %v522 = vsel %vm271, %v209, 0
      %v525 = vsel %vm271, %v210, 0
      %v528 = vsel %vm271, %v211, 0
      %v531 = vsel %vm271, %v212, 0
      %v534 = vsel %vm271, %v213, 0
      %v537 = vsel %vm271, %v214, 0
      %v540 = vsel %vm271, %v215, 0
      %v543 = vsel %vm271, %v216, 0
      %v546 = vsel %vm271, %v217, 0
      %v549 = vsel %vm271, %v218, 0
      %v552 = vsel %vm271, %v219, 0
      %v555 = vsel %vm271, %v220, 0
      %v558 = vsel %vm271, %v221, 0
      %v561 = vsel %vm271, %v222, 0
      %v564 = vsel %vm271, %v223, 0
      %v567 = vsel %vm271, %v224, 0
      %v570 = vsel %vm271, %v225, 0
      %v573 = vsel %vm271, %v226, 0
      %v576 = vsel %vm271, %v227, 0
      %v579 = vsel %vm271, %v228, 0
      %v582 = vsel %vm368, %v231, 0
      %584 = vmatpush.msra.mxu0 0.0
      %585 = vmatpush.msra.mxu0 0.0
      %586 = vmatpush.msra.mxu0 0.0
      %587 = vmatpush.msra.mxu0 0.0
      %588 = vmatpush.msra.mxu0 0.0
      %589 = vmatpush.msra.mxu0 0.0
      %590 = vmatpush.msra.mxu0 0.0
      %591 = vmatpush.msra.mxu0 0.0
      %592 = vmatpush.msra.mxu0 0.0
      %593 = vmatpush.msra.mxu0 0.0
      %594 = vmatpush.msra.mxu0 0.0
      %595 = vmatpush.msra.mxu0 0.0
      %596 = vmatpush.msra.mxu0 0.0
      %597 = vmatpush.msra.mxu0 %v582
      %598 = vmatpush.msra.mxu0 %v230
      %599 = vmatpush.msra.mxu0 %v229
      %600 = vmatmul.f32.gmra.mxu0 %v486
      %v601 = vpop.f32.mrf.mxu0
      %v602 = vadd.f32 %v390, %v601
      %603 = vmatmul.f32.gmra.mxu0 %v489
      %v604 = vpop.f32.mrf.mxu0
      %v605 = vadd.f32 %v393, %v604
      %606 = vmatmul.f32.gmra.mxu0 %v492
      %v607 = vpop.f32.mrf.mxu0
      %v608 = vadd.f32 %v396, %v607
      %609 = vmatmul.f32.gmra.mxu0 %v495
      %v610 = vpop.f32.mrf.mxu0
      %v611 = vadd.f32 %v399, %v610
      %612 = vmatmul.f32.gmra.mxu0 %v498
      %v613 = vpop.f32.mrf.mxu0
      %v614 = vadd.f32 %v402, %v613
      %615 = vmatmul.f32.gmra.mxu0 %v501
      %v616 = vpop.f32.mrf.mxu0
      %v617 = vadd.f32 %v405, %v616
      %618 = vmatmul.f32.gmra.mxu0 %v504
      %v619 = vpop.f32.mrf.mxu0
      %v620 = vadd.f32 %v408, %v619
      %621 = vmatmul.f32.gmra.mxu0 %v507
      %v622 = vpop.f32.mrf.mxu0
      %v623 = vadd.f32 %v411, %v622
      %624 = vmatmul.f32.gmra.mxu0 %v510
      %v625 = vpop.f32.mrf.mxu0
      %v626 = vadd.f32 %v414, %v625
      %627 = vmatmul.f32.gmra.mxu0 %v513
      %v628 = vpop.f32.mrf.mxu0
      %v629 = vadd.f32 %v417, %v628
      %630 = vmatmul.f32.gmra.mxu0 %v516
      %v631 = vpop.f32.mrf.mxu0
      %v632 = vadd.f32 %v420, %v631
      %633 = vmatmul.f32.gmra.mxu0 %v519
      %v634 = vpop.f32.mrf.mxu0
      %v635 = vadd.f32 %v423, %v634
      %636 = vmatmul.f32.gmra.mxu0 %v522
      %v637 = vpop.f32.mrf.mxu0
      %v638 = vadd.f32 %v426, %v637
      %639 = vmatmul.f32.gmra.mxu0 %v525
      %v640 = vpop.f32.mrf.mxu0
      %v641 = vadd.f32 %v429, %v640
      %642 = vmatmul.f32.gmra.mxu0 %v528
      %v643 = vpop.f32.mrf.mxu0
      %v644 = vadd.f32 %v432, %v643
      %645 = vmatmul.f32.gmra.mxu0 %v531
      %v646 = vpop.f32.mrf.mxu0
      %v647 = vadd.f32 %v435, %v646
      %648 = vmatmul.f32.gmra.mxu0 %v534
      %v649 = vpop.f32.mrf.mxu0
      %v650 = vadd.f32 %v438, %v649
      %651 = vmatmul.f32.gmra.mxu0 %v537
      %v652 = vpop.f32.mrf.mxu0
      %v653 = vadd.f32 %v441, %v652
      %654 = vmatmul.f32.gmra.mxu0 %v540
      %v655 = vpop.f32.mrf.mxu0
      %v656 = vadd.f32 %v444, %v655
      %657 = vmatmul.f32.gmra.mxu0 %v543
      %v658 = vpop.f32.mrf.mxu0
      %v659 = vadd.f32 %v447, %v658
      %660 = vmatmul.f32.gmra.mxu0 %v546
      %v661 = vpop.f32.mrf.mxu0
      %v662 = vadd.f32 %v450, %v661
      %663 = vmatmul.f32.gmra.mxu0 %v549
      %v664 = vpop.f32.mrf.mxu0
      %v665 = vadd.f32 %v453, %v664
      %666 = vmatmul.f32.gmra.mxu0 %v552
      %v667 = vpop.f32.mrf.mxu0
      %v668 = vadd.f32 %v456, %v667
      %669 = vmatmul.f32.gmra.mxu0 %v555
      %v670 = vpop.f32.mrf.mxu0
      %v671 = vadd.f32 %v459, %v670
      %672 = vmatmul.f32.gmra.mxu0 %v558
      %v673 = vpop.f32.mrf.mxu0
      %v674 = vadd.f32 %v462, %v673
      %675 = vmatmul.f32.gmra.mxu0 %v561
      %v676 = vpop.f32.mrf.mxu0
      %v677 = vadd.f32 %v465, %v676
      %678 = vmatmul.f32.gmra.mxu0 %v564
      %v679 = vpop.f32.mrf.mxu0
      %v680 = vadd.f32 %v468, %v679
      %681 = vmatmul.f32.gmra.mxu0 %v567
      %v682 = vpop.f32.mrf.mxu0
      %v683 = vadd.f32 %v471, %v682
      %684 = vmatmul.f32.gmra.mxu0 %v570
      %v685 = vpop.f32.mrf.mxu0
      %v686 = vadd.f32 %v474, %v685
      %687 = vmatmul.f32.gmra.mxu0 %v573
      %v688 = vpop.f32.mrf.mxu0
      %v689 = vadd.f32 %v477, %v688
      %690 = vmatmul.f32.gmra.mxu0 %v576
      %v691 = vpop.f32.mrf.mxu0
      %v692 = vadd.f32 %v480, %v691
      %693 = vmatmul.f32.gmra.mxu0 %v579
      %v694 = vpop.f32.mrf.mxu0
      %v695 = vadd.f32 %v483, %v694
      %696 = vdwg.mxu0
      %s697 = sadd.s32 %s194, 2
      %s698 = smul.u32 %s697, 16
      %s699 = scalar_lea.vmem %s183, %s698
      %v700 = vld [vmem:[%s699] sm:$0xff]
      %v701 = vld [vmem:[%s699 + $0x8] sm:$0xff]
      %v702 = vld [vmem:[%s699 + $0x10] sm:$0xff]
      %v703 = vld [vmem:[%s699 + $0x18] sm:$0xff]
      %v704 = vld [vmem:[%s699 + $0x20] sm:$0xff]
      %v705 = vld [vmem:[%s699 + $0x28] sm:$0xff]
      %v706 = vld [vmem:[%s699 + $0x30] sm:$0xff]
      %v707 = vld [vmem:[%s699 + $0x38] sm:$0xff]
      %v708 = vld [vmem:[%s699 + $0x40] sm:$0xff]
      %v709 = vld [vmem:[%s699 + $0x48] sm:$0xff]
      %v710 = vld [vmem:[%s699 + $0x50] sm:$0xff]
      %v711 = vld [vmem:[%s699 + $0x58] sm:$0xff]
      %v712 = vld [vmem:[%s699 + $0x60] sm:$0xff]
      %v713 = vld [vmem:[%s699 + $0x68] sm:$0xff]
      %v714 = vld [vmem:[%s699 + $0x70] sm:$0xff]
      %v715 = vld [vmem:[%s699 + $0x78] sm:$0xff]
      %v716 = vld [vmem:[%s699 + $0x80] sm:$0xff]
      %v717 = vld [vmem:[%s699 + $0x88] sm:$0xff]
      %v718 = vld [vmem:[%s699 + $0x90] sm:$0xff]
      %v719 = vld [vmem:[%s699 + $0x98] sm:$0xff]
      %v720 = vld [vmem:[%s699 + $0xa0] sm:$0xff]
      %v721 = vld [vmem:[%s699 + $0xa8] sm:$0xff]
      %v722 = vld [vmem:[%s699 + $0xb0] sm:$0xff]
      %v723 = vld [vmem:[%s699 + $0xb8] sm:$0xff]
      %v724 = vld [vmem:[%s699 + $0xc0] sm:$0xff]
      %v725 = vld [vmem:[%s699 + $0xc8] sm:$0xff]
      %v726 = vld [vmem:[%s699 + $0xd0] sm:$0xff]
      %v727 = vld [vmem:[%s699 + $0xd8] sm:$0xff]
      %v728 = vld [vmem:[%s699 + $0xe0] sm:$0xff]
      %v729 = vld [vmem:[%s699 + $0xe8] sm:$0xff]
      %v730 = vld [vmem:[%s699 + $0xf0] sm:$0xff]
      %v731 = vld [vmem:[%s699 + $0xf8] sm:$0xff]
      %s732 = scalar_lea.vmem %s1, 48
      %v733 = vld [vmem:[%s732] sm:$0xff]
      %v734 = vld [vmem:[%s732 + $0x8] sm:$0xff]
      %v735 = vld [vmem:[%s732 + $0x10] sm:$0xf]
      %v737 = vsel %vm271, %v700, 0
      %v740 = vsel %vm271, %v701, 0
      %v743 = vsel %vm271, %v702, 0
      %v746 = vsel %vm271, %v703, 0
      %v749 = vsel %vm271, %v704, 0
      %v752 = vsel %vm271, %v705, 0
      %v755 = vsel %vm271, %v706, 0
      %v758 = vsel %vm271, %v707, 0
      %v761 = vsel %vm271, %v708, 0
      %v764 = vsel %vm271, %v709, 0
      %v767 = vsel %vm271, %v710, 0
      %v770 = vsel %vm271, %v711, 0
      %v773 = vsel %vm271, %v712, 0
      %v776 = vsel %vm271, %v713, 0
      %v779 = vsel %vm271, %v714, 0
      %v782 = vsel %vm271, %v715, 0
      %v785 = vsel %vm271, %v716, 0
      %v788 = vsel %vm271, %v717, 0
      %v791 = vsel %vm271, %v718, 0
      %v794 = vsel %vm271, %v719, 0
      %v797 = vsel %vm271, %v720, 0
      %v800 = vsel %vm271, %v721, 0
      %v803 = vsel %vm271, %v722, 0
      %v806 = vsel %vm271, %v723, 0
      %v809 = vsel %vm271, %v724, 0
      %v812 = vsel %vm271, %v725, 0
      %v815 = vsel %vm271, %v726, 0
      %v818 = vsel %vm271, %v727, 0
      %v821 = vsel %vm271, %v728, 0
      %v824 = vsel %vm271, %v729, 0
      %v827 = vsel %vm271, %v730, 0
      %v830 = vsel %vm271, %v731, 0
      %v833 = vsel %vm368, %v735, 0
      %835 = vmatpush.msra.mxu0 0.0
      %836 = vmatpush.msra.mxu0 0.0
      %837 = vmatpush.msra.mxu0 0.0
      %838 = vmatpush.msra.mxu0 0.0
      %839 = vmatpush.msra.mxu0 0.0
      %840 = vmatpush.msra.mxu0 0.0
      %841 = vmatpush.msra.mxu0 0.0
      %842 = vmatpush.msra.mxu0 0.0
      %843 = vmatpush.msra.mxu0 0.0
      %844 = vmatpush.msra.mxu0 0.0
      %845 = vmatpush.msra.mxu0 0.0
      %846 = vmatpush.msra.mxu0 0.0
      %847 = vmatpush.msra.mxu0 0.0
      %848 = vmatpush.msra.mxu0 %v833
      %849 = vmatpush.msra.mxu0 %v734
      %850 = vmatpush.msra.mxu0 %v733
      %851 = vmatmul.f32.gmra.mxu0 %v737
      %v852 = vpop.f32.mrf.mxu0
      %v853 = vadd.f32 0.0, %v852
      %854 = vmatmul.f32.gmra.mxu0 %v740
      %v855 = vpop.f32.mrf.mxu0
      %v856 = vadd.f32 0.0, %v855
      %857 = vmatmul.f32.gmra.mxu0 %v743
      %v858 = vpop.f32.mrf.mxu0
      %v859 = vadd.f32 0.0, %v858
      %860 = vmatmul.f32.gmra.mxu0 %v746
      %v861 = vpop.f32.mrf.mxu0
      %v862 = vadd.f32 0.0, %v861
      %863 = vmatmul.f32.gmra.mxu0 %v749
      %v864 = vpop.f32.mrf.mxu0
      %v865 = vadd.f32 0.0, %v864
      %866 = vmatmul.f32.gmra.mxu0 %v752
      %v867 = vpop.f32.mrf.mxu0
      %v868 = vadd.f32 0.0, %v867
      %869 = vmatmul.f32.gmra.mxu0 %v755
      %v870 = vpop.f32.mrf.mxu0
      %v871 = vadd.f32 0.0, %v870
      %872 = vmatmul.f32.gmra.mxu0 %v758
      %v873 = vpop.f32.mrf.mxu0
      %v874 = vadd.f32 0.0, %v873
      %875 = vmatmul.f32.gmra.mxu0 %v761
      %v876 = vpop.f32.mrf.mxu0
      %v877 = vadd.f32 0.0, %v876
      %878 = vmatmul.f32.gmra.mxu0 %v764
      %v879 = vpop.f32.mrf.mxu0
      %v880 = vadd.f32 0.0, %v879
      %881 = vmatmul.f32.gmra.mxu0 %v767
      %v882 = vpop.f32.mrf.mxu0
      %v883 = vadd.f32 0.0, %v882
      %884 = vmatmul.f32.gmra.mxu0 %v770
      %v885 = vpop.f32.mrf.mxu0
      %v886 = vadd.f32 0.0, %v885
      %887 = vmatmul.f32.gmra.mxu0 %v773
      %v888 = vpop.f32.mrf.mxu0
      %v889 = vadd.f32 0.0, %v888
      %890 = vmatmul.f32.gmra.mxu0 %v776
      %v891 = vpop.f32.mrf.mxu0
      %v892 = vadd.f32 0.0, %v891
      %893 = vmatmul.f32.gmra.mxu0 %v779
      %v894 = vpop.f32.mrf.mxu0
      %v895 = vadd.f32 0.0, %v894
      %896 = vmatmul.f32.gmra.mxu0 %v782
      %v897 = vpop.f32.mrf.mxu0
      %v898 = vadd.f32 0.0, %v897
      %899 = vmatmul.f32.gmra.mxu0 %v785
      %v900 = vpop.f32.mrf.mxu0
      %v901 = vadd.f32 0.0, %v900
      %902 = vmatmul.f32.gmra.mxu0 %v788
      %v903 = vpop.f32.mrf.mxu0
      %v904 = vadd.f32 0.0, %v903
      %905 = vmatmul.f32.gmra.mxu0 %v791
      %v906 = vpop.f32.mrf.mxu0
      %v907 = vadd.f32 0.0, %v906
      %908 = vmatmul.f32.gmra.mxu0 %v794
      %v909 = vpop.f32.mrf.mxu0
      %v910 = vadd.f32 0.0, %v909
      %911 = vmatmul.f32.gmra.mxu0 %v797
      %v912 = vpop.f32.mrf.mxu0
      %v913 = vadd.f32 0.0, %v912
      %914 = vmatmul.f32.gmra.mxu0 %v800
      %v915 = vpop.f32.mrf.mxu0
      %v916 = vadd.f32 0.0, %v915
      %917 = vmatmul.f32.gmra.mxu0 %v803
      %v918 = vpop.f32.mrf.mxu0
      %v919 = vadd.f32 0.0, %v918
      %920 = vmatmul.f32.gmra.mxu0 %v806
      %v921 = vpop.f32.mrf.mxu0
      %v922 = vadd.f32 0.0, %v921
      %923 = vmatmul.f32.gmra.mxu0 %v809
      %v924 = vpop.f32.mrf.mxu0
      %v925 = vadd.f32 0.0, %v924
      %926 = vmatmul.f32.gmra.mxu0 %v812
      %v927 = vpop.f32.mrf.mxu0
      %v928 = vadd.f32 0.0, %v927
      %929 = vmatmul.f32.gmra.mxu0 %v815
      %v930 = vpop.f32.mrf.mxu0
      %v931 = vadd.f32 0.0, %v930
      %932 = vmatmul.f32.gmra.mxu0 %v818
      %v933 = vpop.f32.mrf.mxu0
      %v934 = vadd.f32 0.0, %v933
      %935 = vmatmul.f32.gmra.mxu0 %v821
      %v936 = vpop.f32.mrf.mxu0
      %v937 = vadd.f32 0.0, %v936
      %938 = vmatmul.f32.gmra.mxu0 %v824
      %v939 = vpop.f32.mrf.mxu0
      %v940 = vadd.f32 0.0, %v939
      %941 = vmatmul.f32.gmra.mxu0 %v827
      %v942 = vpop.f32.mrf.mxu0
      %v943 = vadd.f32 0.0, %v942
      %944 = vmatmul.f32.gmra.mxu0 %v830
      %v945 = vpop.f32.mrf.mxu0
      %v946 = vadd.f32 0.0, %v945
      %947 = vdwg.mxu0
      %v948 = vadd.f32 %v602, %v853
      %v949 = vadd.f32 %v605, %v856
      %v950 = vadd.f32 %v608, %v859
      %v951 = vadd.f32 %v611, %v862
      %v952 = vadd.f32 %v614, %v865
      %v953 = vadd.f32 %v617, %v868
      %v954 = vadd.f32 %v620, %v871
      %v955 = vadd.f32 %v623, %v874
      %v956 = vadd.f32 %v626, %v877
      %v957 = vadd.f32 %v629, %v880
      %v958 = vadd.f32 %v632, %v883
      %v959 = vadd.f32 %v635, %v886
      %v960 = vadd.f32 %v638, %v889
      %v961 = vadd.f32 %v641, %v892
      %v962 = vadd.f32 %v644, %v895
      %v963 = vadd.f32 %v647, %v898
      %v964 = vadd.f32 %v650, %v901
      %v965 = vadd.f32 %v653, %v904
      %v966 = vadd.f32 %v656, %v907
      %v967 = vadd.f32 %v659, %v910
      %v968 = vadd.f32 %v662, %v913
      %v969 = vadd.f32 %v665, %v916
      %v970 = vadd.f32 %v668, %v919
      %v971 = vadd.f32 %v671, %v922
      %v972 = vadd.f32 %v674, %v925
      %v973 = vadd.f32 %v677, %v928
      %v974 = vadd.f32 %v680, %v931
      %v975 = vadd.f32 %v683, %v934
      %v976 = vadd.f32 %v686, %v937
      %v977 = vadd.f32 %v689, %v940
      %v978 = vadd.f32 %v692, %v943
      %v979 = vadd.f32 %v695, %v946
      %s980 = sadd.s32 %s194, 3
      %s981 = smul.u32 %s980, 16
      %s982 = scalar_lea.vmem %s183, %s981
      %v983 = vld [vmem:[%s982] sm:$0xff]
      %v984 = vld [vmem:[%s982 + $0x8] sm:$0xff]
      %v985 = vld [vmem:[%s982 + $0x10] sm:$0xff]
      %v986 = vld [vmem:[%s982 + $0x18] sm:$0xff]
      %v987 = vld [vmem:[%s982 + $0x20] sm:$0xff]
      %v988 = vld [vmem:[%s982 + $0x28] sm:$0xff]
      %v989 = vld [vmem:[%s982 + $0x30] sm:$0xff]
      %v990 = vld [vmem:[%s982 + $0x38] sm:$0xff]
      %v991 = vld [vmem:[%s982 + $0x40] sm:$0xff]
      %v992 = vld [vmem:[%s982 + $0x48] sm:$0xff]
      %v993 = vld [vmem:[%s982 + $0x50] sm:$0xff]
      %v994 = vld [vmem:[%s982 + $0x58] sm:$0xff]
      %v995 = vld [vmem:[%s982 + $0x60] sm:$0xff]
      %v996 = vld [vmem:[%s982 + $0x68] sm:$0xff]
      %v997 = vld [vmem:[%s982 + $0x70] sm:$0xff]
      %v998 = vld [vmem:[%s982 + $0x78] sm:$0xff]
      %v999 = vld [vmem:[%s982 + $0x80] sm:$0xff]
      %v1000 = vld [vmem:[%s982 + $0x88] sm:$0xff]
      %v1001 = vld [vmem:[%s982 + $0x90] sm:$0xff]
      %v1002 = vld [vmem:[%s982 + $0x98] sm:$0xff]
      %v1003 = vld [vmem:[%s982 + $0xa0] sm:$0xff]
      %v1004 = vld [vmem:[%s982 + $0xa8] sm:$0xff]
      %v1005 = vld [vmem:[%s982 + $0xb0] sm:$0xff]
      %v1006 = vld [vmem:[%s982 + $0xb8] sm:$0xff]
      %v1007 = vld [vmem:[%s982 + $0xc0] sm:$0xff]
      %v1008 = vld [vmem:[%s982 + $0xc8] sm:$0xff]
      %v1009 = vld [vmem:[%s982 + $0xd0] sm:$0xff]
      %v1010 = vld [vmem:[%s982 + $0xd8] sm:$0xff]
      %v1011 = vld [vmem:[%s982 + $0xe0] sm:$0xff]
      %v1012 = vld [vmem:[%s982 + $0xe8] sm:$0xff]
      %v1013 = vld [vmem:[%s982 + $0xf0] sm:$0xff]
      %v1014 = vld [vmem:[%s982 + $0xf8] sm:$0xff]
      %s1015 = scalar_lea.vmem %s1, 72
      %v1016 = vld [vmem:[%s1015] sm:$0xff]
      %v1017 = vld [vmem:[%s1015 + $0x8] sm:$0xff]
      %v1018 = vld [vmem:[%s1015 + $0x10] sm:$0xf]
      %v1020 = vsel %vm271, %v983, 0
      %v1023 = vsel %vm271, %v984, 0
      %v1026 = vsel %vm271, %v985, 0
      %v1029 = vsel %vm271, %v986, 0
      %v1032 = vsel %vm271, %v987, 0
      %v1035 = vsel %vm271, %v988, 0
      %v1038 = vsel %vm271, %v989, 0
      %v1041 = vsel %vm271, %v990, 0
      %v1044 = vsel %vm271, %v991, 0
      %v1047 = vsel %vm271, %v992, 0
      %v1050 = vsel %vm271, %v993, 0
      %v1053 = vsel %vm271, %v994, 0
      %v1056 = vsel %vm271, %v995, 0
      %v1059 = vsel %vm271, %v996, 0
      %v1062 = vsel %vm271, %v997, 0
      %v1065 = vsel %vm271, %v998, 0
      %v1068 = vsel %vm271, %v999, 0
      %v1071 = vsel %vm271, %v1000, 0
      %v1074 = vsel %vm271, %v1001, 0
      %v1077 = vsel %vm271, %v1002, 0
      %v1080 = vsel %vm271, %v1003, 0
      %v1083 = vsel %vm271, %v1004, 0
      %v1086 = vsel %vm271, %v1005, 0
      %v1089 = vsel %vm271, %v1006, 0
      %v1092 = vsel %vm271, %v1007, 0
      %v1095 = vsel %vm271, %v1008, 0
      %v1098 = vsel %vm271, %v1009, 0
      %v1101 = vsel %vm271, %v1010, 0
      %v1104 = vsel %vm271, %v1011, 0
      %v1107 = vsel %vm271, %v1012, 0
      %v1110 = vsel %vm271, %v1013, 0
      %v1113 = vsel %vm271, %v1014, 0
      %v1116 = vsel %vm368, %v1018, 0
      %1118 = vmatpush.msra.mxu0 0.0
      %1119 = vmatpush.msra.mxu0 0.0
      %1120 = vmatpush.msra.mxu0 0.0
      %1121 = vmatpush.msra.mxu0 0.0
      %1122 = vmatpush.msra.mxu0 0.0
      %1123 = vmatpush.msra.mxu0 0.0
      %1124 = vmatpush.msra.mxu0 0.0
      %1125 = vmatpush.msra.mxu0 0.0
      %1126 = vmatpush.msra.mxu0 0.0
      %1127 = vmatpush.msra.mxu0 0.0
      %1128 = vmatpush.msra.mxu0 0.0
      %1129 = vmatpush.msra.mxu0 0.0
      %1130 = vmatpush.msra.mxu0 0.0
      %1131 = vmatpush.msra.mxu0 %v1116
      %1132 = vmatpush.msra.mxu0 %v1017
      %1133 = vmatpush.msra.mxu0 %v1016
      %1134 = vmatmul.f32.gmra.mxu0 %v1020
      %v1135 = vpop.f32.mrf.mxu0
      %v1136 = vadd.f32 0.0, %v1135
      %1137 = vmatmul.f32.gmra.mxu0 %v1023
      %v1138 = vpop.f32.mrf.mxu0
      %v1139 = vadd.f32 0.0, %v1138
      %1140 = vmatmul.f32.gmra.mxu0 %v1026
      %v1141 = vpop.f32.mrf.mxu0
      %v1142 = vadd.f32 0.0, %v1141
      %1143 = vmatmul.f32.gmra.mxu0 %v1029
      %v1144 = vpop.f32.mrf.mxu0
      %v1145 = vadd.f32 0.0, %v1144
      %1146 = vmatmul.f32.gmra.mxu0 %v1032
      %v1147 = vpop.f32.mrf.mxu0
      %v1148 = vadd.f32 0.0, %v1147
      %1149 = vmatmul.f32.gmra.mxu0 %v1035
      %v1150 = vpop.f32.mrf.mxu0
      %v1151 = vadd.f32 0.0, %v1150
      %1152 = vmatmul.f32.gmra.mxu0 %v1038
      %v1153 = vpop.f32.mrf.mxu0
      %v1154 = vadd.f32 0.0, %v1153
      %1155 = vmatmul.f32.gmra.mxu0 %v1041
      %v1156 = vpop.f32.mrf.mxu0
      %v1157 = vadd.f32 0.0, %v1156
      %1158 = vmatmul.f32.gmra.mxu0 %v1044
      %v1159 = vpop.f32.mrf.mxu0
      %v1160 = vadd.f32 0.0, %v1159
      %1161 = vmatmul.f32.gmra.mxu0 %v1047
      %v1162 = vpop.f32.mrf.mxu0
      %v1163 = vadd.f32 0.0, %v1162
      %1164 = vmatmul.f32.gmra.mxu0 %v1050
      %v1165 = vpop.f32.mrf.mxu0
      %v1166 = vadd.f32 0.0, %v1165
      %1167 = vmatmul.f32.gmra.mxu0 %v1053
      %v1168 = vpop.f32.mrf.mxu0
      %v1169 = vadd.f32 0.0, %v1168
      %1170 = vmatmul.f32.gmra.mxu0 %v1056
      %v1171 = vpop.f32.mrf.mxu0
      %v1172 = vadd.f32 0.0, %v1171
      %1173 = vmatmul.f32.gmra.mxu0 %v1059
      %v1174 = vpop.f32.mrf.mxu0
      %v1175 = vadd.f32 0.0, %v1174
      %1176 = vmatmul.f32.gmra.mxu0 %v1062
      %v1177 = vpop.f32.mrf.mxu0
      %v1178 = vadd.f32 0.0, %v1177
      %1179 = vmatmul.f32.gmra.mxu0 %v1065
      %v1180 = vpop.f32.mrf.mxu0
      %v1181 = vadd.f32 0.0, %v1180
      %1182 = vmatmul.f32.gmra.mxu0 %v1068
      %v1183 = vpop.f32.mrf.mxu0
      %v1184 = vadd.f32 0.0, %v1183
      %1185 = vmatmul.f32.gmra.mxu0 %v1071
      %v1186 = vpop.f32.mrf.mxu0
      %v1187 = vadd.f32 0.0, %v1186
      %1188 = vmatmul.f32.gmra.mxu0 %v1074
      %v1189 = vpop.f32.mrf.mxu0
      %v1190 = vadd.f32 0.0, %v1189
      %1191 = vmatmul.f32.gmra.mxu0 %v1077
      %v1192 = vpop.f32.mrf.mxu0
      %v1193 = vadd.f32 0.0, %v1192
      %1194 = vmatmul.f32.gmra.mxu0 %v1080
      %v1195 = vpop.f32.mrf.mxu0
      %v1196 = vadd.f32 0.0, %v1195
      %1197 = vmatmul.f32.gmra.mxu0 %v1083
      %v1198 = vpop.f32.mrf.mxu0
      %v1199 = vadd.f32 0.0, %v1198
      %1200 = vmatmul.f32.gmra.mxu0 %v1086
      %v1201 = vpop.f32.mrf.mxu0
      %v1202 = vadd.f32 0.0, %v1201
      %1203 = vmatmul.f32.gmra.mxu0 %v1089
      %v1204 = vpop.f32.mrf.mxu0
      %v1205 = vadd.f32 0.0, %v1204
      %1206 = vmatmul.f32.gmra.mxu0 %v1092
      %v1207 = vpop.f32.mrf.mxu0
      %v1208 = vadd.f32 0.0, %v1207
      %1209 = vmatmul.f32.gmra.mxu0 %v1095
      %v1210 = vpop.f32.mrf.mxu0
      %v1211 = vadd.f32 0.0, %v1210
      %1212 = vmatmul.f32.gmra.mxu0 %v1098
      %v1213 = vpop.f32.mrf.mxu0
      %v1214 = vadd.f32 0.0, %v1213
      %1215 = vmatmul.f32.gmra.mxu0 %v1101
      %v1216 = vpop.f32.mrf.mxu0
      %v1217 = vadd.f32 0.0, %v1216
      %1218 = vmatmul.f32.gmra.mxu0 %v1104
      %v1219 = vpop.f32.mrf.mxu0
      %v1220 = vadd.f32 0.0, %v1219
      %1221 = vmatmul.f32.gmra.mxu0 %v1107
      %v1222 = vpop.f32.mrf.mxu0
      %v1223 = vadd.f32 0.0, %v1222
      %1224 = vmatmul.f32.gmra.mxu0 %v1110
      %v1225 = vpop.f32.mrf.mxu0
      %v1226 = vadd.f32 0.0, %v1225
      %1227 = vmatmul.f32.gmra.mxu0 %v1113
      %v1228 = vpop.f32.mrf.mxu0
      %v1229 = vadd.f32 0.0, %v1228
      %1230 = vdwg.mxu0
      %v1231 = vadd.f32 %v948, %v1136
      %v1232 = vadd.f32 %v949, %v1139
      %v1233 = vadd.f32 %v950, %v1142
      %v1234 = vadd.f32 %v951, %v1145
      %v1235 = vadd.f32 %v952, %v1148
      %v1236 = vadd.f32 %v953, %v1151
      %v1237 = vadd.f32 %v954, %v1154
      %v1238 = vadd.f32 %v955, %v1157
      %v1239 = vadd.f32 %v956, %v1160
      %v1240 = vadd.f32 %v957, %v1163
      %v1241 = vadd.f32 %v958, %v1166
      %v1242 = vadd.f32 %v959, %v1169
      %v1243 = vadd.f32 %v960, %v1172
      %v1244 = vadd.f32 %v961, %v1175
      %v1245 = vadd.f32 %v962, %v1178
      %v1246 = vadd.f32 %v963, %v1181
      %v1247 = vadd.f32 %v964, %v1184
      %v1248 = vadd.f32 %v965, %v1187
      %v1249 = vadd.f32 %v966, %v1190
      %v1250 = vadd.f32 %v967, %v1193
      %v1251 = vadd.f32 %v968, %v1196
      %v1252 = vadd.f32 %v969, %v1199
      %v1253 = vadd.f32 %v970, %v1202
      %v1254 = vadd.f32 %v971, %v1205
      %v1255 = vadd.f32 %v972, %v1208
      %v1256 = vadd.f32 %v973, %v1211
      %v1257 = vadd.f32 %v974, %v1214
      %v1258 = vadd.f32 %v975, %v1217
      %v1259 = vadd.f32 %v976, %v1220
      %v1260 = vadd.f32 %v977, %v1223
      %v1261 = vadd.f32 %v978, %v1226
      %v1262 = vadd.f32 %v979, %v1229
      %s1263 = sadd.s32 %s194, 4
      %s1264 = smul.u32 %s1263, 16
      %s1265 = scalar_lea.vmem %s183, %s1264
      %v1266 = vld [vmem:[%s1265] sm:$0xff]
      %v1267 = vld [vmem:[%s1265 + $0x8] sm:$0xff]
      %v1268 = vld [vmem:[%s1265 + $0x10] sm:$0xff]
      %v1269 = vld [vmem:[%s1265 + $0x18] sm:$0xff]
      %v1270 = vld [vmem:[%s1265 + $0x20] sm:$0xff]
      %v1271 = vld [vmem:[%s1265 + $0x28] sm:$0xff]
      %v1272 = vld [vmem:[%s1265 + $0x30] sm:$0xff]
      %v1273 = vld [vmem:[%s1265 + $0x38] sm:$0xff]
      %v1274 = vld [vmem:[%s1265 + $0x40] sm:$0xff]
      %v1275 = vld [vmem:[%s1265 + $0x48] sm:$0xff]
      %v1276 = vld [vmem:[%s1265 + $0x50] sm:$0xff]
      %v1277 = vld [vmem:[%s1265 + $0x58] sm:$0xff]
      %v1278 = vld [vmem:[%s1265 + $0x60] sm:$0xff]
      %v1279 = vld [vmem:[%s1265 + $0x68] sm:$0xff]
      %v1280 = vld [vmem:[%s1265 + $0x70] sm:$0xff]
      %v1281 = vld [vmem:[%s1265 + $0x78] sm:$0xff]
      %v1282 = vld [vmem:[%s1265 + $0x80] sm:$0xff]
      %v1283 = vld [vmem:[%s1265 + $0x88] sm:$0xff]
      %v1284 = vld [vmem:[%s1265 + $0x90] sm:$0xff]
      %v1285 = vld [vmem:[%s1265 + $0x98] sm:$0xff]
      %v1286 = vld [vmem:[%s1265 + $0xa0] sm:$0xff]
      %v1287 = vld [vmem:[%s1265 + $0xa8] sm:$0xff]
      %v1288 = vld [vmem:[%s1265 + $0xb0] sm:$0xff]
      %v1289 = vld [vmem:[%s1265 + $0xb8] sm:$0xff]
      %v1290 = vld [vmem:[%s1265 + $0xc0] sm:$0xff]
      %v1291 = vld [vmem:[%s1265 + $0xc8] sm:$0xff]
      %v1292 = vld [vmem:[%s1265 + $0xd0] sm:$0xff]
      %v1293 = vld [vmem:[%s1265 + $0xd8] sm:$0xff]
      %v1294 = vld [vmem:[%s1265 + $0xe0] sm:$0xff]
      %v1295 = vld [vmem:[%s1265 + $0xe8] sm:$0xff]
      %v1296 = vld [vmem:[%s1265 + $0xf0] sm:$0xff]
      %v1297 = vld [vmem:[%s1265 + $0xf8] sm:$0xff]
      %s1298 = scalar_lea.vmem %s1, 96
      %v1299 = vld [vmem:[%s1298] sm:$0xff]
      %v1300 = vld [vmem:[%s1298 + $0x8] sm:$0xff]
      %v1301 = vld [vmem:[%s1298 + $0x10] sm:$0xf]
      %v1303 = vsel %vm271, %v1266, 0
      %v1306 = vsel %vm271, %v1267, 0
      %v1309 = vsel %vm271, %v1268, 0
      %v1312 = vsel %vm271, %v1269, 0
      %v1315 = vsel %vm271, %v1270, 0
      %v1318 = vsel %vm271, %v1271, 0
      %v1321 = vsel %vm271, %v1272, 0
      %v1324 = vsel %vm271, %v1273, 0
      %v1327 = vsel %vm271, %v1274, 0
      %v1330 = vsel %vm271, %v1275, 0
      %v1333 = vsel %vm271, %v1276, 0
      %v1336 = vsel %vm271, %v1277, 0
      %v1339 = vsel %vm271, %v1278, 0
      %v1342 = vsel %vm271, %v1279, 0
      %v1345 = vsel %vm271, %v1280, 0
      %v1348 = vsel %vm271, %v1281, 0
      %v1351 = vsel %vm271, %v1282, 0
      %v1354 = vsel %vm271, %v1283, 0
      %v1357 = vsel %vm271, %v1284, 0
      %v1360 = vsel %vm271, %v1285, 0
      %v1363 = vsel %vm271, %v1286, 0
      %v1366 = vsel %vm271, %v1287, 0
      %v1369 = vsel %vm271, %v1288, 0
      %v1372 = vsel %vm271, %v1289, 0
      %v1375 = vsel %vm271, %v1290, 0
      %v1378 = vsel %vm271, %v1291, 0
      %v1381 = vsel %vm271, %v1292, 0
      %v1384 = vsel %vm271, %v1293, 0
      %v1387 = vsel %vm271, %v1294, 0
      %v1390 = vsel %vm271, %v1295, 0
      %v1393 = vsel %vm271, %v1296, 0
      %v1396 = vsel %vm271, %v1297, 0
      %v1399 = vsel %vm368, %v1301, 0
      %1401 = vmatpush.msra.mxu0 0.0
      %1402 = vmatpush.msra.mxu0 0.0
      %1403 = vmatpush.msra.mxu0 0.0
      %1404 = vmatpush.msra.mxu0 0.0
      %1405 = vmatpush.msra.mxu0 0.0
      %1406 = vmatpush.msra.mxu0 0.0
      %1407 = vmatpush.msra.mxu0 0.0
      %1408 = vmatpush.msra.mxu0 0.0
      %1409 = vmatpush.msra.mxu0 0.0
      %1410 = vmatpush.msra.mxu0 0.0
      %1411 = vmatpush.msra.mxu0 0.0
      %1412 = vmatpush.msra.mxu0 0.0
      %1413 = vmatpush.msra.mxu0 0.0
      %1414 = vmatpush.msra.mxu0 %v1399
      %1415 = vmatpush.msra.mxu0 %v1300
      %1416 = vmatpush.msra.mxu0 %v1299
      %1417 = vmatmul.f32.gmra.mxu0 %v1303
      %v1418 = vpop.f32.mrf.mxu0
      %v1419 = vadd.f32 0.0, %v1418
      %1420 = vmatmul.f32.gmra.mxu0 %v1306
      %v1421 = vpop.f32.mrf.mxu0
      %v1422 = vadd.f32 0.0, %v1421
      %1423 = vmatmul.f32.gmra.mxu0 %v1309
      %v1424 = vpop.f32.mrf.mxu0
      %v1425 = vadd.f32 0.0, %v1424
      %1426 = vmatmul.f32.gmra.mxu0 %v1312
      %v1427 = vpop.f32.mrf.mxu0
      %v1428 = vadd.f32 0.0, %v1427
      %1429 = vmatmul.f32.gmra.mxu0 %v1315
      %v1430 = vpop.f32.mrf.mxu0
      %v1431 = vadd.f32 0.0, %v1430
      %1432 = vmatmul.f32.gmra.mxu0 %v1318
      %v1433 = vpop.f32.mrf.mxu0
      %v1434 = vadd.f32 0.0, %v1433
      %1435 = vmatmul.f32.gmra.mxu0 %v1321
      %v1436 = vpop.f32.mrf.mxu0
      %v1437 = vadd.f32 0.0, %v1436
      %1438 = vmatmul.f32.gmra.mxu0 %v1324
      %v1439 = vpop.f32.mrf.mxu0
      %v1440 = vadd.f32 0.0, %v1439
      %1441 = vmatmul.f32.gmra.mxu0 %v1327
      %v1442 = vpop.f32.mrf.mxu0
      %v1443 = vadd.f32 0.0, %v1442
      %1444 = vmatmul.f32.gmra.mxu0 %v1330
      %v1445 = vpop.f32.mrf.mxu0
      %v1446 = vadd.f32 0.0, %v1445
      %1447 = vmatmul.f32.gmra.mxu0 %v1333
      %v1448 = vpop.f32.mrf.mxu0
      %v1449 = vadd.f32 0.0, %v1448
      %1450 = vmatmul.f32.gmra.mxu0 %v1336
      %v1451 = vpop.f32.mrf.mxu0
      %v1452 = vadd.f32 0.0, %v1451
      %1453 = vmatmul.f32.gmra.mxu0 %v1339
      %v1454 = vpop.f32.mrf.mxu0
      %v1455 = vadd.f32 0.0, %v1454
      %1456 = vmatmul.f32.gmra.mxu0 %v1342
      %v1457 = vpop.f32.mrf.mxu0
      %v1458 = vadd.f32 0.0, %v1457
      %1459 = vmatmul.f32.gmra.mxu0 %v1345
      %v1460 = vpop.f32.mrf.mxu0
      %v1461 = vadd.f32 0.0, %v1460
      %1462 = vmatmul.f32.gmra.mxu0 %v1348
      %v1463 = vpop.f32.mrf.mxu0
      %v1464 = vadd.f32 0.0, %v1463
      %1465 = vmatmul.f32.gmra.mxu0 %v1351
      %v1466 = vpop.f32.mrf.mxu0
      %v1467 = vadd.f32 0.0, %v1466
      %1468 = vmatmul.f32.gmra.mxu0 %v1354
      %v1469 = vpop.f32.mrf.mxu0
      %v1470 = vadd.f32 0.0, %v1469
      %1471 = vmatmul.f32.gmra.mxu0 %v1357
      %v1472 = vpop.f32.mrf.mxu0
      %v1473 = vadd.f32 0.0, %v1472
      %1474 = vmatmul.f32.gmra.mxu0 %v1360
      %v1475 = vpop.f32.mrf.mxu0
      %v1476 = vadd.f32 0.0, %v1475
      %1477 = vmatmul.f32.gmra.mxu0 %v1363
      %v1478 = vpop.f32.mrf.mxu0
      %v1479 = vadd.f32 0.0, %v1478
      %1480 = vmatmul.f32.gmra.mxu0 %v1366
      %v1481 = vpop.f32.mrf.mxu0
      %v1482 = vadd.f32 0.0, %v1481
      %1483 = vmatmul.f32.gmra.mxu0 %v1369
      %v1484 = vpop.f32.mrf.mxu0
      %v1485 = vadd.f32 0.0, %v1484
      %1486 = vmatmul.f32.gmra.mxu0 %v1372
      %v1487 = vpop.f32.mrf.mxu0
      %v1488 = vadd.f32 0.0, %v1487
      %1489 = vmatmul.f32.gmra.mxu0 %v1375
      %v1490 = vpop.f32.mrf.mxu0
      %v1491 = vadd.f32 0.0, %v1490
      %1492 = vmatmul.f32.gmra.mxu0 %v1378
      %v1493 = vpop.f32.mrf.mxu0
      %v1494 = vadd.f32 0.0, %v1493
      %1495 = vmatmul.f32.gmra.mxu0 %v1381
      %v1496 = vpop.f32.mrf.mxu0
      %v1497 = vadd.f32 0.0, %v1496
      %1498 = vmatmul.f32.gmra.mxu0 %v1384
      %v1499 = vpop.f32.mrf.mxu0
      %v1500 = vadd.f32 0.0, %v1499
      %1501 = vmatmul.f32.gmra.mxu0 %v1387
      %v1502 = vpop.f32.mrf.mxu0
      %v1503 = vadd.f32 0.0, %v1502
      %1504 = vmatmul.f32.gmra.mxu0 %v1390
      %v1505 = vpop.f32.mrf.mxu0
      %v1506 = vadd.f32 0.0, %v1505
      %1507 = vmatmul.f32.gmra.mxu0 %v1393
      %v1508 = vpop.f32.mrf.mxu0
      %v1509 = vadd.f32 0.0, %v1508
      %1510 = vmatmul.f32.gmra.mxu0 %v1396
      %v1511 = vpop.f32.mrf.mxu0
      %v1512 = vadd.f32 0.0, %v1511
      %1513 = vdwg.mxu0
      %v1514 = vadd.f32 %v1231, %v1419
      %v1515 = vadd.f32 %v1232, %v1422
      %v1516 = vadd.f32 %v1233, %v1425
      %v1517 = vadd.f32 %v1234, %v1428
      %v1518 = vadd.f32 %v1235, %v1431
      %v1519 = vadd.f32 %v1236, %v1434
      %v1520 = vadd.f32 %v1237, %v1437
      %v1521 = vadd.f32 %v1238, %v1440
      %v1522 = vadd.f32 %v1239, %v1443
      %v1523 = vadd.f32 %v1240, %v1446
      %v1524 = vadd.f32 %v1241, %v1449
      %v1525 = vadd.f32 %v1242, %v1452
      %v1526 = vadd.f32 %v1243, %v1455
      %v1527 = vadd.f32 %v1244, %v1458
      %v1528 = vadd.f32 %v1245, %v1461
      %v1529 = vadd.f32 %v1246, %v1464
      %v1530 = vadd.f32 %v1247, %v1467
      %v1531 = vadd.f32 %v1248, %v1470
      %v1532 = vadd.f32 %v1249, %v1473
      %v1533 = vadd.f32 %v1250, %v1476
      %v1534 = vadd.f32 %v1251, %v1479
      %v1535 = vadd.f32 %v1252, %v1482
      %v1536 = vadd.f32 %v1253, %v1485
      %v1537 = vadd.f32 %v1254, %v1488
      %v1538 = vadd.f32 %v1255, %v1491
      %v1539 = vadd.f32 %v1256, %v1494
      %v1540 = vadd.f32 %v1257, %v1497
      %v1541 = vadd.f32 %v1258, %v1500
      %v1542 = vadd.f32 %v1259, %v1503
      %v1543 = vadd.f32 %v1260, %v1506
      %v1544 = vadd.f32 %v1261, %v1509
      %v1545 = vadd.f32 %v1262, %v1512
      %v1546 = vld [vmem:[%s2] sm:$0x1]
      %v1548 = vperm.slane %v1546, 0
      %v1550 = vadd.f32 %v1514, %v1548
      %v1551 = vadd.f32 %v1515, %v1548
      %v1552 = vadd.f32 %v1516, %v1548
      %v1553 = vadd.f32 %v1517, %v1548
      %v1554 = vadd.f32 %v1518, %v1548
      %v1555 = vadd.f32 %v1519, %v1548
      %v1556 = vadd.f32 %v1520, %v1548
      %v1557 = vadd.f32 %v1521, %v1548
      %v1558 = vadd.f32 %v1522, %v1548
      %v1559 = vadd.f32 %v1523, %v1548
      %v1560 = vadd.f32 %v1524, %v1548
      %v1561 = vadd.f32 %v1525, %v1548
      %v1562 = vadd.f32 %v1526, %v1548
      %v1563 = vadd.f32 %v1527, %v1548
      %v1564 = vadd.f32 %v1528, %v1548
      %v1565 = vadd.f32 %v1529, %v1548
      %v1566 = vadd.f32 %v1530, %v1548
      %v1567 = vadd.f32 %v1531, %v1548
      %v1568 = vadd.f32 %v1532, %v1548
      %v1569 = vadd.f32 %v1533, %v1548
      %v1570 = vadd.f32 %v1534, %v1548
      %v1571 = vadd.f32 %v1535, %v1548
      %v1572 = vadd.f32 %v1536, %v1548
      %v1573 = vadd.f32 %v1537, %v1548
      %v1574 = vadd.f32 %v1538, %v1548
      %v1575 = vadd.f32 %v1539, %v1548
      %v1576 = vadd.f32 %v1540, %v1548
      %v1577 = vadd.f32 %v1541, %v1548
      %v1578 = vadd.f32 %v1542, %v1548
      %v1579 = vadd.f32 %v1543, %v1548
      %v1580 = vadd.f32 %v1544, %v1548
      %v1581 = vadd.f32 %v1545, %v1548
      %v1582 = vmax.f32 %v1550, 0.0
      %v1583 = vmax.f32 %v1551, 0.0
      %v1584 = vmax.f32 %v1552, 0.0
      %v1585 = vmax.f32 %v1553, 0.0
      %v1586 = vmax.f32 %v1554, 0.0
      %v1587 = vmax.f32 %v1555, 0.0
      %v1588 = vmax.f32 %v1556, 0.0
      %v1589 = vmax.f32 %v1557, 0.0
      %v1590 = vmax.f32 %v1558, 0.0
      %v1591 = vmax.f32 %v1559, 0.0
      %v1592 = vmax.f32 %v1560, 0.0
      %v1593 = vmax.f32 %v1561, 0.0
      %v1594 = vmax.f32 %v1562, 0.0
      %v1595 = vmax.f32 %v1563, 0.0
      %v1596 = vmax.f32 %v1564, 0.0
      %v1597 = vmax.f32 %v1565, 0.0
      %v1598 = vmax.f32 %v1566, 0.0
      %v1599 = vmax.f32 %v1567, 0.0
      %v1600 = vmax.f32 %v1568, 0.0
      %v1601 = vmax.f32 %v1569, 0.0
      %v1602 = vmax.f32 %v1570, 0.0
      %v1603 = vmax.f32 %v1571, 0.0
      %v1604 = vmax.f32 %v1572, 0.0
      %v1605 = vmax.f32 %v1573, 0.0
      %v1606 = vmax.f32 %v1574, 0.0
      %v1607 = vmax.f32 %v1575, 0.0
      %v1608 = vmax.f32 %v1576, 0.0
      %v1609 = vmax.f32 %v1577, 0.0
      %v1610 = vmax.f32 %v1578, 0.0
      %v1611 = vmax.f32 %v1579, 0.0
      %v1612 = vmax.f32 %v1580, 0.0
      %v1613 = vmax.f32 %v1581, 0.0
      %vm1614 = vcmask 64512
      %1615 = vst.msk [vmem:[%s192] sm:$0xff] %vm1614, %v1582
      %1616 = vst.msk [vmem:[%s192 + $0x8] sm:$0xff] %vm1614, %v1583
      %1617 = vst.msk [vmem:[%s192 + $0x10] sm:$0xff] %vm1614, %v1584
      %1618 = vst.msk [vmem:[%s192 + $0x18] sm:$0xff] %vm1614, %v1585
      %1619 = vst.msk [vmem:[%s192 + $0x20] sm:$0xff] %vm1614, %v1586
      %1620 = vst.msk [vmem:[%s192 + $0x28] sm:$0xff] %vm1614, %v1587
      %1621 = vst.msk [vmem:[%s192 + $0x30] sm:$0xff] %vm1614, %v1588
      %1622 = vst.msk [vmem:[%s192 + $0x38] sm:$0xff] %vm1614, %v1589
      %1623 = vst.msk [vmem:[%s192 + $0x40] sm:$0xff] %vm1614, %v1590
      %1624 = vst.msk [vmem:[%s192 + $0x48] sm:$0xff] %vm1614, %v1591
      %1625 = vst.msk [vmem:[%s192 + $0x50] sm:$0xff] %vm1614, %v1592
      %1626 = vst.msk [vmem:[%s192 + $0x58] sm:$0xff] %vm1614, %v1593
      %1627 = vst.msk [vmem:[%s192 + $0x60] sm:$0xff] %vm1614, %v1594
      %1628 = vst.msk [vmem:[%s192 + $0x68] sm:$0xff] %vm1614, %v1595
      %1629 = vst.msk [vmem:[%s192 + $0x70] sm:$0xff] %vm1614, %v1596
      %1630 = vst.msk [vmem:[%s192 + $0x78] sm:$0xff] %vm1614, %v1597
      %1631 = vst.msk [vmem:[%s192 + $0x80] sm:$0xff] %vm1614, %v1598
      %1632 = vst.msk [vmem:[%s192 + $0x88] sm:$0xff] %vm1614, %v1599
      %1633 = vst.msk [vmem:[%s192 + $0x90] sm:$0xff] %vm1614, %v1600
      %1634 = vst.msk [vmem:[%s192 + $0x98] sm:$0xff] %vm1614, %v1601
      %1635 = vst.msk [vmem:[%s192 + $0xa0] sm:$0xff] %vm1614, %v1602
      %1636 = vst.msk [vmem:[%s192 + $0xa8] sm:$0xff] %vm1614, %v1603
      %1637 = vst.msk [vmem:[%s192 + $0xb0] sm:$0xff] %vm1614, %v1604
      %1638 = vst.msk [vmem:[%s192 + $0xb8] sm:$0xff] %vm1614, %v1605
      %1639 = vst.msk [vmem:[%s192 + $0xc0] sm:$0xff] %vm1614, %v1606
      %1640 = vst.msk [vmem:[%s192 + $0xc8] sm:$0xff] %vm1614, %v1607
      %1641 = vst.msk [vmem:[%s192 + $0xd0] sm:$0xff] %vm1614, %v1608
      %1642 = vst.msk [vmem:[%s192 + $0xd8] sm:$0xff] %vm1614, %v1609
      %1643 = vst.msk [vmem:[%s192 + $0xe0] sm:$0xff] %vm1614, %v1610
      %1644 = vst.msk [vmem:[%s192 + $0xe8] sm:$0xff] %vm1614, %v1611
      %1645 = vst.msk [vmem:[%s192 + $0xf0] sm:$0xff] %vm1614, %v1612
      %1646 = vst.msk [vmem:[%s192 + $0xf8] sm:$0xff] %vm1614, %v1613
      %s1647 = smul.u32 32, %s19
      %p1648 = scmp.lt.s32.totalorder %s18, 1
      %s1649 = scalar_select %p1648, %s18, 1
      %p1650 = scmp.lt.s32.totalorder %s1647, 31
      %s1651 = scalar_select %p1650, %s1647, 31
      %s1652 = smul.addr %s1649, 32
      %s1653 = sadd.s32 %s1651, %s1652
      %s1654 = smul.addr %s1653, 8
      %s1655 = scalar_lea.vmem %s3, %s1654
      // Predicated region
      $region33: #{inception_a_forward.7} parent=31 // pred_check
        %p1656 = pneg %p114
      $region34: #{inception_a_forward.7} parent=31 // pred_check_branch
        %1658 = sbr.rel (%p1656) target = $region36
      $region35: #{inception_a_forward.7} parent=31 // pred_region
        %s1659 = smul.u32 32, %s19
      $region36: #{inception_a_forward.7} parent=31 // pred_fallthru
        _
    $region32: #{inception_a_forward.7} parent=5 // pred_fallthru
      _
    %p1660 = scmp.le.s32.totalorder 2, %s9
    // Predicated region
    $region37: #{inception_a_forward.7} parent=5 // pred_check
      %p1661 = pneg %p1660
    $region38: #{inception_a_forward.7} parent=5 // pred_check_branch
      %1663 = sbr.rel (%p1661) target = $region40
    $region39: #{inception_a_forward.7} parent=5 // pred_region
      %s1664 = ssub.s32 %s9, 2
      // Predicated region
      $region41: #{inception_a_forward.7} parent=39 // pred_check
        %p1665 = pneg %p120
      $region42: #{inception_a_forward.7} parent=39 // pred_check_branch
        %1667 = sbr.rel (%p1665) target = $region44
      $region43: #{inception_a_forward.7} parent=39 // pred_region
        %s1668 = smul.u32 32, %s21
        %p1669 = scmp.lt.s32.totalorder %s20, 1
        %s1670 = scalar_select %p1669, %s20, 1
        %p1671 = scmp.lt.s32.totalorder %s1668, 31
        %s1672 = scalar_select %p1671, %s1668, 31
        %s1673 = smul.addr %s1670, 32
        %s1674 = sadd.s32 %s1672, %s1673
        %s1675 = smul.addr %s1674, 8
        %s1676 = scalar_lea.vmem %s3, %s1675
      $region44: #{inception_a_forward.7} parent=39 // pred_fallthru
        _
    $region40: #{inception_a_forward.7} parent=5 // pred_fallthru
      _
  $region6: #{inception_a_forward.7} parent=0 // loop_footer
    %s13 = sadd.s32 1, %s9
  $region7: #{inception_a_forward.7} parent=0 // loop_footer_branch
    %8 = sbr.rel target = $region3
  $region8: #{inception_a_forward.7} parent=0 // loop_exit
    _

</llo_original>
